<compile_context>
chip_gen: v7x
topology: tpu7x:2x2x1
jax: 0.10.0
libtpu: 0.0.40
codegen_flags: <defaults>
</compile_context>

<pallas_src>
import numpy as np
import jax
import jax.numpy as jnp
from jax.experimental import pallas as pl
from jax.experimental.pallas import tpu as pltpu

# ---------------- synthetic config (stand-in for args / cfg) -----------------
GROUP = 4                  # args.open_pose_joint_num
IMG_CHANNEL = 3            # args.img_channel
CHANNELS = [8, 16]         # cfg['channel']
KERNEL_SIZES = [3, 3]      # cfg['kernel_size']
STRIDES = [1, 1]           # cfg['stride']
GLOBAL_PADDING = [1, 1]    # cfg['global_padding']
LOCAL_PADDING = [1, 1]     # cfg['local_padding']
NON_PART_INTENSITY = 0.5   # args.non_part_intensity
NORMALIZE_EMBEDDING = False
GLOBAL_EMBEDDING = False   # fc_layer1/fc_layer2/dropout path not exercised
FEATURE_COMB = "add"       # args.feature_comb  ('add' CombFeature branch)

C_MID = CHANNELS[0]            # 8
C_LAST = CHANNELS[-1]          # 16
GC = GROUP * IMG_CHANNEL       # 12


# ----------------------------- batching choice --------------------------------
def _pick_bb(B):
    """Samples per grid step; keep the grid length even when possible (v7x 2 TCs)."""
    for bb in (8, 4, 2, 1):
        if B % bb == 0 and (B // bb) % 2 == 0:
            return bb
    for bb in (8, 4, 2, 1):
        if B % bb == 0:
            return bb
    return 1


# ------------------------------ fused kernel ----------------------------------
def _make_kernel(H, W, BB):
    HW = H * W
    N = BB * HW
    OFFS = [(dh, dw) for dh in (-1, 0, 1) for dw in (-1, 0, 1)]   # kh-major, kw-minor
    THR = IMG_CHANNEL * HW * 0.9
    f32, bf16 = jnp.float32, jnp.bfloat16

    def kernel(x_ref, mask_ref, w1_ref, b1_ref, w2_ref, b2_ref, w3_ref, b3_ref,
               w4_ref, b4_ref, gm_ref, comb_ref, att_ref):
        xs = x_ref[...] - NON_PART_INTENSITY                      # (GC, N) f32

        def conv3x3(x, w_ref, b_ref):
            # x: (Ci, N) f32 ; w_ref: (9, Co, Ci) bf16 ; b_ref: (Co, 1) f32
            Co = w_ref.shape[1]
            acc = jnp.zeros((Co, N), f32)
            for k, (dh, dw) in enumerate(OFFS):
                if dh == 0 and dw == 0:
                    xk = x                                        # center tap, no shift
                else:
                    shift = (-(dh * W + dw)) % N                  # rolled[c] = x[c + dh*W + dw]
                    xk = pltpu.roll(x, shift=shift, axis=1) * mask_ref[k]
                acc = acc + jnp.dot(w_ref[k], xk.astype(bf16),
                                    preferred_element_type=f32)
            return jnp.maximum(acc + b_ref[...], 0.0)

        # ----- layer 1: global(8) + grouped local(4x8) fused, 40 out channels -----
        y1 = conv3x3(xs, w1_ref, b1_ref)                          # (40, N)
        # ----- layer 2: global(16) + grouped local(4x16) -> [glob | loc] ----------
        y2 = conv3x3(y1, w2_ref, b2_ref)                          # (80, N)
        glob = y2[:C_LAST, :]                                     # (16, N)
        loc = y2[C_LAST:, :]                                      # (64, N)

        # ----- CombFeature 'add': loc + glob.repeat(1, group, 1, 1) ---------------
        comb = loc + jnp.concatenate([glob] * GROUP, axis=0)      # (64, N)

        # ----- attention generator: grouped 3x3 conv + grouped 1x1 conv -----------
        a1 = conv3x3(loc, w3_ref, b3_ref)                         # (64, N)
        a2 = jnp.maximum(
            jnp.dot(w4_ref[...], a1.astype(bf16),
                    preferred_element_type=f32) + b4_ref[...], 0.0)   # (4, N)

        # ----- zero_idx indicator, group-reduced with one constant-mask dot -------
        ind = jnp.where(jnp.logical_and(xs < 1.0, xs > -1.0), 1.0, 0.0)
        gi = jnp.dot(gm_ref[...], ind.astype(bf16),
                     preferred_element_type=f32)                  # (4, N) exact counts

        # ----- per-sample spatial sums over 256-lane aligned slices ---------------
        s_cols, c_cols = [], []
        for b in range(BB):
            sl = slice(b * HW, (b + 1) * HW)
            s_cols.append(jnp.sum(a2[:, sl], axis=1, keepdims=True))
            c_cols.append(jnp.sum(gi[:, sl], axis=1, keepdims=True))
        s = jnp.concatenate(s_cols, axis=1) if BB > 1 else s_cols[0]      # (4, BB)
        cnt = jnp.concatenate(c_cols, axis=1) if BB > 1 else c_cols[0]    # (4, BB)

        keep = jnp.where(cnt < THR, 1.0, 0.0)                     # (4, BB)
        m = jnp.max(s, axis=0, keepdims=True)
        e = jnp.exp(s - m)
        att = (e / jnp.sum(e, axis=0, keepdims=True)) * keep      # (4, BB) f32

        att_ref[0] = att                                          # only the (G, BB) row

        # group -> channel expansion of the attention row (f32, exact)
        scale_cb = jnp.concatenate(
            [jnp.broadcast_to(att[g:g + 1, :], (C_LAST, BB)) for g in range(GROUP)],
            axis=0)                                               # (64, BB)

        # fused attention scaling + lane-dense stores (256-lane chunks per sample)
        for b in range(BB):
            sl = slice(b * HW, (b + 1) * HW)
            comb_ref[:, sl] = comb[:, sl] * scale_cb[:, b:b + 1]

    return kernel


# ----------------------- fused-weight builders (host/XLA) ---------------------
def _fuse_layer1(wg1, bg1, wl1, bl1):
    # wg1: (1,3,3,GC,C_MID)  wl1: (GROUP,3,3,IMG_CHANNEL,C_MID)
    Co = C_MID + GROUP * C_MID
    w = jnp.zeros((9, Co, GC), jnp.float32)
    for kh in range(3):
        for kw in range(3):
            k = kh * 3 + kw
            w = w.at[k, :C_MID, :].set(wg1[0, kh, kw].T)
            for g in range(GROUP):
                w = w.at[k, C_MID + g * C_MID:C_MID + (g + 1) * C_MID,
                            g * IMG_CHANNEL:(g + 1) * IMG_CHANNEL].set(wl1[g, kh, kw].T)
    b = jnp.concatenate([bg1.reshape(-1), bl1.reshape(-1)]).reshape(-1, 1)
    return w.astype(jnp.bfloat16), b


def _fuse_layer2(wg2, bg2, wl2, bl2):
    # wg2: (1,3,3,C_MID,C_LAST)  wl2: (GROUP,3,3,C_MID,C_LAST)
    Ci = C_MID + GROUP * C_MID
    Co = C_LAST + GROUP * C_LAST
    w = jnp.zeros((9, Co, Ci), jnp.float32)
    for kh in range(3):
        for kw in range(3):
            k = kh * 3 + kw
            w = w.at[k, :C_LAST, :C_MID].set(wg2[0, kh, kw].T)
            for g in range(GROUP):
                w = w.at[k, C_LAST + g * C_LAST:C_LAST + (g + 1) * C_LAST,
                            C_MID + g * C_MID:C_MID + (g + 1) * C_MID].set(wl2[g, kh, kw].T)
    b = jnp.concatenate([bg2.reshape(-1), bl2.reshape(-1)]).reshape(-1, 1)
    return w.astype(jnp.bfloat16), b


def _fuse_attn1(wa1, ba1):
    # wa1: (GROUP,3,3,C_LAST,C_LAST)
    Co = GROUP * C_LAST
    w = jnp.zeros((9, Co, Co), jnp.float32)
    for kh in range(3):
        for kw in range(3):
            k = kh * 3 + kw
            for g in range(GROUP):
                w = w.at[k, g * C_LAST:(g + 1) * C_LAST,
                            g * C_LAST:(g + 1) * C_LAST].set(wa1[g, kh, kw].T)
    b = ba1.reshape(-1, 1)
    return w.astype(jnp.bfloat16), b


def _fuse_attn2(wa2, ba2):
    # wa2: (GROUP,1,1,C_LAST,1)
    w = jnp.zeros((GROUP, GROUP * C_LAST), jnp.float32)
    for g in range(GROUP):
        w = w.at[g, g * C_LAST:(g + 1) * C_LAST].set(wa2[g, 0, 0, :, 0])
    b = ba2.reshape(-1, 1)
    return w.astype(jnp.bfloat16), b


# ------------------------------- parameters ----------------------------------
def init_params(key):
    keys = iter(jax.random.split(key, 32))
    w = lambda k, s: 0.1 * jax.random.normal(k, s, dtype=jnp.float32)

    params = {"global": [], "local": [], "attn": []}
    in_ch = GROUP * IMG_CHANNEL
    for i, ch in enumerate(CHANNELS):                 # global_conv (groups=1)
        k = KERNEL_SIZES[i]
        params["global"].append((w(next(keys), (1, k, k, in_ch, ch)),
                                 w(next(keys), (1, 1, ch))))
        in_ch = ch
    in_cg = IMG_CHANNEL
    for i, ch in enumerate(CHANNELS):                 # local_conv (groups=GROUP)
        k = KERNEL_SIZES[i]
        params["local"].append((w(next(keys), (GROUP, k, k, in_cg, ch)),
                                w(next(keys), (GROUP, 1, ch))))
        in_cg = ch
    # Attn_Generator: filters=[G*C, G], k=[3,1], pad=[1,0], groups=[G,G]
    C = CHANNELS[-1]
    params["attn"] = [
        (w(next(keys), (GROUP, 3, 3, C, C)), w(next(keys), (GROUP, 1, C))),
        (w(next(keys), (GROUP, 1, 1, C, 1)), w(next(keys), (GROUP, 1, 1))),
    ]
    return params


# -------------------------- Encoder forward (Pallas) --------------------------
def encoder_forward(params, x_nchw):
    """Encoder.forward with test=True: returns (comb_feature, attn_map)."""
    B, Ctot, H, W = x_nchw.shape
    assert Ctot == GC
    assert KERNEL_SIZES == [3, 3] and STRIDES == [1, 1]
    assert GLOBAL_PADDING == [1, 1] and LOCAL_PADDING == [1, 1]
    HW, D = H * W, C_LAST * H * W
    BB = _pick_bb(B)
    NB = B // BB
    N = BB * HW

    # channels-on-sublanes, (sample, pixel) on lanes: (GC, B*HW)
    x_t = jnp.transpose(x_nchw.reshape(B, GC, HW), (1, 0, 2)).reshape(GC, B * HW)

    (wg1, bg1), (wg2, bg2) = params["global"]
    (wl1, bl1), (wl2, bl2) = params["local"]
    (wa1, ba1), (wa2, ba2) = params["attn"]
    w1, b1 = _fuse_layer1(wg1, bg1, wl1, bl1)
    w2, b2 = _fuse_layer2(wg2, bg2, wl2, bl2)
    w3, b3 = _fuse_attn1(wa1, ba1)
    w4, b4 = _fuse_attn2(wa2, ba2)

    # constant (G, GC) group-membership mask for the zero_idx counts
    gm = jnp.asarray((np.arange(GC)[None, :] // IMG_CHANNEL ==
                      np.arange(GROUP)[:, None]).astype(np.float32),
                     dtype=jnp.bfloat16)

    # host-precomputed 3x3 border masks for the roll-based im2col, (9, 1, N)
    p = np.arange(N) % HW
    hh, ww = p // W, p % W
    masks_np = np.zeros((9, 1, N), np.float32)
    k = 0
    for dh in (-1, 0, 1):
        for dw in (-1, 0, 1):
            ok = ((hh + dh >= 0) & (hh + dh < H) & (ww + dw >= 0) & (ww + dw < W))
            masks_np[k, 0, :] = ok.astype(np.float32)
            k += 1
    masks = jnp.asarray(masks_np)

    kernel = _make_kernel(H, W, BB)

    def full_spec(a):
        nd = a.ndim
        return pl.BlockSpec(a.shape, lambda i, _nd=nd: (0,) * _nd)

    flops = 2 * B * HW * (9 * GC * (C_MID + GROUP * C_MID)
                          + 9 * (C_MID + GROUP * C_MID) * (C_LAST + GROUP * C_LAST)
                          + 9 * (GROUP * C_LAST) * (GROUP * C_LAST)
                          + (GROUP * C_LAST) * GROUP)
    bytes_accessed = (x_t.size * 4 + masks.size * 4 + gm.size * 2
                      + (w1.size + w2.size + w3.size + w4.size) * 2
                      + (b1.size + b2.size + b3.size + b4.size) * 4
                      + B * GROUP * C_LAST * HW * 4 + B * GROUP * 4)

    comb_cmhw, att3 = pl.pallas_call(
        kernel,
        out_shape=(jax.ShapeDtypeStruct((GROUP * C_LAST, B * HW), jnp.float32),
                   jax.ShapeDtypeStruct((NB, GROUP, BB), jnp.float32)),
        grid=(NB,),
        in_specs=[
            pl.BlockSpec((GC, N), lambda i: (0, i)),      # BB samples per step on lanes
            full_spec(masks),
            full_spec(w1), full_spec(b1),
            full_spec(w2), full_spec(b2),
            full_spec(w3), full_spec(b3),
            full_spec(w4), full_spec(b4),
            full_spec(gm),
        ],
        out_specs=(pl.BlockSpec((GROUP * C_LAST, N), lambda i: (0, i)),
                   pl.BlockSpec((1, GROUP, BB), lambda i: (i, 0, 0))),
        compiler_params=pltpu.CompilerParams(
            dimension_semantics=("parallel",),
            vmem_limit_bytes=32 * 1024 * 1024),
        cost_estimate=pl.CostEstimate(flops=flops,
                                      transcendentals=B * GROUP,
                                      bytes_accessed=bytes_accessed),
    )(x_t, masks, w1, b1, w2, b2, w3, b3, w4, b4, gm)

    # (G*C, B*HW) lane-dense kernel output -> (B, G, C*H*W) torch .view order
    comb_flat = jnp.transpose(
        comb_cmhw.reshape(GROUP, C_LAST, B, HW), (2, 0, 1, 3)).reshape(B, GROUP, D)
    att = jnp.transpose(att3, (0, 2, 1)).reshape(B, GROUP)
    attn_map = jnp.broadcast_to(att[:, :, None], (B, GROUP, D))   # broadcast outside kernel
    if NORMALIZE_EMBEDDING:
        comb_flat = jax.nn.softmax(comb_flat, axis=-1)
    # TODO(synk): GLOBAL_EMBEDDING fc1/dropout/fc2 path, compare_distance() triplet
    # losses (python `random` index sampling) and the CombFeature 'conv' combine
    # branch (omth_blocks dependency) are not ported; this is the test=True 'add' path.
    return comb_flat, attn_map


# ------------------------ pure-JAX reference (NCHW) ---------------------------
def _conv_relu_ref(x, w_gkkio, b_g1o, groups, pad):
    G_, KH, KW, Cin, Cout = w_gkkio.shape
    w_oihw = jnp.transpose(w_gkkio, (0, 4, 3, 1, 2)).reshape(G_ * Cout, Cin, KH, KW)
    bias = b_g1o.reshape(G_ * Cout)
    # Same bf16-input / f32-accumulate quantization as the Pallas kernel.
    y = jax.lax.conv_general_dilated(
        x.astype(jnp.bfloat16), w_oihw.astype(jnp.bfloat16),
        window_strides=(1, 1), padding=[(pad, pad), (pad, pad)],
        dimension_numbers=("NCHW", "OIHW", "NCHW"),
        feature_group_count=groups,
        preferred_element_type=jnp.float32)
    return jax.nn.relu(y + bias[None, :, None, None])


def encoder_forward_ref(params, x_nchw):
    B = x_nchw.shape[0]
    xs = x_nchw - NON_PART_INTENSITY
    g = xs
    for i, (wt, bi) in enumerate(params["global"]):
        g = _conv_relu_ref(g, wt, bi, 1, GLOBAL_PADDING[i])
    l = xs
    for i, (wt, bi) in enumerate(params["local"]):
        l = _conv_relu_ref(l, wt, bi, GROUP, LOCAL_PADDING[i])
    comb = l + jnp.tile(g, (1, GROUP, 1, 1))             # CombFeature 'add'
    comb = comb.reshape(B, GROUP, -1)
    xv = xs.reshape(B, GROUP, -1)
    zero_idx = (jnp.sum(((xv < 1) & (xv > -1)).astype(jnp.float32), axis=-1)
                < xv.shape[-1] * 0.9).astype(jnp.float32)
    a = l
    for (wt, bi), p in zip(params["attn"], [1, 0]):
        a = _conv_relu_ref(a, wt, bi, GROUP, p)
    a = jnp.sum(a, axis=(-1, -2))
    a = jax.nn.softmax(a, axis=-1) * zero_idx
    attn_map = jnp.repeat(a[:, :, None], comb.shape[-1], axis=-1)
    comb = comb * attn_map
    if NORMALIZE_EMBEDDING:
        comb = jax.nn.softmax(comb, axis=-1)
    return comb, attn_map


# ----------------------------------- main -------------------------------------
if __name__ == "__main__":
    key = jax.random.PRNGKey(0)
    kp, kx = jax.random.split(key)
    params = init_params(kp)

    B, H, W = 2, 16, 16
    x = jax.random.uniform(kx, (B, GROUP * IMG_CHANNEL, H, W),
                           minval=-2.0, maxval=2.0, dtype=jnp.float32)

    fwd = jax.jit(encoder_forward)
    comb, attn_map = fwd(params, x)
    jax.block_until_ready((comb, attn_map))

    comb_ref, attn_ref = encoder_forward_ref(params, x)
    np.testing.assert_allclose(np.asarray(attn_map), np.asarray(attn_ref),
                               rtol=1e-2, atol=1e-3)
    np.testing.assert_allclose(np.asarray(comb), np.asarray(comb_ref),
                               rtol=1e-2, atol=1e-3)
    print("KERNEL_OK")
</pallas_src>

<mosaic_0001>
module attributes {stable_mosaic.version = 11 : i64} {
  func.func @kernel(%arg0: i32, %arg1: memref<12x256xf32, #tpu.memory_space<vmem>>, %arg2: memref<9x1x256xf32, #tpu.memory_space<vmem>>, %arg3: memref<9x40x12xbf16, #tpu.memory_space<vmem>>, %arg4: memref<40x1xf32, #tpu.memory_space<vmem>>, %arg5: memref<9x80x40xbf16, #tpu.memory_space<vmem>>, %arg6: memref<80x1xf32, #tpu.memory_space<vmem>>, %arg7: memref<9x64x64xbf16, #tpu.memory_space<vmem>>, %arg8: memref<64x1xf32, #tpu.memory_space<vmem>>, %arg9: memref<4x64xbf16, #tpu.memory_space<vmem>>, %arg10: memref<4x1xf32, #tpu.memory_space<vmem>>, %arg11: memref<4x12xbf16, #tpu.memory_space<vmem>>, %arg12: memref<64x256xf32, #tpu.memory_space<vmem>>, %arg13: memref<1x4x1xf32, #tpu.memory_space<vmem>>) attributes {dimension_semantics = [#tpu.dimension_semantics<parallel>], iteration_bounds = array<i64: 2>, scalar_prefetch = 0 : i64, scratch_operands = 0 : i64, tpu.core_type = #tpu.core_type<tc>, window_params = [{transform_indices = @transform_0, window_bounds = array<i64: 12, 256>}, {pipeline_mode = #tpu.pipeline_mode<synchronous>, transform_indices = @transform_1, window_bounds = array<i64: 9, 1, 256>}, {pipeline_mode = #tpu.pipeline_mode<synchronous>, transform_indices = @transform_2, window_bounds = array<i64: 9, 40, 12>}, {pipeline_mode = #tpu.pipeline_mode<synchronous>, transform_indices = @transform_3, window_bounds = array<i64: 40, 1>}, {pipeline_mode = #tpu.pipeline_mode<synchronous>, transform_indices = @transform_4, window_bounds = array<i64: 9, 80, 40>}, {pipeline_mode = #tpu.pipeline_mode<synchronous>, transform_indices = @transform_5, window_bounds = array<i64: 80, 1>}, {pipeline_mode = #tpu.pipeline_mode<synchronous>, transform_indices = @transform_6, window_bounds = array<i64: 9, 64, 64>}, {pipeline_mode = #tpu.pipeline_mode<synchronous>, transform_indices = @transform_7, window_bounds = array<i64: 64, 1>}, {pipeline_mode = #tpu.pipeline_mode<synchronous>, transform_indices = @transform_8, window_bounds = array<i64: 4, 64>}, {pipeline_mode = #tpu.pipeline_mode<synchronous>, transform_indices = @transform_9, window_bounds = array<i64: 4, 1>}, {pipeline_mode = #tpu.pipeline_mode<synchronous>, transform_indices = @transform_10, window_bounds = array<i64: 4, 12>}, {transform_indices = @transform_11, window_bounds = array<i64: 64, 256>}, {transform_indices = @transform_12, window_bounds = array<i64: 1, 4, 1>}]} {
    %c0 = arith.constant 0 : index
    %c0_0 = arith.constant 0 : index
    %0 = vector.load %arg1[%c0, %c0_0] : memref<12x256xf32, #tpu.memory_space<vmem>>, vector<12x256xf32>
    %cst = arith.constant 5.000000e-01 : f32
    %1 = vector.broadcast %cst : f32 to vector<12x256xf32>
    %2 = arith.subf %0, %1 : vector<12x256xf32>
    %cst_1 = arith.constant 0.000000e+00 : f32
    %3 = vector.broadcast %cst_1 : f32 to vector<40x256xf32>
    %c17_i32 = arith.constant 17 : i32
    %4 = tpu.dynamic_rotate %2 by %c17_i32 dim 1 : vector<12x256xf32>, i32 -> vector<12x256xf32>
    %c0_2 = arith.constant 0 : index
    %c0_3 = arith.constant 0 : index
    %c0_4 = arith.constant 0 : index
    %5 = vector.load %arg2[%c0_2, %c0_3, %c0_4] : memref<9x1x256xf32, #tpu.memory_space<vmem>>, vector<1x1x256xf32>
    %6 = vector.shape_cast %5 : vector<1x1x256xf32> to vector<1x256xf32>
    %7 = vector.broadcast %6 : vector<1x256xf32> to vector<12x256xf32>
    %8 = arith.mulf %4, %7 : vector<12x256xf32>
    %c0_5 = arith.constant 0 : index
    %c0_6 = arith.constant 0 : index
    %c0_7 = arith.constant 0 : index
    %9 = vector.load %arg3[%c0_5, %c0_6, %c0_7] : memref<9x40x12xbf16, #tpu.memory_space<vmem>>, vector<1x40x12xbf16>
    %10 = vector.shape_cast %9 : vector<1x40x12xbf16> to vector<40x12xbf16>
    %11 = arith.truncf %8 : vector<12x256xf32> to vector<12x256xbf16>
    %cst_8 = arith.constant dense<0.000000e+00> : vector<40x256xf32>
    %12 = tpu.matmul %10, %11, %cst_8 {dimension_numbers = #tpu.dot_dimension_numbers<[1], [0], [0], [1], [0, 0, 1, 1], [], []>} : vector<40x12xbf16>, vector<12x256xbf16>, vector<40x256xf32> -> vector<40x256xf32>
    %13 = arith.addf %3, %12 : vector<40x256xf32>
    %c16_i32 = arith.constant 16 : i32
    %14 = tpu.dynamic_rotate %2 by %c16_i32 dim 1 : vector<12x256xf32>, i32 -> vector<12x256xf32>
    %c1 = arith.constant 1 : index
    %c0_9 = arith.constant 0 : index
    %c0_10 = arith.constant 0 : index
    %15 = vector.load %arg2[%c1, %c0_9, %c0_10] : memref<9x1x256xf32, #tpu.memory_space<vmem>>, vector<1x1x256xf32>
    %16 = vector.shape_cast %15 : vector<1x1x256xf32> to vector<1x256xf32>
    %17 = vector.broadcast %16 : vector<1x256xf32> to vector<12x256xf32>
    %18 = arith.mulf %14, %17 : vector<12x256xf32>
    %c1_11 = arith.constant 1 : index
    %c0_12 = arith.constant 0 : index
    %c0_13 = arith.constant 0 : index
    %19 = vector.load %arg3[%c1_11, %c0_12, %c0_13] : memref<9x40x12xbf16, #tpu.memory_space<vmem>>, vector<1x40x12xbf16>
    %20 = vector.shape_cast %19 : vector<1x40x12xbf16> to vector<40x12xbf16>
    %21 = arith.truncf %18 : vector<12x256xf32> to vector<12x256xbf16>
    %cst_14 = arith.constant dense<0.000000e+00> : vector<40x256xf32>
    %22 = tpu.matmul %20, %21, %cst_14 {dimension_numbers = #tpu.dot_dimension_numbers<[1], [0], [0], [1], [0, 0, 1, 1], [], []>} : vector<40x12xbf16>, vector<12x256xbf16>, vector<40x256xf32> -> vector<40x256xf32>
    %23 = arith.addf %13, %22 : vector<40x256xf32>
    %c15_i32 = arith.constant 15 : i32
    %24 = tpu.dynamic_rotate %2 by %c15_i32 dim 1 : vector<12x256xf32>, i32 -> vector<12x256xf32>
    %c2 = arith.constant 2 : index
    %c0_15 = arith.constant 0 : index
    %c0_16 = arith.constant 0 : index
    %25 = vector.load %arg2[%c2, %c0_15, %c0_16] : memref<9x1x256xf32, #tpu.memory_space<vmem>>, vector<1x1x256xf32>
    %26 = vector.shape_cast %25 : vector<1x1x256xf32> to vector<1x256xf32>
    %27 = vector.broadcast %26 : vector<1x256xf32> to vector<12x256xf32>
    %28 = arith.mulf %24, %27 : vector<12x256xf32>
    %c2_17 = arith.constant 2 : index
    %c0_18 = arith.constant 0 : index
    %c0_19 = arith.constant 0 : index
    %29 = vector.load %arg3[%c2_17, %c0_18, %c0_19] : memref<9x40x12xbf16, #tpu.memory_space<vmem>>, vector<1x40x12xbf16>
    %30 = vector.shape_cast %29 : vector<1x40x12xbf16> to vector<40x12xbf16>
    %31 = arith.truncf %28 : vector<12x256xf32> to vector<12x256xbf16>
    %cst_20 = arith.constant dense<0.000000e+00> : vector<40x256xf32>
    %32 = tpu.matmul %30, %31, %cst_20 {dimension_numbers = #tpu.dot_dimension_numbers<[1], [0], [0], [1], [0, 0, 1, 1], [], []>} : vector<40x12xbf16>, vector<12x256xbf16>, vector<40x256xf32> -> vector<40x256xf32>
    %33 = arith.addf %23, %32 : vector<40x256xf32>
    %c1_i32 = arith.constant 1 : i32
    %34 = tpu.dynamic_rotate %2 by %c1_i32 dim 1 : vector<12x256xf32>, i32 -> vector<12x256xf32>
    %c3 = arith.constant 3 : index
    %c0_21 = arith.constant 0 : index
    %c0_22 = arith.constant 0 : index
    %35 = vector.load %arg2[%c3, %c0_21, %c0_22] : memref<9x1x256xf32, #tpu.memory_space<vmem>>, vector<1x1x256xf32>
    %36 = vector.shape_cast %35 : vector<1x1x256xf32> to vector<1x256xf32>
    %37 = vector.broadcast %36 : vector<1x256xf32> to vector<12x256xf32>
    %38 = arith.mulf %34, %37 : vector<12x256xf32>
    %c3_23 = arith.constant 3 : index
    %c0_24 = arith.constant 0 : index
    %c0_25 = arith.constant 0 : index
    %39 = vector.load %arg3[%c3_23, %c0_24, %c0_25] : memref<9x40x12xbf16, #tpu.memory_space<vmem>>, vector<1x40x12xbf16>
    %40 = vector.shape_cast %39 : vector<1x40x12xbf16> to vector<40x12xbf16>
    %41 = arith.truncf %38 : vector<12x256xf32> to vector<12x256xbf16>
    %cst_26 = arith.constant dense<0.000000e+00> : vector<40x256xf32>
    %42 = tpu.matmul %40, %41, %cst_26 {dimension_numbers = #tpu.dot_dimension_numbers<[1], [0], [0], [1], [0, 0, 1, 1], [], []>} : vector<40x12xbf16>, vector<12x256xbf16>, vector<40x256xf32> -> vector<40x256xf32>
    %43 = arith.addf %33, %42 : vector<40x256xf32>
    %c4 = arith.constant 4 : index
    %c0_27 = arith.constant 0 : index
    %c0_28 = arith.constant 0 : index
    %44 = vector.load %arg3[%c4, %c0_27, %c0_28] : memref<9x40x12xbf16, #tpu.memory_space<vmem>>, vector<1x40x12xbf16>
    %45 = vector.shape_cast %44 : vector<1x40x12xbf16> to vector<40x12xbf16>
    %46 = arith.truncf %2 : vector<12x256xf32> to vector<12x256xbf16>
    %cst_29 = arith.constant dense<0.000000e+00> : vector<40x256xf32>
    %47 = tpu.matmul %45, %46, %cst_29 {dimension_numbers = #tpu.dot_dimension_numbers<[1], [0], [0], [1], [0, 0, 1, 1], [], []>} : vector<40x12xbf16>, vector<12x256xbf16>, vector<40x256xf32> -> vector<40x256xf32>
    %48 = arith.addf %43, %47 : vector<40x256xf32>
    %c255_i32 = arith.constant 255 : i32
    %49 = tpu.dynamic_rotate %2 by %c255_i32 dim 1 : vector<12x256xf32>, i32 -> vector<12x256xf32>
    %c5 = arith.constant 5 : index
    %c0_30 = arith.constant 0 : index
    %c0_31 = arith.constant 0 : index
    %50 = vector.load %arg2[%c5, %c0_30, %c0_31] : memref<9x1x256xf32, #tpu.memory_space<vmem>>, vector<1x1x256xf32>
    %51 = vector.shape_cast %50 : vector<1x1x256xf32> to vector<1x256xf32>
    %52 = vector.broadcast %51 : vector<1x256xf32> to vector<12x256xf32>
    %53 = arith.mulf %49, %52 : vector<12x256xf32>
    %c5_32 = arith.constant 5 : index
    %c0_33 = arith.constant 0 : index
    %c0_34 = arith.constant 0 : index
    %54 = vector.load %arg3[%c5_32, %c0_33, %c0_34] : memref<9x40x12xbf16, #tpu.memory_space<vmem>>, vector<1x40x12xbf16>
    %55 = vector.shape_cast %54 : vector<1x40x12xbf16> to vector<40x12xbf16>
    %56 = arith.truncf %53 : vector<12x256xf32> to vector<12x256xbf16>
    %cst_35 = arith.constant dense<0.000000e+00> : vector<40x256xf32>
    %57 = tpu.matmul %55, %56, %cst_35 {dimension_numbers = #tpu.dot_dimension_numbers<[1], [0], [0], [1], [0, 0, 1, 1], [], []>} : vector<40x12xbf16>, vector<12x256xbf16>, vector<40x256xf32> -> vector<40x256xf32>
    %58 = arith.addf %48, %57 : vector<40x256xf32>
    %c241_i32 = arith.constant 241 : i32
    %59 = tpu.dynamic_rotate %2 by %c241_i32 dim 1 : vector<12x256xf32>, i32 -> vector<12x256xf32>
    %c6 = arith.constant 6 : index
    %c0_36 = arith.constant 0 : index
    %c0_37 = arith.constant 0 : index
    %60 = vector.load %arg2[%c6, %c0_36, %c0_37] : memref<9x1x256xf32, #tpu.memory_space<vmem>>, vector<1x1x256xf32>
    %61 = vector.shape_cast %60 : vector<1x1x256xf32> to vector<1x256xf32>
    %62 = vector.broadcast %61 : vector<1x256xf32> to vector<12x256xf32>
    %63 = arith.mulf %59, %62 : vector<12x256xf32>
    %c6_38 = arith.constant 6 : index
    %c0_39 = arith.constant 0 : index
    %c0_40 = arith.constant 0 : index
    %64 = vector.load %arg3[%c6_38, %c0_39, %c0_40] : memref<9x40x12xbf16, #tpu.memory_space<vmem>>, vector<1x40x12xbf16>
    %65 = vector.shape_cast %64 : vector<1x40x12xbf16> to vector<40x12xbf16>
    %66 = arith.truncf %63 : vector<12x256xf32> to vector<12x256xbf16>
    %cst_41 = arith.constant dense<0.000000e+00> : vector<40x256xf32>
    %67 = tpu.matmul %65, %66, %cst_41 {dimension_numbers = #tpu.dot_dimension_numbers<[1], [0], [0], [1], [0, 0, 1, 1], [], []>} : vector<40x12xbf16>, vector<12x256xbf16>, vector<40x256xf32> -> vector<40x256xf32>
    %68 = arith.addf %58, %67 : vector<40x256xf32>
    %c240_i32 = arith.constant 240 : i32
    %69 = tpu.dynamic_rotate %2 by %c240_i32 dim 1 : vector<12x256xf32>, i32 -> vector<12x256xf32>
    %c7 = arith.constant 7 : index
    %c0_42 = arith.constant 0 : index
    %c0_43 = arith.constant 0 : index
    %70 = vector.load %arg2[%c7, %c0_42, %c0_43] : memref<9x1x256xf32, #tpu.memory_space<vmem>>, vector<1x1x256xf32>
    %71 = vector.shape_cast %70 : vector<1x1x256xf32> to vector<1x256xf32>
    %72 = vector.broadcast %71 : vector<1x256xf32> to vector<12x256xf32>
    %73 = arith.mulf %69, %72 : vector<12x256xf32>
    %c7_44 = arith.constant 7 : index
    %c0_45 = arith.constant 0 : index
    %c0_46 = arith.constant 0 : index
    %74 = vector.load %arg3[%c7_44, %c0_45, %c0_46] : memref<9x40x12xbf16, #tpu.memory_space<vmem>>, vector<1x40x12xbf16>
    %75 = vector.shape_cast %74 : vector<1x40x12xbf16> to vector<40x12xbf16>
    %76 = arith.truncf %73 : vector<12x256xf32> to vector<12x256xbf16>
    %cst_47 = arith.constant dense<0.000000e+00> : vector<40x256xf32>
    %77 = tpu.matmul %75, %76, %cst_47 {dimension_numbers = #tpu.dot_dimension_numbers<[1], [0], [0], [1], [0, 0, 1, 1], [], []>} : vector<40x12xbf16>, vector<12x256xbf16>, vector<40x256xf32> -> vector<40x256xf32>
    %78 = arith.addf %68, %77 : vector<40x256xf32>
    %c239_i32 = arith.constant 239 : i32
    %79 = tpu.dynamic_rotate %2 by %c239_i32 dim 1 : vector<12x256xf32>, i32 -> vector<12x256xf32>
    %c8 = arith.constant 8 : index
    %c0_48 = arith.constant 0 : index
    %c0_49 = arith.constant 0 : index
    %80 = vector.load %arg2[%c8, %c0_48, %c0_49] : memref<9x1x256xf32, #tpu.memory_space<vmem>>, vector<1x1x256xf32>
    %81 = vector.shape_cast %80 : vector<1x1x256xf32> to vector<1x256xf32>
    %82 = vector.broadcast %81 : vector<1x256xf32> to vector<12x256xf32>
    %83 = arith.mulf %79, %82 : vector<12x256xf32>
    %c8_50 = arith.constant 8 : index
    %c0_51 = arith.constant 0 : index
    %c0_52 = arith.constant 0 : index
    %84 = vector.load %arg3[%c8_50, %c0_51, %c0_52] : memref<9x40x12xbf16, #tpu.memory_space<vmem>>, vector<1x40x12xbf16>
    %85 = vector.shape_cast %84 : vector<1x40x12xbf16> to vector<40x12xbf16>
    %86 = arith.truncf %83 : vector<12x256xf32> to vector<12x256xbf16>
    %cst_53 = arith.constant dense<0.000000e+00> : vector<40x256xf32>
    %87 = tpu.matmul %85, %86, %cst_53 {dimension_numbers = #tpu.dot_dimension_numbers<[1], [0], [0], [1], [0, 0, 1, 1], [], []>} : vector<40x12xbf16>, vector<12x256xbf16>, vector<40x256xf32> -> vector<40x256xf32>
    %88 = arith.addf %78, %87 : vector<40x256xf32>
    %c0_54 = arith.constant 0 : index
    %c0_55 = arith.constant 0 : index
    %89 = vector.load %arg4[%c0_54, %c0_55] : memref<40x1xf32, #tpu.memory_space<vmem>>, vector<40x1xf32>
    %90 = vector.broadcast %89 : vector<40x1xf32> to vector<40x256xf32>
    %91 = arith.addf %88, %90 : vector<40x256xf32>
    %cst_56 = arith.constant 0.000000e+00 : f32
    %92 = vector.broadcast %cst_56 : f32 to vector<40x256xf32>
    %93 = arith.maximumf %91, %92 : vector<40x256xf32>
    %cst_57 = arith.constant 0.000000e+00 : f32
    %94 = vector.broadcast %cst_57 : f32 to vector<80x256xf32>
    %c17_i32_58 = arith.constant 17 : i32
    %95 = tpu.dynamic_rotate %93 by %c17_i32_58 dim 1 : vector<40x256xf32>, i32 -> vector<40x256xf32>
    %c0_59 = arith.constant 0 : index
    %c0_60 = arith.constant 0 : index
    %c0_61 = arith.constant 0 : index
    %96 = vector.load %arg2[%c0_59, %c0_60, %c0_61] : memref<9x1x256xf32, #tpu.memory_space<vmem>>, vector<1x1x256xf32>
    %97 = vector.shape_cast %96 : vector<1x1x256xf32> to vector<1x256xf32>
    %98 = vector.broadcast %97 : vector<1x256xf32> to vector<40x256xf32>
    %99 = arith.mulf %95, %98 : vector<40x256xf32>
    %c0_62 = arith.constant 0 : index
    %c0_63 = arith.constant 0 : index
    %c0_64 = arith.constant 0 : index
    %100 = vector.load %arg5[%c0_62, %c0_63, %c0_64] : memref<9x80x40xbf16, #tpu.memory_space<vmem>>, vector<1x80x40xbf16>
    %101 = vector.shape_cast %100 : vector<1x80x40xbf16> to vector<80x40xbf16>
    %102 = arith.truncf %99 : vector<40x256xf32> to vector<40x256xbf16>
    %cst_65 = arith.constant dense<0.000000e+00> : vector<80x256xf32>
    %103 = tpu.matmul %101, %102, %cst_65 {dimension_numbers = #tpu.dot_dimension_numbers<[1], [0], [0], [1], [0, 0, 1, 1], [], []>} : vector<80x40xbf16>, vector<40x256xbf16>, vector<80x256xf32> -> vector<80x256xf32>
    %104 = arith.addf %94, %103 : vector<80x256xf32>
    %c16_i32_66 = arith.constant 16 : i32
    %105 = tpu.dynamic_rotate %93 by %c16_i32_66 dim 1 : vector<40x256xf32>, i32 -> vector<40x256xf32>
    %c1_67 = arith.constant 1 : index
    %c0_68 = arith.constant 0 : index
    %c0_69 = arith.constant 0 : index
    %106 = vector.load %arg2[%c1_67, %c0_68, %c0_69] : memref<9x1x256xf32, #tpu.memory_space<vmem>>, vector<1x1x256xf32>
    %107 = vector.shape_cast %106 : vector<1x1x256xf32> to vector<1x256xf32>
    %108 = vector.broadcast %107 : vector<1x256xf32> to vector<40x256xf32>
    %109 = arith.mulf %105, %108 : vector<40x256xf32>
    %c1_70 = arith.constant 1 : index
    %c0_71 = arith.constant 0 : index
    %c0_72 = arith.constant 0 : index
    %110 = vector.load %arg5[%c1_70, %c0_71, %c0_72] : memref<9x80x40xbf16, #tpu.memory_space<vmem>>, vector<1x80x40xbf16>
    %111 = vector.shape_cast %110 : vector<1x80x40xbf16> to vector<80x40xbf16>
    %112 = arith.truncf %109 : vector<40x256xf32> to vector<40x256xbf16>
    %cst_73 = arith.constant dense<0.000000e+00> : vector<80x256xf32>
    %113 = tpu.matmul %111, %112, %cst_73 {dimension_numbers = #tpu.dot_dimension_numbers<[1], [0], [0], [1], [0, 0, 1, 1], [], []>} : vector<80x40xbf16>, vector<40x256xbf16>, vector<80x256xf32> -> vector<80x256xf32>
    %114 = arith.addf %104, %113 : vector<80x256xf32>
    %c15_i32_74 = arith.constant 15 : i32
    %115 = tpu.dynamic_rotate %93 by %c15_i32_74 dim 1 : vector<40x256xf32>, i32 -> vector<40x256xf32>
    %c2_75 = arith.constant 2 : index
    %c0_76 = arith.constant 0 : index
    %c0_77 = arith.constant 0 : index
    %116 = vector.load %arg2[%c2_75, %c0_76, %c0_77] : memref<9x1x256xf32, #tpu.memory_space<vmem>>, vector<1x1x256xf32>
    %117 = vector.shape_cast %116 : vector<1x1x256xf32> to vector<1x256xf32>
    %118 = vector.broadcast %117 : vector<1x256xf32> to vector<40x256xf32>
    %119 = arith.mulf %115, %118 : vector<40x256xf32>
    %c2_78 = arith.constant 2 : index
    %c0_79 = arith.constant 0 : index
    %c0_80 = arith.constant 0 : index
    %120 = vector.load %arg5[%c2_78, %c0_79, %c0_80] : memref<9x80x40xbf16, #tpu.memory_space<vmem>>, vector<1x80x40xbf16>
    %121 = vector.shape_cast %120 : vector<1x80x40xbf16> to vector<80x40xbf16>
    %122 = arith.truncf %119 : vector<40x256xf32> to vector<40x256xbf16>
    %cst_81 = arith.constant dense<0.000000e+00> : vector<80x256xf32>
    %123 = tpu.matmul %121, %122, %cst_81 {dimension_numbers = #tpu.dot_dimension_numbers<[1], [0], [0], [1], [0, 0, 1, 1], [], []>} : vector<80x40xbf16>, vector<40x256xbf16>, vector<80x256xf32> -> vector<80x256xf32>
    %124 = arith.addf %114, %123 : vector<80x256xf32>
    %c1_i32_82 = arith.constant 1 : i32
    %125 = tpu.dynamic_rotate %93 by %c1_i32_82 dim 1 : vector<40x256xf32>, i32 -> vector<40x256xf32>
    %c3_83 = arith.constant 3 : index
    %c0_84 = arith.constant 0 : index
    %c0_85 = arith.constant 0 : index
    %126 = vector.load %arg2[%c3_83, %c0_84, %c0_85] : memref<9x1x256xf32, #tpu.memory_space<vmem>>, vector<1x1x256xf32>
    %127 = vector.shape_cast %126 : vector<1x1x256xf32> to vector<1x256xf32>
    %128 = vector.broadcast %127 : vector<1x256xf32> to vector<40x256xf32>
    %129 = arith.mulf %125, %128 : vector<40x256xf32>
    %c3_86 = arith.constant 3 : index
    %c0_87 = arith.constant 0 : index
    %c0_88 = arith.constant 0 : index
    %130 = vector.load %arg5[%c3_86, %c0_87, %c0_88] : memref<9x80x40xbf16, #tpu.memory_space<vmem>>, vector<1x80x40xbf16>
    %131 = vector.shape_cast %130 : vector<1x80x40xbf16> to vector<80x40xbf16>
    %132 = arith.truncf %129 : vector<40x256xf32> to vector<40x256xbf16>
    %cst_89 = arith.constant dense<0.000000e+00> : vector<80x256xf32>
    %133 = tpu.matmul %131, %132, %cst_89 {dimension_numbers = #tpu.dot_dimension_numbers<[1], [0], [0], [1], [0, 0, 1, 1], [], []>} : vector<80x40xbf16>, vector<40x256xbf16>, vector<80x256xf32> -> vector<80x256xf32>
    %134 = arith.addf %124, %133 : vector<80x256xf32>
    %c4_90 = arith.constant 4 : index
    %c0_91 = arith.constant 0 : index
    %c0_92 = arith.constant 0 : index
    %135 = vector.load %arg5[%c4_90, %c0_91, %c0_92] : memref<9x80x40xbf16, #tpu.memory_space<vmem>>, vector<1x80x40xbf16>
    %136 = vector.shape_cast %135 : vector<1x80x40xbf16> to vector<80x40xbf16>
    %137 = arith.truncf %93 : vector<40x256xf32> to vector<40x256xbf16>
    %cst_93 = arith.constant dense<0.000000e+00> : vector<80x256xf32>
    %138 = tpu.matmul %136, %137, %cst_93 {dimension_numbers = #tpu.dot_dimension_numbers<[1], [0], [0], [1], [0, 0, 1, 1], [], []>} : vector<80x40xbf16>, vector<40x256xbf16>, vector<80x256xf32> -> vector<80x256xf32>
    %139 = arith.addf %134, %138 : vector<80x256xf32>
    %c255_i32_94 = arith.constant 255 : i32
    %140 = tpu.dynamic_rotate %93 by %c255_i32_94 dim 1 : vector<40x256xf32>, i32 -> vector<40x256xf32>
    %c5_95 = arith.constant 5 : index
    %c0_96 = arith.constant 0 : index
    %c0_97 = arith.constant 0 : index
    %141 = vector.load %arg2[%c5_95, %c0_96, %c0_97] : memref<9x1x256xf32, #tpu.memory_space<vmem>>, vector<1x1x256xf32>
    %142 = vector.shape_cast %141 : vector<1x1x256xf32> to vector<1x256xf32>
    %143 = vector.broadcast %142 : vector<1x256xf32> to vector<40x256xf32>
    %144 = arith.mulf %140, %143 : vector<40x256xf32>
    %c5_98 = arith.constant 5 : index
    %c0_99 = arith.constant 0 : index
    %c0_100 = arith.constant 0 : index
    %145 = vector.load %arg5[%c5_98, %c0_99, %c0_100] : memref<9x80x40xbf16, #tpu.memory_space<vmem>>, vector<1x80x40xbf16>
    %146 = vector.shape_cast %145 : vector<1x80x40xbf16> to vector<80x40xbf16>
    %147 = arith.truncf %144 : vector<40x256xf32> to vector<40x256xbf16>
    %cst_101 = arith.constant dense<0.000000e+00> : vector<80x256xf32>
    %148 = tpu.matmul %146, %147, %cst_101 {dimension_numbers = #tpu.dot_dimension_numbers<[1], [0], [0], [1], [0, 0, 1, 1], [], []>} : vector<80x40xbf16>, vector<40x256xbf16>, vector<80x256xf32> -> vector<80x256xf32>
    %149 = arith.addf %139, %148 : vector<80x256xf32>
    %c241_i32_102 = arith.constant 241 : i32
    %150 = tpu.dynamic_rotate %93 by %c241_i32_102 dim 1 : vector<40x256xf32>, i32 -> vector<40x256xf32>
    %c6_103 = arith.constant 6 : index
    %c0_104 = arith.constant 0 : index
    %c0_105 = arith.constant 0 : index
    %151 = vector.load %arg2[%c6_103, %c0_104, %c0_105] : memref<9x1x256xf32, #tpu.memory_space<vmem>>, vector<1x1x256xf32>
    %152 = vector.shape_cast %151 : vector<1x1x256xf32> to vector<1x256xf32>
    %153 = vector.broadcast %152 : vector<1x256xf32> to vector<40x256xf32>
    %154 = arith.mulf %150, %153 : vector<40x256xf32>
    %c6_106 = arith.constant 6 : index
    %c0_107 = arith.constant 0 : index
    %c0_108 = arith.constant 0 : index
    %155 = vector.load %arg5[%c6_106, %c0_107, %c0_108] : memref<9x80x40xbf16, #tpu.memory_space<vmem>>, vector<1x80x40xbf16>
    %156 = vector.shape_cast %155 : vector<1x80x40xbf16> to vector<80x40xbf16>
    %157 = arith.truncf %154 : vector<40x256xf32> to vector<40x256xbf16>
    %cst_109 = arith.constant dense<0.000000e+00> : vector<80x256xf32>
    %158 = tpu.matmul %156, %157, %cst_109 {dimension_numbers = #tpu.dot_dimension_numbers<[1], [0], [0], [1], [0, 0, 1, 1], [], []>} : vector<80x40xbf16>, vector<40x256xbf16>, vector<80x256xf32> -> vector<80x256xf32>
    %159 = arith.addf %149, %158 : vector<80x256xf32>
    %c240_i32_110 = arith.constant 240 : i32
    %160 = tpu.dynamic_rotate %93 by %c240_i32_110 dim 1 : vector<40x256xf32>, i32 -> vector<40x256xf32>
    %c7_111 = arith.constant 7 : index
    %c0_112 = arith.constant 0 : index
    %c0_113 = arith.constant 0 : index
    %161 = vector.load %arg2[%c7_111, %c0_112, %c0_113] : memref<9x1x256xf32, #tpu.memory_space<vmem>>, vector<1x1x256xf32>
    %162 = vector.shape_cast %161 : vector<1x1x256xf32> to vector<1x256xf32>
    %163 = vector.broadcast %162 : vector<1x256xf32> to vector<40x256xf32>
    %164 = arith.mulf %160, %163 : vector<40x256xf32>
    %c7_114 = arith.constant 7 : index
    %c0_115 = arith.constant 0 : index
    %c0_116 = arith.constant 0 : index
    %165 = vector.load %arg5[%c7_114, %c0_115, %c0_116] : memref<9x80x40xbf16, #tpu.memory_space<vmem>>, vector<1x80x40xbf16>
    %166 = vector.shape_cast %165 : vector<1x80x40xbf16> to vector<80x40xbf16>
    %167 = arith.truncf %164 : vector<40x256xf32> to vector<40x256xbf16>
    %cst_117 = arith.constant dense<0.000000e+00> : vector<80x256xf32>
    %168 = tpu.matmul %166, %167, %cst_117 {dimension_numbers = #tpu.dot_dimension_numbers<[1], [0], [0], [1], [0, 0, 1, 1], [], []>} : vector<80x40xbf16>, vector<40x256xbf16>, vector<80x256xf32> -> vector<80x256xf32>
    %169 = arith.addf %159, %168 : vector<80x256xf32>
    %c239_i32_118 = arith.constant 239 : i32
    %170 = tpu.dynamic_rotate %93 by %c239_i32_118 dim 1 : vector<40x256xf32>, i32 -> vector<40x256xf32>
    %c8_119 = arith.constant 8 : index
    %c0_120 = arith.constant 0 : index
    %c0_121 = arith.constant 0 : index
    %171 = vector.load %arg2[%c8_119, %c0_120, %c0_121] : memref<9x1x256xf32, #tpu.memory_space<vmem>>, vector<1x1x256xf32>
    %172 = vector.shape_cast %171 : vector<1x1x256xf32> to vector<1x256xf32>
    %173 = vector.broadcast %172 : vector<1x256xf32> to vector<40x256xf32>
    %174 = arith.mulf %170, %173 : vector<40x256xf32>
    %c8_122 = arith.constant 8 : index
    %c0_123 = arith.constant 0 : index
    %c0_124 = arith.constant 0 : index
    %175 = vector.load %arg5[%c8_122, %c0_123, %c0_124] : memref<9x80x40xbf16, #tpu.memory_space<vmem>>, vector<1x80x40xbf16>
    %176 = vector.shape_cast %175 : vector<1x80x40xbf16> to vector<80x40xbf16>
    %177 = arith.truncf %174 : vector<40x256xf32> to vector<40x256xbf16>
    %cst_125 = arith.constant dense<0.000000e+00> : vector<80x256xf32>
    %178 = tpu.matmul %176, %177, %cst_125 {dimension_numbers = #tpu.dot_dimension_numbers<[1], [0], [0], [1], [0, 0, 1, 1], [], []>} : vector<80x40xbf16>, vector<40x256xbf16>, vector<80x256xf32> -> vector<80x256xf32>
    %179 = arith.addf %169, %178 : vector<80x256xf32>
    %c0_126 = arith.constant 0 : index
    %c0_127 = arith.constant 0 : index
    %180 = vector.load %arg6[%c0_126, %c0_127] : memref<80x1xf32, #tpu.memory_space<vmem>>, vector<80x1xf32>
    %181 = vector.broadcast %180 : vector<80x1xf32> to vector<80x256xf32>
    %182 = arith.addf %179, %181 : vector<80x256xf32>
    %cst_128 = arith.constant 0.000000e+00 : f32
    %183 = vector.broadcast %cst_128 : f32 to vector<80x256xf32>
    %184 = arith.maximumf %182, %183 : vector<80x256xf32>
    %185 = vector.extract_strided_slice %184 {offsets = [0, 0], sizes = [16, 256], strides = [1, 1]} : vector<80x256xf32> to vector<16x256xf32>
    %186 = vector.extract_strided_slice %184 {offsets = [16, 0], sizes = [64, 256], strides = [1, 1]} : vector<80x256xf32> to vector<64x256xf32>
    %187 = tpu.concatenate %185, %185, %185, %185 in 0 : vector<16x256xf32>, vector<16x256xf32>, vector<16x256xf32>, vector<16x256xf32> -> vector<64x256xf32>
    %188 = arith.addf %186, %187 : vector<64x256xf32>
    %cst_129 = arith.constant 0.000000e+00 : f32
    %189 = vector.broadcast %cst_129 : f32 to vector<64x256xf32>
    %c17_i32_130 = arith.constant 17 : i32
    %190 = tpu.dynamic_rotate %186 by %c17_i32_130 dim 1 : vector<64x256xf32>, i32 -> vector<64x256xf32>
    %c0_131 = arith.constant 0 : index
    %c0_132 = arith.constant 0 : index
    %c0_133 = arith.constant 0 : index
    %191 = vector.load %arg2[%c0_131, %c0_132, %c0_133] : memref<9x1x256xf32, #tpu.memory_space<vmem>>, vector<1x1x256xf32>
    %192 = vector.shape_cast %191 : vector<1x1x256xf32> to vector<1x256xf32>
    %193 = vector.broadcast %192 : vector<1x256xf32> to vector<64x256xf32>
    %194 = arith.mulf %190, %193 : vector<64x256xf32>
    %c0_134 = arith.constant 0 : index
    %c0_135 = arith.constant 0 : index
    %c0_136 = arith.constant 0 : index
    %195 = vector.load %arg7[%c0_134, %c0_135, %c0_136] : memref<9x64x64xbf16, #tpu.memory_space<vmem>>, vector<1x64x64xbf16>
    %196 = vector.shape_cast %195 : vector<1x64x64xbf16> to vector<64x64xbf16>
    %197 = arith.truncf %194 : vector<64x256xf32> to vector<64x256xbf16>
    %cst_137 = arith.constant dense<0.000000e+00> : vector<64x256xf32>
    %198 = tpu.matmul %196, %197, %cst_137 {dimension_numbers = #tpu.dot_dimension_numbers<[1], [0], [0], [1], [0, 0, 1, 1], [], []>} : vector<64x64xbf16>, vector<64x256xbf16>, vector<64x256xf32> -> vector<64x256xf32>
    %199 = arith.addf %189, %198 : vector<64x256xf32>
    %c16_i32_138 = arith.constant 16 : i32
    %200 = tpu.dynamic_rotate %186 by %c16_i32_138 dim 1 : vector<64x256xf32>, i32 -> vector<64x256xf32>
    %c1_139 = arith.constant 1 : index
    %c0_140 = arith.constant 0 : index
    %c0_141 = arith.constant 0 : index
    %201 = vector.load %arg2[%c1_139, %c0_140, %c0_141] : memref<9x1x256xf32, #tpu.memory_space<vmem>>, vector<1x1x256xf32>
    %202 = vector.shape_cast %201 : vector<1x1x256xf32> to vector<1x256xf32>
    %203 = vector.broadcast %202 : vector<1x256xf32> to vector<64x256xf32>
    %204 = arith.mulf %200, %203 : vector<64x256xf32>
    %c1_142 = arith.constant 1 : index
    %c0_143 = arith.constant 0 : index
    %c0_144 = arith.constant 0 : index
    %205 = vector.load %arg7[%c1_142, %c0_143, %c0_144] : memref<9x64x64xbf16, #tpu.memory_space<vmem>>, vector<1x64x64xbf16>
    %206 = vector.shape_cast %205 : vector<1x64x64xbf16> to vector<64x64xbf16>
    %207 = arith.truncf %204 : vector<64x256xf32> to vector<64x256xbf16>
    %cst_145 = arith.constant dense<0.000000e+00> : vector<64x256xf32>
    %208 = tpu.matmul %206, %207, %cst_145 {dimension_numbers = #tpu.dot_dimension_numbers<[1], [0], [0], [1], [0, 0, 1, 1], [], []>} : vector<64x64xbf16>, vector<64x256xbf16>, vector<64x256xf32> -> vector<64x256xf32>
    %209 = arith.addf %199, %208 : vector<64x256xf32>
    %c15_i32_146 = arith.constant 15 : i32
    %210 = tpu.dynamic_rotate %186 by %c15_i32_146 dim 1 : vector<64x256xf32>, i32 -> vector<64x256xf32>
    %c2_147 = arith.constant 2 : index
    %c0_148 = arith.constant 0 : index
    %c0_149 = arith.constant 0 : index
    %211 = vector.load %arg2[%c2_147, %c0_148, %c0_149] : memref<9x1x256xf32, #tpu.memory_space<vmem>>, vector<1x1x256xf32>
    %212 = vector.shape_cast %211 : vector<1x1x256xf32> to vector<1x256xf32>
    %213 = vector.broadcast %212 : vector<1x256xf32> to vector<64x256xf32>
    %214 = arith.mulf %210, %213 : vector<64x256xf32>
    %c2_150 = arith.constant 2 : index
    %c0_151 = arith.constant 0 : index
    %c0_152 = arith.constant 0 : index
    %215 = vector.load %arg7[%c2_150, %c0_151, %c0_152] : memref<9x64x64xbf16, #tpu.memory_space<vmem>>, vector<1x64x64xbf16>
    %216 = vector.shape_cast %215 : vector<1x64x64xbf16> to vector<64x64xbf16>
    %217 = arith.truncf %214 : vector<64x256xf32> to vector<64x256xbf16>
    %cst_153 = arith.constant dense<0.000000e+00> : vector<64x256xf32>
    %218 = tpu.matmul %216, %217, %cst_153 {dimension_numbers = #tpu.dot_dimension_numbers<[1], [0], [0], [1], [0, 0, 1, 1], [], []>} : vector<64x64xbf16>, vector<64x256xbf16>, vector<64x256xf32> -> vector<64x256xf32>
    %219 = arith.addf %209, %218 : vector<64x256xf32>
    %c1_i32_154 = arith.constant 1 : i32
    %220 = tpu.dynamic_rotate %186 by %c1_i32_154 dim 1 : vector<64x256xf32>, i32 -> vector<64x256xf32>
    %c3_155 = arith.constant 3 : index
    %c0_156 = arith.constant 0 : index
    %c0_157 = arith.constant 0 : index
    %221 = vector.load %arg2[%c3_155, %c0_156, %c0_157] : memref<9x1x256xf32, #tpu.memory_space<vmem>>, vector<1x1x256xf32>
    %222 = vector.shape_cast %221 : vector<1x1x256xf32> to vector<1x256xf32>
    %223 = vector.broadcast %222 : vector<1x256xf32> to vector<64x256xf32>
    %224 = arith.mulf %220, %223 : vector<64x256xf32>
    %c3_158 = arith.constant 3 : index
    %c0_159 = arith.constant 0 : index
    %c0_160 = arith.constant 0 : index
    %225 = vector.load %arg7[%c3_158, %c0_159, %c0_160] : memref<9x64x64xbf16, #tpu.memory_space<vmem>>, vector<1x64x64xbf16>
    %226 = vector.shape_cast %225 : vector<1x64x64xbf16> to vector<64x64xbf16>
    %227 = arith.truncf %224 : vector<64x256xf32> to vector<64x256xbf16>
    %cst_161 = arith.constant dense<0.000000e+00> : vector<64x256xf32>
    %228 = tpu.matmul %226, %227, %cst_161 {dimension_numbers = #tpu.dot_dimension_numbers<[1], [0], [0], [1], [0, 0, 1, 1], [], []>} : vector<64x64xbf16>, vector<64x256xbf16>, vector<64x256xf32> -> vector<64x256xf32>
    %229 = arith.addf %219, %228 : vector<64x256xf32>
    %c4_162 = arith.constant 4 : index
    %c0_163 = arith.constant 0 : index
    %c0_164 = arith.constant 0 : index
    %230 = vector.load %arg7[%c4_162, %c0_163, %c0_164] : memref<9x64x64xbf16, #tpu.memory_space<vmem>>, vector<1x64x64xbf16>
    %231 = vector.shape_cast %230 : vector<1x64x64xbf16> to vector<64x64xbf16>
    %232 = arith.truncf %186 : vector<64x256xf32> to vector<64x256xbf16>
    %cst_165 = arith.constant dense<0.000000e+00> : vector<64x256xf32>
    %233 = tpu.matmul %231, %232, %cst_165 {dimension_numbers = #tpu.dot_dimension_numbers<[1], [0], [0], [1], [0, 0, 1, 1], [], []>} : vector<64x64xbf16>, vector<64x256xbf16>, vector<64x256xf32> -> vector<64x256xf32>
    %234 = arith.addf %229, %233 : vector<64x256xf32>
    %c255_i32_166 = arith.constant 255 : i32
    %235 = tpu.dynamic_rotate %186 by %c255_i32_166 dim 1 : vector<64x256xf32>, i32 -> vector<64x256xf32>
    %c5_167 = arith.constant 5 : index
    %c0_168 = arith.constant 0 : index
    %c0_169 = arith.constant 0 : index
    %236 = vector.load %arg2[%c5_167, %c0_168, %c0_169] : memref<9x1x256xf32, #tpu.memory_space<vmem>>, vector<1x1x256xf32>
    %237 = vector.shape_cast %236 : vector<1x1x256xf32> to vector<1x256xf32>
    %238 = vector.broadcast %237 : vector<1x256xf32> to vector<64x256xf32>
    %239 = arith.mulf %235, %238 : vector<64x256xf32>
    %c5_170 = arith.constant 5 : index
    %c0_171 = arith.constant 0 : index
    %c0_172 = arith.constant 0 : index
    %240 = vector.load %arg7[%c5_170, %c0_171, %c0_172] : memref<9x64x64xbf16, #tpu.memory_space<vmem>>, vector<1x64x64xbf16>
    %241 = vector.shape_cast %240 : vector<1x64x64xbf16> to vector<64x64xbf16>
    %242 = arith.truncf %239 : vector<64x256xf32> to vector<64x256xbf16>
    %cst_173 = arith.constant dense<0.000000e+00> : vector<64x256xf32>
    %243 = tpu.matmul %241, %242, %cst_173 {dimension_numbers = #tpu.dot_dimension_numbers<[1], [0], [0], [1], [0, 0, 1, 1], [], []>} : vector<64x64xbf16>, vector<64x256xbf16>, vector<64x256xf32> -> vector<64x256xf32>
    %244 = arith.addf %234, %243 : vector<64x256xf32>
    %c241_i32_174 = arith.constant 241 : i32
    %245 = tpu.dynamic_rotate %186 by %c241_i32_174 dim 1 : vector<64x256xf32>, i32 -> vector<64x256xf32>
    %c6_175 = arith.constant 6 : index
    %c0_176 = arith.constant 0 : index
    %c0_177 = arith.constant 0 : index
    %246 = vector.load %arg2[%c6_175, %c0_176, %c0_177] : memref<9x1x256xf32, #tpu.memory_space<vmem>>, vector<1x1x256xf32>
    %247 = vector.shape_cast %246 : vector<1x1x256xf32> to vector<1x256xf32>
    %248 = vector.broadcast %247 : vector<1x256xf32> to vector<64x256xf32>
    %249 = arith.mulf %245, %248 : vector<64x256xf32>
    %c6_178 = arith.constant 6 : index
    %c0_179 = arith.constant 0 : index
    %c0_180 = arith.constant 0 : index
    %250 = vector.load %arg7[%c6_178, %c0_179, %c0_180] : memref<9x64x64xbf16, #tpu.memory_space<vmem>>, vector<1x64x64xbf16>
    %251 = vector.shape_cast %250 : vector<1x64x64xbf16> to vector<64x64xbf16>
    %252 = arith.truncf %249 : vector<64x256xf32> to vector<64x256xbf16>
    %cst_181 = arith.constant dense<0.000000e+00> : vector<64x256xf32>
    %253 = tpu.matmul %251, %252, %cst_181 {dimension_numbers = #tpu.dot_dimension_numbers<[1], [0], [0], [1], [0, 0, 1, 1], [], []>} : vector<64x64xbf16>, vector<64x256xbf16>, vector<64x256xf32> -> vector<64x256xf32>
    %254 = arith.addf %244, %253 : vector<64x256xf32>
    %c240_i32_182 = arith.constant 240 : i32
    %255 = tpu.dynamic_rotate %186 by %c240_i32_182 dim 1 : vector<64x256xf32>, i32 -> vector<64x256xf32>
    %c7_183 = arith.constant 7 : index
    %c0_184 = arith.constant 0 : index
    %c0_185 = arith.constant 0 : index
    %256 = vector.load %arg2[%c7_183, %c0_184, %c0_185] : memref<9x1x256xf32, #tpu.memory_space<vmem>>, vector<1x1x256xf32>
    %257 = vector.shape_cast %256 : vector<1x1x256xf32> to vector<1x256xf32>
    %258 = vector.broadcast %257 : vector<1x256xf32> to vector<64x256xf32>
    %259 = arith.mulf %255, %258 : vector<64x256xf32>
    %c7_186 = arith.constant 7 : index
    %c0_187 = arith.constant 0 : index
    %c0_188 = arith.constant 0 : index
    %260 = vector.load %arg7[%c7_186, %c0_187, %c0_188] : memref<9x64x64xbf16, #tpu.memory_space<vmem>>, vector<1x64x64xbf16>
    %261 = vector.shape_cast %260 : vector<1x64x64xbf16> to vector<64x64xbf16>
    %262 = arith.truncf %259 : vector<64x256xf32> to vector<64x256xbf16>
    %cst_189 = arith.constant dense<0.000000e+00> : vector<64x256xf32>
    %263 = tpu.matmul %261, %262, %cst_189 {dimension_numbers = #tpu.dot_dimension_numbers<[1], [0], [0], [1], [0, 0, 1, 1], [], []>} : vector<64x64xbf16>, vector<64x256xbf16>, vector<64x256xf32> -> vector<64x256xf32>
    %264 = arith.addf %254, %263 : vector<64x256xf32>
    %c239_i32_190 = arith.constant 239 : i32
    %265 = tpu.dynamic_rotate %186 by %c239_i32_190 dim 1 : vector<64x256xf32>, i32 -> vector<64x256xf32>
    %c8_191 = arith.constant 8 : index
    %c0_192 = arith.constant 0 : index
    %c0_193 = arith.constant 0 : index
    %266 = vector.load %arg2[%c8_191, %c0_192, %c0_193] : memref<9x1x256xf32, #tpu.memory_space<vmem>>, vector<1x1x256xf32>
    %267 = vector.shape_cast %266 : vector<1x1x256xf32> to vector<1x256xf32>
    %268 = vector.broadcast %267 : vector<1x256xf32> to vector<64x256xf32>
    %269 = arith.mulf %265, %268 : vector<64x256xf32>
    %c8_194 = arith.constant 8 : index
    %c0_195 = arith.constant 0 : index
    %c0_196 = arith.constant 0 : index
    %270 = vector.load %arg7[%c8_194, %c0_195, %c0_196] : memref<9x64x64xbf16, #tpu.memory_space<vmem>>, vector<1x64x64xbf16>
    %271 = vector.shape_cast %270 : vector<1x64x64xbf16> to vector<64x64xbf16>
    %272 = arith.truncf %269 : vector<64x256xf32> to vector<64x256xbf16>
    %cst_197 = arith.constant dense<0.000000e+00> : vector<64x256xf32>
    %273 = tpu.matmul %271, %272, %cst_197 {dimension_numbers = #tpu.dot_dimension_numbers<[1], [0], [0], [1], [0, 0, 1, 1], [], []>} : vector<64x64xbf16>, vector<64x256xbf16>, vector<64x256xf32> -> vector<64x256xf32>
    %274 = arith.addf %264, %273 : vector<64x256xf32>
    %c0_198 = arith.constant 0 : index
    %c0_199 = arith.constant 0 : index
    %275 = vector.load %arg8[%c0_198, %c0_199] : memref<64x1xf32, #tpu.memory_space<vmem>>, vector<64x1xf32>
    %276 = vector.broadcast %275 : vector<64x1xf32> to vector<64x256xf32>
    %277 = arith.addf %274, %276 : vector<64x256xf32>
    %cst_200 = arith.constant 0.000000e+00 : f32
    %278 = vector.broadcast %cst_200 : f32 to vector<64x256xf32>
    %279 = arith.maximumf %277, %278 : vector<64x256xf32>
    %c0_201 = arith.constant 0 : index
    %c0_202 = arith.constant 0 : index
    %280 = vector.load %arg9[%c0_201, %c0_202] : memref<4x64xbf16, #tpu.memory_space<vmem>>, vector<4x64xbf16>
    %281 = arith.truncf %279 : vector<64x256xf32> to vector<64x256xbf16>
    %cst_203 = arith.constant dense<0.000000e+00> : vector<4x256xf32>
    %282 = tpu.matmul %280, %281, %cst_203 {dimension_numbers = #tpu.dot_dimension_numbers<[1], [0], [0], [1], [0, 0, 1, 1], [], []>} : vector<4x64xbf16>, vector<64x256xbf16>, vector<4x256xf32> -> vector<4x256xf32>
    %c0_204 = arith.constant 0 : index
    %c0_205 = arith.constant 0 : index
    %283 = vector.load %arg10[%c0_204, %c0_205] : memref<4x1xf32, #tpu.memory_space<vmem>>, vector<4x1xf32>
    %284 = vector.broadcast %283 : vector<4x1xf32> to vector<4x256xf32>
    %285 = arith.addf %282, %284 : vector<4x256xf32>
    %cst_206 = arith.constant 0.000000e+00 : f32
    %286 = vector.broadcast %cst_206 : f32 to vector<4x256xf32>
    %287 = arith.maximumf %285, %286 : vector<4x256xf32>
    %cst_207 = arith.constant 1.000000e+00 : f32
    %288 = vector.broadcast %cst_207 : f32 to vector<12x256xf32>
    %289 = arith.cmpf olt, %2, %288 : vector<12x256xf32>
    %cst_208 = arith.constant -1.000000e+00 : f32
    %290 = vector.broadcast %cst_208 : f32 to vector<12x256xf32>
    %291 = arith.cmpf ogt, %2, %290 : vector<12x256xf32>
    %292 = arith.andi %289, %291 : vector<12x256xi1>
    %cst_209 = arith.constant 1.000000e+00 : f32
    %cst_210 = arith.constant 0.000000e+00 : f32
    %293 = vector.broadcast %cst_209 : f32 to vector<12x256xf32>
    %294 = vector.broadcast %cst_210 : f32 to vector<12x256xf32>
    %295 = arith.select %292, %293, %294 : vector<12x256xi1>, vector<12x256xf32>
    %c0_211 = arith.constant 0 : index
    %c0_212 = arith.constant 0 : index
    %296 = vector.load %arg11[%c0_211, %c0_212] : memref<4x12xbf16, #tpu.memory_space<vmem>>, vector<4x12xbf16>
    %297 = arith.truncf %295 : vector<12x256xf32> to vector<12x256xbf16>
    %cst_213 = arith.constant dense<0.000000e+00> : vector<4x256xf32>
    %298 = tpu.matmul %296, %297, %cst_213 {dimension_numbers = #tpu.dot_dimension_numbers<[1], [0], [0], [1], [0, 0, 1, 1], [], []>} : vector<4x12xbf16>, vector<12x256xbf16>, vector<4x256xf32> -> vector<4x256xf32>
    %cst_214 = arith.constant dense<0.000000e+00> : vector<4xf32>
    %299 = vector.multi_reduction <add>, %287, %cst_214 [1] : vector<4x256xf32> to vector<4xf32>
    %300 = vector.shape_cast %299 : vector<4xf32> to vector<4x1xf32>
    %cst_215 = arith.constant dense<0.000000e+00> : vector<4xf32>
    %301 = vector.multi_reduction <add>, %298, %cst_215 [1] : vector<4x256xf32> to vector<4xf32>
    %302 = vector.shape_cast %301 : vector<4xf32> to vector<4x1xf32>
    %cst_216 = arith.constant 6.912000e+02 : f32
    %303 = vector.broadcast %cst_216 : f32 to vector<4x1xf32>
    %304 = arith.cmpf olt, %302, %303 : vector<4x1xf32>
    %cst_217 = arith.constant 1.000000e+00 : f32
    %cst_218 = arith.constant 0.000000e+00 : f32
    %305 = vector.broadcast %cst_217 : f32 to vector<4x1xf32>
    %306 = vector.broadcast %cst_218 : f32 to vector<4x1xf32>
    %307 = arith.select %304, %305, %306 : vector<4x1xi1>, vector<4x1xf32>
    %cst_219 = arith.constant dense<0xFF800000> : vector<1xf32>
    %308 = vector.multi_reduction <maximumf>, %300, %cst_219 [0] : vector<4x1xf32> to vector<1xf32>
    %309 = vector.shape_cast %308 : vector<1xf32> to vector<1x1xf32>
    %310 = vector.broadcast %309 : vector<1x1xf32> to vector<4x1xf32>
    %311 = arith.subf %300, %310 : vector<4x1xf32>
    %312 = math.exp %311 : vector<4x1xf32>
    %cst_220 = arith.constant dense<0.000000e+00> : vector<1xf32>
    %313 = vector.multi_reduction <add>, %312, %cst_220 [0] : vector<4x1xf32> to vector<1xf32>
    %314 = vector.shape_cast %313 : vector<1xf32> to vector<1x1xf32>
    %315 = vector.broadcast %314 : vector<1x1xf32> to vector<4x1xf32>
    %316 = arith.divf %312, %315 : vector<4x1xf32>
    %317 = arith.mulf %316, %307 : vector<4x1xf32>
    %c0_221 = arith.constant 0 : index
    %c0_222 = arith.constant 0 : index
    %c0_223 = arith.constant 0 : index
    %318 = vector.load %arg13[%c0_221, %c0_222, %c0_223] : memref<1x4x1xf32, #tpu.memory_space<vmem>>, vector<1x4x1xf32>
    %319 = vector.shape_cast %318 : vector<1x4x1xf32> to vector<4x1xf32>
    %320 = vector.shape_cast %317 : vector<4x1xf32> to vector<1x4x1xf32>
    tpu.vector_store %arg13[%c0_221, %c0_222, %c0_223], %320 {strides = array<i32>} : memref<1x4x1xf32, #tpu.memory_space<vmem>>, vector<1x4x1xf32>,
    %321 = vector.extract_strided_slice %317 {offsets = [0, 0], sizes = [1, 1], strides = [1, 1]} : vector<4x1xf32> to vector<1x1xf32>
    %322 = vector.shape_cast %321 : vector<1x1xf32> to vector<1x1xf32>
    %323 = vector.broadcast %322 : vector<1x1xf32> to vector<16x1xf32>
    %324 = vector.extract_strided_slice %317 {offsets = [1, 0], sizes = [1, 1], strides = [1, 1]} : vector<4x1xf32> to vector<1x1xf32>
    %325 = vector.shape_cast %324 : vector<1x1xf32> to vector<1x1xf32>
    %326 = vector.broadcast %325 : vector<1x1xf32> to vector<16x1xf32>
    %327 = vector.extract_strided_slice %317 {offsets = [2, 0], sizes = [1, 1], strides = [1, 1]} : vector<4x1xf32> to vector<1x1xf32>
    %328 = vector.shape_cast %327 : vector<1x1xf32> to vector<1x1xf32>
    %329 = vector.broadcast %328 : vector<1x1xf32> to vector<16x1xf32>
    %330 = vector.extract_strided_slice %317 {offsets = [3, 0], sizes = [1, 1], strides = [1, 1]} : vector<4x1xf32> to vector<1x1xf32>
    %331 = vector.shape_cast %330 : vector<1x1xf32> to vector<1x1xf32>
    %332 = vector.broadcast %331 : vector<1x1xf32> to vector<16x1xf32>
    %333 = tpu.concatenate %323, %326, %329, %332 in 0 : vector<16x1xf32>, vector<16x1xf32>, vector<16x1xf32>, vector<16x1xf32> -> vector<64x1xf32>
    %334 = vector.broadcast %333 : vector<64x1xf32> to vector<64x256xf32>
    %335 = arith.mulf %188, %334 : vector<64x256xf32>
    %c0_224 = arith.constant 0 : index
    %c0_225 = arith.constant 0 : index
    %336 = vector.load %arg12[%c0_224, %c0_225] : memref<64x256xf32, #tpu.memory_space<vmem>>, vector<64x256xf32>
    tpu.vector_store %arg12[%c0_224, %c0_225], %335 {strides = array<i32>} : memref<64x256xf32, #tpu.memory_space<vmem>>, vector<64x256xf32>,
    return
  }
  func.func @transform_0(%arg0: i32) -> (i32, i32) {
    %c0_i32 = arith.constant 0 : i32
    %c0_i32_0 = arith.constant 0 : i32
    return %c0_i32, %arg0 : i32, i32
  }
  func.func @transform_1(%arg0: i32) -> (i32, i32, i32) {
    %c0_i32 = arith.constant 0 : i32
    %c0_i32_0 = arith.constant 0 : i32
    %c0_i32_1 = arith.constant 0 : i32
    %c0_i32_2 = arith.constant 0 : i32
    return %c0_i32, %c0_i32_0, %c0_i32_1 : i32, i32, i32
  }
  func.func @transform_2(%arg0: i32) -> (i32, i32, i32) {
    %c0_i32 = arith.constant 0 : i32
    %c0_i32_0 = arith.constant 0 : i32
    %c0_i32_1 = arith.constant 0 : i32
    %c0_i32_2 = arith.constant 0 : i32
    return %c0_i32, %c0_i32_0, %c0_i32_1 : i32, i32, i32
  }
  func.func @transform_3(%arg0: i32) -> (i32, i32) {
    %c0_i32 = arith.constant 0 : i32
    %c0_i32_0 = arith.constant 0 : i32
    %c0_i32_1 = arith.constant 0 : i32
    return %c0_i32, %c0_i32_0 : i32, i32
  }
  func.func @transform_4(%arg0: i32) -> (i32, i32, i32) {
    %c0_i32 = arith.constant 0 : i32
    %c0_i32_0 = arith.constant 0 : i32
    %c0_i32_1 = arith.constant 0 : i32
    %c0_i32_2 = arith.constant 0 : i32
    return %c0_i32, %c0_i32_0, %c0_i32_1 : i32, i32, i32
  }
  func.func @transform_5(%arg0: i32) -> (i32, i32) {
    %c0_i32 = arith.constant 0 : i32
    %c0_i32_0 = arith.constant 0 : i32
    %c0_i32_1 = arith.constant 0 : i32
    return %c0_i32, %c0_i32_0 : i32, i32
  }
  func.func @transform_6(%arg0: i32) -> (i32, i32, i32) {
    %c0_i32 = arith.constant 0 : i32
    %c0_i32_0 = arith.constant 0 : i32
    %c0_i32_1 = arith.constant 0 : i32
    %c0_i32_2 = arith.constant 0 : i32
    return %c0_i32, %c0_i32_0, %c0_i32_1 : i32, i32, i32
  }
  func.func @transform_7(%arg0: i32) -> (i32, i32) {
    %c0_i32 = arith.constant 0 : i32
    %c0_i32_0 = arith.constant 0 : i32
    %c0_i32_1 = arith.constant 0 : i32
    return %c0_i32, %c0_i32_0 : i32, i32
  }
  func.func @transform_8(%arg0: i32) -> (i32, i32) {
    %c0_i32 = arith.constant 0 : i32
    %c0_i32_0 = arith.constant 0 : i32
    %c0_i32_1 = arith.constant 0 : i32
    return %c0_i32, %c0_i32_0 : i32, i32
  }
  func.func @transform_9(%arg0: i32) -> (i32, i32) {
    %c0_i32 = arith.constant 0 : i32
    %c0_i32_0 = arith.constant 0 : i32
    %c0_i32_1 = arith.constant 0 : i32
    return %c0_i32, %c0_i32_0 : i32, i32
  }
  func.func @transform_10(%arg0: i32) -> (i32, i32) {
    %c0_i32 = arith.constant 0 : i32
    %c0_i32_0 = arith.constant 0 : i32
    %c0_i32_1 = arith.constant 0 : i32
    return %c0_i32, %c0_i32_0 : i32, i32
  }
  func.func @transform_11(%arg0: i32) -> (i32, i32) {
    %c0_i32 = arith.constant 0 : i32
    %c0_i32_0 = arith.constant 0 : i32
    return %c0_i32, %arg0 : i32, i32
  }
  func.func @transform_12(%arg0: i32) -> (i32, i32, i32) {
    %c0_i32 = arith.constant 0 : i32
    %c0_i32_0 = arith.constant 0 : i32
    %c0_i32_1 = arith.constant 0 : i32
    return %arg0, %c0_i32, %c0_i32_0 : i32, i32, i32
  }
}

</mosaic_0001>

<llo_original>
// kernel: encoder_forward.1
$region0: #{encoder_forward.1}
  #allocation0 [shape = 'u32[]', space=smem, size = 0x4, offset = 0x4, fixed_abs, tag = 'smem constant byte address 0x4 - core index']
  #allocation1 [shape = 'u32[144,128]{1,0:T(1,128)}', space=vmem, size = 0x12000, scoped, tag = 'internal scratch']
  %s0 = inlined_call_operand.vmem [shape: f32[12,512], index: 0, kind: input, shape index: {}]
  %s1 = inlined_call_operand.vmem [shape: f32[9,1,256], index: 1, kind: input, shape index: {}]
  %s2 = inlined_call_operand.vmem [shape: bf16[9,40,12], index: 2, kind: input, shape index: {}]
  %s3 = inlined_call_operand.vmem [shape: f32[40,1], index: 3, kind: input, shape index: {}]
  %s4 = inlined_call_operand.vmem [shape: bf16[9,80,40], index: 4, kind: input, shape index: {}]
  %s5 = inlined_call_operand.vmem [shape: f32[80,1], index: 5, kind: input, shape index: {}]
  %s6 = inlined_call_operand.vmem [shape: bf16[9,64,64], index: 6, kind: input, shape index: {}]
  %s7 = inlined_call_operand.vmem [shape: f32[64,1], index: 7, kind: input, shape index: {}]
  %s8 = inlined_call_operand.vmem [shape: bf16[4,64], index: 8, kind: input, shape index: {}]
  %s9 = inlined_call_operand.vmem [shape: f32[4,1], index: 9, kind: input, shape index: {}]
  %s10 = inlined_call_operand.vmem [shape: bf16[4,12], index: 10, kind: input, shape index: {}]
  %s11 = inlined_call_operand.vmem [shape: f32[64,512], index: 11, kind: output, shape index: {0}]
  %s12 = inlined_call_operand.vmem [shape: f32[2,4,1], index: 12, kind: output, shape index: {1}]
  %13 = xla_tuple %s11, %s12
  %s14 = sld [smem:[#allocation0]]
  $region127: #{encoder_forward.1} parent=0
    _
  %s16 = ssub.s32 1, %s14
  %s17 = scalar_select 0, %s16, %s14
  $region1: #{encoder_forward.1} parent=0
    #allocation2 [shape = 'u8[32768]{0}', space=vmem, size = 0x8000, scoped, tag = 'input window, operand 0']
    #allocation3 [shape = 'u8[131072]{0}', space=vmem, size = 0x20000, scoped, tag = 'output window, operand 0']
    loop: start=0, step=1, limit=4
    $region2: #{encoder_forward.1} parent=1 // loop_pre_header
      _
    $region3: #{encoder_forward.1} parent=1 // loop_header
      %s19 = sphi 0, %s23
      %p20 = scmp.ge.s32.totalorder %s19, 4
      %s29 = sphi 0, %s31
      %s32 = sphi 0, %s29
      %s33 = sphi 0, %s32
      %s49 = sphi 0, %s33
      %s53 = sphi 0, %s53
      %s55 = sphi 0, %s53
      %s56 = sphi 0, %s55
      %s70 = sphi 0, %s56
      %s74 = sphi 0, %s74
      %s76 = sphi 0, %s74
      %s77 = sphi 0, %s76
      %s91 = sphi 0, %s77
      %s95 = sphi 0, %s95
      %s97 = sphi 0, %s95
      %s98 = sphi 0, %s97
      %s112 = sphi 0, %s98
      %s116 = sphi 0, %s116
      %s118 = sphi 0, %s116
      %s119 = sphi 0, %s118
      %s133 = sphi 0, %s119
      %s137 = sphi 0, %s137
      %s139 = sphi 0, %s137
      %s140 = sphi 0, %s139
      %s154 = sphi 0, %s140
      %s158 = sphi 0, %s158
      %s160 = sphi 0, %s158
      %s161 = sphi 0, %s160
      %s175 = sphi 0, %s161
      %s179 = sphi 0, %s179
      %s181 = sphi 0, %s179
      %s182 = sphi 0, %s181
      %s196 = sphi 0, %s182
      %s200 = sphi 0, %s200
      %s202 = sphi 0, %s200
      %s203 = sphi 0, %s202
      %s217 = sphi 0, %s203
      %s221 = sphi 0, %s221
      %s223 = sphi 0, %s221
      %s224 = sphi 0, %s223
      %s238 = sphi 0, %s224
      %s242 = sphi 0, %s242
      %s244 = sphi 0, %s242
      %s245 = sphi 0, %s244
      %s259 = sphi 0, %s245
      %s265 = sphi 0, %s267
      %s268 = sphi 0, %s265
      %s269 = sphi 0, %s268
      %s285 = sphi 0, %s269
      %s291 = sphi 0, %s293
      %s294 = sphi 0, %s291
      %s295 = sphi 0, %s294
      %s311 = sphi 0, %s295
    $region4: #{encoder_forward.1} parent=1 // loop_header_branch
      %22 = sbr.rel (%p20) target = $region8
    $region5: #{encoder_forward.1} parent=1 // loop_body
      %s24 = ssub.s32 %s19, 1
      %s25 = ssub.s32 %s19, 2
      %s26 = sadd.s32 %s19, 1
      %s27 = ssub.s32 %s19, %s26
      %p28 = scmp.eq.s32.totalorder %s27, 0
      %s30 = sadd.s32 %s29, 1
      %s31 = scalar_select %p28, %s29, %s30
      %p34 = pneg %p28
      %p35 = scmp.eq.s32.totalorder %s19, 1
      %p36 = por %p34, %p35
      %p37 = scmp.ne.s32.totalorder %s29, %s32
      %p38 = scmp.eq.s32.totalorder %s19, 0
      %p39 = por %p37, %p38
      %p40 = scmp.ne.s32.totalorder %s29, %s32
      %p41 = scmp.eq.s32.totalorder %s24, 1
      %p42 = por %p40, %p41
      %p43 = scmp.ne.s32.totalorder %s32, %s33
      %p44 = scmp.eq.s32.totalorder %s24, 0
      %p45 = por %p43, %p44
      %p46 = scmp.ne.s32.totalorder %s32, %s33
      %p47 = scmp.eq.s32.totalorder %s25, 1
      %p48 = por %p46, %p47
      %p50 = scmp.ne.s32.totalorder %s33, %s49
      %p51 = scmp.eq.s32.totalorder %s25, 0
      %p52 = por %p50, %p51
      %s54 = sadd.s32 %s53, 1
      %p57 = scmp.eq.s32.totalorder %s19, 1
      %p58 = scmp.ne.s32.totalorder %s53, %s55
      %p59 = scmp.eq.s32.totalorder %s19, 0
      %p60 = por %p58, %p59
      %p61 = scmp.ne.s32.totalorder %s53, %s55
      %p62 = scmp.eq.s32.totalorder %s24, 1
      %p63 = por %p61, %p62
      %p64 = scmp.ne.s32.totalorder %s55, %s56
      %p65 = scmp.eq.s32.totalorder %s24, 0
      %p66 = por %p64, %p65
      %p67 = scmp.ne.s32.totalorder %s55, %s56
      %p68 = scmp.eq.s32.totalorder %s25, 1
      %p69 = por %p67, %p68
      %p71 = scmp.ne.s32.totalorder %s56, %s70
      %p72 = scmp.eq.s32.totalorder %s25, 0
      %p73 = por %p71, %p72
      %s75 = sadd.s32 %s74, 1
      %p78 = scmp.eq.s32.totalorder %s19, 1
      %p79 = scmp.ne.s32.totalorder %s74, %s76
      %p80 = scmp.eq.s32.totalorder %s19, 0
      %p81 = por %p79, %p80
      %p82 = scmp.ne.s32.totalorder %s74, %s76
      %p83 = scmp.eq.s32.totalorder %s24, 1
      %p84 = por %p82, %p83
      %p85 = scmp.ne.s32.totalorder %s76, %s77
      %p86 = scmp.eq.s32.totalorder %s24, 0
      %p87 = por %p85, %p86
      %p88 = scmp.ne.s32.totalorder %s76, %s77
      %p89 = scmp.eq.s32.totalorder %s25, 1
      %p90 = por %p88, %p89
      %p92 = scmp.ne.s32.totalorder %s77, %s91
      %p93 = scmp.eq.s32.totalorder %s25, 0
      %p94 = por %p92, %p93
      %s96 = sadd.s32 %s95, 1
      %p99 = scmp.eq.s32.totalorder %s19, 1
      %p100 = scmp.ne.s32.totalorder %s95, %s97
      %p101 = scmp.eq.s32.totalorder %s19, 0
      %p102 = por %p100, %p101
      %p103 = scmp.ne.s32.totalorder %s95, %s97
      %p104 = scmp.eq.s32.totalorder %s24, 1
      %p105 = por %p103, %p104
      %p106 = scmp.ne.s32.totalorder %s97, %s98
      %p107 = scmp.eq.s32.totalorder %s24, 0
      %p108 = por %p106, %p107
      %p109 = scmp.ne.s32.totalorder %s97, %s98
      %p110 = scmp.eq.s32.totalorder %s25, 1
      %p111 = por %p109, %p110
      %p113 = scmp.ne.s32.totalorder %s98, %s112
      %p114 = scmp.eq.s32.totalorder %s25, 0
      %p115 = por %p113, %p114
      %s117 = sadd.s32 %s116, 1
      %p120 = scmp.eq.s32.totalorder %s19, 1
      %p121 = scmp.ne.s32.totalorder %s116, %s118
      %p122 = scmp.eq.s32.totalorder %s19, 0
      %p123 = por %p121, %p122
      %p124 = scmp.ne.s32.totalorder %s116, %s118
      %p125 = scmp.eq.s32.totalorder %s24, 1
      %p126 = por %p124, %p125
      %p127 = scmp.ne.s32.totalorder %s118, %s119
      %p128 = scmp.eq.s32.totalorder %s24, 0
      %p129 = por %p127, %p128
      %p130 = scmp.ne.s32.totalorder %s118, %s119
      %p131 = scmp.eq.s32.totalorder %s25, 1
      %p132 = por %p130, %p131
      %p134 = scmp.ne.s32.totalorder %s119, %s133
      %p135 = scmp.eq.s32.totalorder %s25, 0
      %p136 = por %p134, %p135
      %s138 = sadd.s32 %s137, 1
      %p141 = scmp.eq.s32.totalorder %s19, 1
      %p142 = scmp.ne.s32.totalorder %s137, %s139
      %p143 = scmp.eq.s32.totalorder %s19, 0
      %p144 = por %p142, %p143
      %p145 = scmp.ne.s32.totalorder %s137, %s139
      %p146 = scmp.eq.s32.totalorder %s24, 1
      %p147 = por %p145, %p146
      %p148 = scmp.ne.s32.totalorder %s139, %s140
      %p149 = scmp.eq.s32.totalorder %s24, 0
      %p150 = por %p148, %p149
      %p151 = scmp.ne.s32.totalorder %s139, %s140
      %p152 = scmp.eq.s32.totalorder %s25, 1
      %p153 = por %p151, %p152
      %p155 = scmp.ne.s32.totalorder %s140, %s154
      %p156 = scmp.eq.s32.totalorder %s25, 0
      %p157 = por %p155, %p156
      %s159 = sadd.s32 %s158, 1
      %p162 = scmp.eq.s32.totalorder %s19, 1
      %p163 = scmp.ne.s32.totalorder %s158, %s160
      %p164 = scmp.eq.s32.totalorder %s19, 0
      %p165 = por %p163, %p164
      %p166 = scmp.ne.s32.totalorder %s158, %s160
      %p167 = scmp.eq.s32.totalorder %s24, 1
      %p168 = por %p166, %p167
      %p169 = scmp.ne.s32.totalorder %s160, %s161
      %p170 = scmp.eq.s32.totalorder %s24, 0
      %p171 = por %p169, %p170
      %p172 = scmp.ne.s32.totalorder %s160, %s161
      %p173 = scmp.eq.s32.totalorder %s25, 1
      %p174 = por %p172, %p173
      %p176 = scmp.ne.s32.totalorder %s161, %s175
      %p177 = scmp.eq.s32.totalorder %s25, 0
      %p178 = por %p176, %p177
      %s180 = sadd.s32 %s179, 1
      %p183 = scmp.eq.s32.totalorder %s19, 1
      %p184 = scmp.ne.s32.totalorder %s179, %s181
      %p185 = scmp.eq.s32.totalorder %s19, 0
      %p186 = por %p184, %p185
      %p187 = scmp.ne.s32.totalorder %s179, %s181
      %p188 = scmp.eq.s32.totalorder %s24, 1
      %p189 = por %p187, %p188
      %p190 = scmp.ne.s32.totalorder %s181, %s182
      %p191 = scmp.eq.s32.totalorder %s24, 0
      %p192 = por %p190, %p191
      %p193 = scmp.ne.s32.totalorder %s181, %s182
      %p194 = scmp.eq.s32.totalorder %s25, 1
      %p195 = por %p193, %p194
      %p197 = scmp.ne.s32.totalorder %s182, %s196
      %p198 = scmp.eq.s32.totalorder %s25, 0
      %p199 = por %p197, %p198
      %s201 = sadd.s32 %s200, 1
      %p204 = scmp.eq.s32.totalorder %s19, 1
      %p205 = scmp.ne.s32.totalorder %s200, %s202
      %p206 = scmp.eq.s32.totalorder %s19, 0
      %p207 = por %p205, %p206
      %p208 = scmp.ne.s32.totalorder %s200, %s202
      %p209 = scmp.eq.s32.totalorder %s24, 1
      %p210 = por %p208, %p209
      %p211 = scmp.ne.s32.totalorder %s202, %s203
      %p212 = scmp.eq.s32.totalorder %s24, 0
      %p213 = por %p211, %p212
      %p214 = scmp.ne.s32.totalorder %s202, %s203
      %p215 = scmp.eq.s32.totalorder %s25, 1
      %p216 = por %p214, %p215
      %p218 = scmp.ne.s32.totalorder %s203, %s217
      %p219 = scmp.eq.s32.totalorder %s25, 0
      %p220 = por %p218, %p219
      %s222 = sadd.s32 %s221, 1
      %p225 = scmp.eq.s32.totalorder %s19, 1
      %p226 = scmp.ne.s32.totalorder %s221, %s223
      %p227 = scmp.eq.s32.totalorder %s19, 0
      %p228 = por %p226, %p227
      %p229 = scmp.ne.s32.totalorder %s221, %s223
      %p230 = scmp.eq.s32.totalorder %s24, 1
      %p231 = por %p229, %p230
      %p232 = scmp.ne.s32.totalorder %s223, %s224
      %p233 = scmp.eq.s32.totalorder %s24, 0
      %p234 = por %p232, %p233
      %p235 = scmp.ne.s32.totalorder %s223, %s224
      %p236 = scmp.eq.s32.totalorder %s25, 1
      %p237 = por %p235, %p236
      %p239 = scmp.ne.s32.totalorder %s224, %s238
      %p240 = scmp.eq.s32.totalorder %s25, 0
      %p241 = por %p239, %p240
      %s243 = sadd.s32 %s242, 1
      %p246 = scmp.eq.s32.totalorder %s19, 1
      %p247 = scmp.ne.s32.totalorder %s242, %s244
      %p248 = scmp.eq.s32.totalorder %s19, 0
      %p249 = por %p247, %p248
      %p250 = scmp.ne.s32.totalorder %s242, %s244
      %p251 = scmp.eq.s32.totalorder %s24, 1
      %p252 = por %p250, %p251
      %p253 = scmp.ne.s32.totalorder %s244, %s245
      %p254 = scmp.eq.s32.totalorder %s24, 0
      %p255 = por %p253, %p254
      %p256 = scmp.ne.s32.totalorder %s244, %s245
      %p257 = scmp.eq.s32.totalorder %s25, 1
      %p258 = por %p256, %p257
      %p260 = scmp.ne.s32.totalorder %s245, %s259
      %p261 = scmp.eq.s32.totalorder %s25, 0
      %p262 = por %p260, %p261
      %s263 = ssub.s32 %s19, %s26
      %p264 = scmp.eq.s32.totalorder %s263, 0
      %s266 = sadd.s32 %s265, 1
      %s267 = scalar_select %p264, %s265, %s266
      %p270 = pneg %p264
      %p271 = scmp.eq.s32.totalorder %s19, 1
      %p272 = por %p270, %p271
      %p273 = scmp.ne.s32.totalorder %s265, %s268
      %p274 = scmp.eq.s32.totalorder %s19, 0
      %p275 = por %p273, %p274
      %p276 = scmp.ne.s32.totalorder %s265, %s268
      %p277 = scmp.eq.s32.totalorder %s24, 1
      %p278 = por %p276, %p277
      %p279 = scmp.ne.s32.totalorder %s268, %s269
      %p280 = scmp.eq.s32.totalorder %s24, 0
      %p281 = por %p279, %p280
      %p282 = scmp.ne.s32.totalorder %s268, %s269
      %p283 = scmp.eq.s32.totalorder %s25, 1
      %p284 = por %p282, %p283
      %p286 = scmp.ne.s32.totalorder %s269, %s285
      %p287 = scmp.eq.s32.totalorder %s25, 0
      %p288 = por %p286, %p287
      %s289 = ssub.s32 %s19, %s26
      %p290 = scmp.eq.s32.totalorder %s289, 0
      %s292 = sadd.s32 %s291, 1
      %s293 = scalar_select %p290, %s291, %s292
      %p296 = pneg %p290
      %p297 = scmp.eq.s32.totalorder %s19, 1
      %p298 = por %p296, %p297
      %p299 = scmp.ne.s32.totalorder %s291, %s294
      %p300 = scmp.eq.s32.totalorder %s19, 0
      %p301 = por %p299, %p300
      %p302 = scmp.ne.s32.totalorder %s291, %s294
      %p303 = scmp.eq.s32.totalorder %s24, 1
      %p304 = por %p302, %p303
      %p305 = scmp.ne.s32.totalorder %s294, %s295
      %p306 = scmp.eq.s32.totalorder %s24, 0
      %p307 = por %p305, %p306
      %p308 = scmp.ne.s32.totalorder %s294, %s295
      %p309 = scmp.eq.s32.totalorder %s25, 1
      %p310 = por %p308, %p309
      %p312 = scmp.ne.s32.totalorder %s295, %s311
      %p313 = scmp.eq.s32.totalorder %s25, 0
      %p314 = por %p312, %p313
      %p315 = scmp.le.s32.totalorder 1, %s19
      %p316 = scmp.lt.s32.totalorder %s19, 3
      %p317 = pnand %p315, %p316
      %p318 = pneg %p317
      // Predicated region
      $region9: #{encoder_forward.1} parent=5 // pred_check
        _
      $region10: #{encoder_forward.1} parent=5 // pred_check_branch
        %320 = sbr.rel (%p317) target = $region12
      $region11: #{encoder_forward.1} parent=5 // pred_region
        %s321 = ssub.s32 %s19, 1
        // Predicated region
        $region13: #{encoder_forward.1} parent=11 // pred_check
          %p322 = pneg %p66
        $region14: #{encoder_forward.1} parent=11 // pred_check_branch
          %324 = sbr.rel (%p322) target = $region16
        $region15: #{encoder_forward.1} parent=11 // pred_region
          _
        $region16: #{encoder_forward.1} parent=11 // pred_fallthru
          _
        // Predicated region
        $region17: #{encoder_forward.1} parent=11 // pred_check
          %p325 = pneg %p87
        $region18: #{encoder_forward.1} parent=11 // pred_check_branch
          %327 = sbr.rel (%p325) target = $region20
        $region19: #{encoder_forward.1} parent=11 // pred_region
          _
        $region20: #{encoder_forward.1} parent=11 // pred_fallthru
          _
        // Predicated region
        $region21: #{encoder_forward.1} parent=11 // pred_check
          %p328 = pneg %p108
        $region22: #{encoder_forward.1} parent=11 // pred_check_branch
          %330 = sbr.rel (%p328) target = $region24
        $region23: #{encoder_forward.1} parent=11 // pred_region
          _
        $region24: #{encoder_forward.1} parent=11 // pred_fallthru
          _
        // Predicated region
        $region25: #{encoder_forward.1} parent=11 // pred_check
          %p331 = pneg %p129
        $region26: #{encoder_forward.1} parent=11 // pred_check_branch
          %333 = sbr.rel (%p331) target = $region28
        $region27: #{encoder_forward.1} parent=11 // pred_region
          _
        $region28: #{encoder_forward.1} parent=11 // pred_fallthru
          _
        // Predicated region
        $region29: #{encoder_forward.1} parent=11 // pred_check
          %p334 = pneg %p150
        $region30: #{encoder_forward.1} parent=11 // pred_check_branch
          %336 = sbr.rel (%p334) target = $region32
        $region31: #{encoder_forward.1} parent=11 // pred_region
          _
        $region32: #{encoder_forward.1} parent=11 // pred_fallthru
          _
        // Predicated region
        $region33: #{encoder_forward.1} parent=11 // pred_check
          %p337 = pneg %p171
        $region34: #{encoder_forward.1} parent=11 // pred_check_branch
          %339 = sbr.rel (%p337) target = $region36
        $region35: #{encoder_forward.1} parent=11 // pred_region
          _
        $region36: #{encoder_forward.1} parent=11 // pred_fallthru
          _
        // Predicated region
        $region37: #{encoder_forward.1} parent=11 // pred_check
          %p340 = pneg %p192
        $region38: #{encoder_forward.1} parent=11 // pred_check_branch
          %342 = sbr.rel (%p340) target = $region40
        $region39: #{encoder_forward.1} parent=11 // pred_region
          _
        $region40: #{encoder_forward.1} parent=11 // pred_fallthru
          _
        // Predicated region
        $region41: #{encoder_forward.1} parent=11 // pred_check
          %p343 = pneg %p213
        $region42: #{encoder_forward.1} parent=11 // pred_check_branch
          %345 = sbr.rel (%p343) target = $region44
        $region43: #{encoder_forward.1} parent=11 // pred_region
          _
        $region44: #{encoder_forward.1} parent=11 // pred_fallthru
          _
        // Predicated region
        $region45: #{encoder_forward.1} parent=11 // pred_check
          %p346 = pneg %p234
        $region46: #{encoder_forward.1} parent=11 // pred_check_branch
          %348 = sbr.rel (%p346) target = $region48
        $region47: #{encoder_forward.1} parent=11 // pred_region
          _
        $region48: #{encoder_forward.1} parent=11 // pred_fallthru
          _
        // Predicated region
        $region49: #{encoder_forward.1} parent=11 // pred_check
          %p349 = pneg %p255
        $region50: #{encoder_forward.1} parent=11 // pred_check_branch
          %351 = sbr.rel (%p349) target = $region52
        $region51: #{encoder_forward.1} parent=11 // pred_region
          _
        $region52: #{encoder_forward.1} parent=11 // pred_fallthru
          _
      $region12: #{encoder_forward.1} parent=5 // pred_fallthru
        _
      %p352 = scmp.lt.s32.totalorder %s19, 2
      // Predicated region
      $region53: #{encoder_forward.1} parent=5 // pred_check
        %p353 = pneg %p352
      $region54: #{encoder_forward.1} parent=5 // pred_check_branch
        %355 = sbr.rel (%p353) target = $region56
      $region55: #{encoder_forward.1} parent=5 // pred_region
        // Predicated region
        $region57: #{encoder_forward.1} parent=55 // pred_check
          %p356 = pneg %p39
        $region58: #{encoder_forward.1} parent=55 // pred_check_branch
          %358 = sbr.rel (%p356) target = $region60
        $region59: #{encoder_forward.1} parent=55 // pred_region
          %s359 = sand.u32 %s29, 1
          %s360 = sand.u32 %s29, 1
          %s361 = smul.addr %s360, 32
          %s362 = scalar_lea.vmem [#allocation2], %s361
          %s363 = smul.u32 2, %s19
          %s364 = smul.addr %s363, 8
          %s365 = scalar_lea.vmem %s0, %s364
          // Predicated region
          $region61: #{encoder_forward.1} parent=59 // pred_check
            _
          $region62: #{encoder_forward.1} parent=59 // pred_check_branch
            %367 = sbr.rel (0) target = $region64
          $region63: #{encoder_forward.1} parent=59 // pred_region
            // Predicated region
            $region65: #{encoder_forward.1} parent=63 // pred_check
              _
            $region66: #{encoder_forward.1} parent=63 // pred_check_branch
              %369 = sbr.rel (0) target = $region68
            $region67: #{encoder_forward.1} parent=63 // pred_region
              loop: start=0, step=1, limit=1
              $region69: #{encoder_forward.1} parent=67 // loop_pre_header
                _
              $region70: #{encoder_forward.1} parent=67 // loop_header
                %s371 = sphi 0, %s375
                %p372 = scmp.ge.s32.totalorder %s371, 1
                %s376 = sphi %s365, %s365
                %s377 = sphi %s362, %s362
              $region71: #{encoder_forward.1} parent=67 // loop_header_branch
                %374 = sbr.rel (%p372) target = $region75
              $region72: #{encoder_forward.1} parent=67 // loop_body
                %v378 = vld [vmem:[%s376] sm:$0xff]
                %379 = vst [vmem:[%s377] sm:$0xff] %v378
                %v380 = vld [vmem:[%s376 + $0x8] sm:$0xff]
                %381 = vst [vmem:[%s377 + $0x8] sm:$0xff] %v380
                %v382 = vld [vmem:[%s376 + $0x20] sm:$0xff]
                %383 = vst [vmem:[%s377 + $0x10] sm:$0xff] %v382
                %v384 = vld [vmem:[%s376 + $0x28] sm:$0xff]
                %385 = vst [vmem:[%s377 + $0x18] sm:$0xff] %v384
              $region73: #{encoder_forward.1} parent=67 // loop_footer
                %s375 = sadd.s32 1, %s371
              $region74: #{encoder_forward.1} parent=67 // loop_footer_branch
                %370 = sbr.rel target = $region70
              $region75: #{encoder_forward.1} parent=67 // loop_exit
                _
            $region68: #{encoder_forward.1} parent=63 // pred_fallthru
              _
            // Predicated region
            $region76: #{encoder_forward.1} parent=63 // pred_check
              _
            $region77: #{encoder_forward.1} parent=63 // pred_check_branch
              %387 = sbr.rel target = $region79
            $region78: #{encoder_forward.1} parent=63 // pred_region
              _
            $region79: #{encoder_forward.1} parent=63 // pred_fallthru
              _
          $region64: #{encoder_forward.1} parent=59 // pred_fallthru
            _
          %388 = vnop
        $region60: #{encoder_forward.1} parent=55 // pred_fallthru
          _
      $region56: #{encoder_forward.1} parent=5 // pred_fallthru
        _
      %p389 = scmp.le.s32.totalorder 1, %s19
      %p390 = scmp.lt.s32.totalorder %s19, 3
      %p391 = pnand %p389, %p390
      %p392 = pneg %p391
      // Predicated region
      $region80: #{encoder_forward.1} parent=5 // pred_check
        _
      $region81: #{encoder_forward.1} parent=5 // pred_check_branch
        %394 = sbr.rel (%p391) target = $region83
      $region82: #{encoder_forward.1} parent=5 // pred_region
        %s395 = ssub.s32 %s19, 1
        %s396 = sand.u32 %s32, 1
        %s397 = sand.u32 %s32, 1
        %s398 = smul.addr %s397, 32
        %s399 = scalar_lea.vmem [#allocation2], %s398
        // Predicated region
        $region84: #{encoder_forward.1} parent=82 // pred_check
          %p400 = pneg %p45
        $region85: #{encoder_forward.1} parent=82 // pred_check_branch
          %402 = sbr.rel (%p400) target = $region87
        $region86: #{encoder_forward.1} parent=82 // pred_region
          _
        $region87: #{encoder_forward.1} parent=82 // pred_fallthru
          _
        %s403 = sand.u32 %s32, 1
        %s404 = sand.u32 %s32, 1
        %s405 = smul.addr %s404, 32
        %s406 = scalar_lea.vmem [#allocation2], %s405
        %p407 = pneg %p45
        %p408 = pneg %p42
        %p409 = pneg %p66
        %p410 = pneg %p63
        %p411 = pneg %p87
        %p412 = pneg %p84
        %p413 = pneg %p108
        %p414 = pneg %p105
        %p415 = pneg %p129
        %p416 = pneg %p126
        %p417 = pneg %p150
        %p418 = pneg %p147
        %p419 = pneg %p171
        %p420 = pneg %p168
        %p421 = pneg %p192
        %p422 = pneg %p189
        %p423 = pneg %p213
        %p424 = pneg %p210
        %p425 = pneg %p234
        %p426 = pneg %p231
        %p427 = pneg %p255
        %p428 = pneg %p252
        %p429 = pneg %p281
        %p430 = pneg %p278
        %s431 = sand.u32 %s268, 1
        %s432 = sand.u32 %s268, 1
        %s433 = smul.addr %s432, 128
        %s434 = scalar_lea.vmem [#allocation3], %s433
        %p435 = pneg %p307
        %p436 = pneg %p304
        %p437 = scmp.lt.s32.totalorder %s24, 1
        %s438 = scalar_select %p437, %s24, 1
        %s439 = smul.addr %s438, 4
        %s440 = scalar_lea.vmem %s12, %s439
        %s441 = smul.u32 2, %s24
        %s442 = smul.u32 2, %s24
        %p443 = scmp.lt.s32.totalorder %s24, 1
        %s444 = scalar_select %p443, %s24, 1
        %s445 = smul.addr %s444, 4
        %s446 = scalar_lea.vmem %s12, %s445
        %v448 = vld [vmem:[%s399] sm:$0xff]
        %v449 = vld [vmem:[%s399 + $0x8] sm:$0xff]
        %v450 = vld [vmem:[%s399 + $0x10] sm:$0xf]
        %v451 = vld [vmem:[%s399 + $0x18] sm:$0xf]
        %v452 = vsub.f32 %v448, 0.5
        %v453 = vsub.f32 %v449, 0.5
        %v454 = vsub.f32 %v450, 0.5
        %v455 = vsub.f32 %v451, 0.5
        %456 = vrot.lane.b32.xlu0 %v452, 17
        %v457 = vpop.permute.xlu0 %456
        %458 = vrot.lane.b32.xlu0 %v454, 17
        %v459 = vpop.permute.xlu0 %458
        %460 = vrot.lane.b32.xlu0 %v453, 17
        %v461 = vpop.permute.xlu0 %460
        %462 = vrot.lane.b32.xlu0 %v455, 17
        %v463 = vpop.permute.xlu0 %462
        %v464 = vlaneseq
        %v465 = vand.u32 %v464, 127
        %vm466 = vcmp.lt.s32.totalorder %v465, 17
        %v467 = vsel %vm466, %v457, %v461
        %v468 = vsel %vm466, %v459, %v463
        %v469 = vsel %vm466, %v461, %v457
        %v470 = vsel %vm466, %v463, %v459
        %v471 = vld [vmem:[%s1] sm:$0x3]
        %v473 = vlaneseq
        %v474 = vshrl.u32 %v473, 7
        %v475 = vsub.s32 0, %v474
        %v476 = vrot.slane %v471, %v475
        %v477 = vlaneseq
        %v478 = vshrl.u32 %v477, 7
        %v479 = vsub.s32 1, %v478
        %v480 = vrot.slane %v471, %v479
        %v483 = vmul.f32 %v469, %v476
        %v484 = vmul.f32 %v467, %v480
        %v485 = vmul.f32 %v470, %v476
        %v486 = vmul.f32 %v468, %v480
        %v487 = vld [vmem:[%s2] sm:$0xf]
        %v488 = vld [vmem:[%s2 + $0x4] sm:$0xf]
        %v489 = vld [vmem:[%s2 + $0x8] sm:$0xf]
        %v490 = vld [vmem:[%s2 + $0xc] sm:$0xf]
        %v491 = vld [vmem:[%s2 + $0x10] sm:$0xf]
        %v492 = vpack.c.bf16 %v485, %v483
        %v493 = vpack.c.bf16 %v486, %v484
        %494 = vrot.lane.b32.xlu0 %v452, 16
        %v495 = vpop.permute.xlu0 %494
        %496 = vrot.lane.b32.xlu0 %v454, 16
        %v497 = vpop.permute.xlu0 %496
        %498 = vrot.lane.b32.xlu0 %v453, 16
        %v499 = vpop.permute.xlu0 %498
        %500 = vrot.lane.b32.xlu0 %v455, 16
        %v501 = vpop.permute.xlu0 %500
        %vm502 = vcmp.lt.s32.totalorder %v465, 16
        %v503 = vsel %vm502, %v495, %v499
        %v504 = vsel %vm502, %v497, %v501
        %v505 = vsel %vm502, %v499, %v495
        %v506 = vsel %vm502, %v501, %v497
        %s507 = scalar_lea.vmem %s1, 2
        %v508 = vld [vmem:[%s507] sm:$0x3]
        %v510 = vlaneseq
        %v511 = vshrl.u32 %v510, 7
        %v512 = vsub.s32 0, %v511
        %v513 = vrot.slane %v508, %v512
        %v514 = vlaneseq
        %v515 = vshrl.u32 %v514, 7
        %v516 = vsub.s32 1, %v515
        %v517 = vrot.slane %v508, %v516
        %v520 = vmul.f32 %v505, %v513
        %v521 = vmul.f32 %v503, %v517
        %v522 = vmul.f32 %v506, %v513
        %v523 = vmul.f32 %v504, %v517
        %s524 = scalar_lea.vmem %s2, 20
        %v525 = vld [vmem:[%s524] sm:$0xf]
        %v526 = vld [vmem:[%s524 + $0x4] sm:$0xf]
        %v527 = vld [vmem:[%s524 + $0x8] sm:$0xf]
        %v528 = vld [vmem:[%s524 + $0xc] sm:$0xf]
        %v529 = vld [vmem:[%s524 + $0x10] sm:$0xf]
        %v530 = vpack.c.bf16 %v522, %v520
        %v531 = vpack.c.bf16 %v523, %v521
        %v537 = vunpack.c.l.b16 %v525
        %v538 = vunpack.c.l.b16 %v526
        %v539 = vunpack.c.l.b16 %v527
        %v540 = vunpack.c.l.b16 %v528
        %v541 = vunpack.c.l.b16 %v529
        %v542 = vpack.c.b16 %v538, %v537
        %v543 = vpack.c.b16 %v540, %v539
        %v544 = vpack.c.b16 %v541, %v541
        %vm545 = vcmask 97280
        %v547 = vsel %vm545, %v542, 0
        %v550 = vsel %vm545, %v543, 0
        %v553 = vsel %vm545, %v544, 0
        %vm555 = vcmask 1045504
        %v557 = vsel %vm555, %v530, 0
        %v560 = vsel %vm555, %v531, 0
        %562 = vmatprep.subr.bf16.mxu0 %v560
        %563 = vmatpush1.bf16.msra.mxu0 %v557
        %564 = vmatprep.subr.bf16.mxu0 0
        %565 = vmatpush1.bf16.msra.mxu0 0
        %566 = vmatprep.subr.bf16.mxu0 0
        %567 = vmatpush1.bf16.msra.mxu0 0
        %568 = vmatprep.subr.bf16.mxu0 0
        %569 = vmatpush1.bf16.msra.mxu0 0
        %570 = vmatprep.subr.bf16.mxu0 0
        %571 = vmatpush1.bf16.msra.mxu0 0
        %572 = vmatprep.subr.bf16.mxu0 0
        %573 = vmatpush1.bf16.msra.mxu0 0
        %574 = vmatprep.subr.bf16.mxu0 0
        %575 = vmatpush1.bf16.msra.mxu0 0
        %576 = vmatprep.subr.bf16.mxu0 0
        %577 = vmatpush1.bf16.msra.mxu0 0
        %578 = vmatprep.subr.bf16.mxu0 0
        %579 = vmatpush1.bf16.msra.mxu0 0
        %580 = vmatprep.subr.bf16.mxu0 0
        %581 = vmatpush1.bf16.msra.mxu0 0
        %582 = vmatprep.subr.bf16.mxu0 0
        %583 = vmatpush1.bf16.msra.mxu0 0
        %584 = vmatprep.subr.bf16.mxu0 0
        %585 = vmatpush1.bf16.msra.mxu0 0
        %586 = vmatprep.subr.bf16.mxu0 0
        %587 = vmatpush1.bf16.msra.mxu0 0
        %588 = vmatprep.subr.bf16.mxu0 0
        %589 = vmatpush1.bf16.msra.mxu0 0
        %590 = vmatprep.subr.bf16.mxu0 0
        %591 = vmatpush1.bf16.msra.mxu0 0
        %592 = vmatprep.subr.bf16.mxu0 0
        %593 = vmatpush1.bf16.msra.mxu0 0
        %594 = vmatprep.mubr.bf16.mxu0 0
        %595 = vmatmul.mubr.bf16.gmra.mrb[0].mxu0 %v547
        %v596 = vpop.f32.mrb[0].mxu0
        %v597 = vadd.f32 0.0, %v596
        %v598 = vpop.f32.mrb[0].mxu0
        %v599 = vadd.f32 0.0, %v598
        %v600 = vpop.f32.mrb[0].mxu0
        %v601 = vadd.f32 0.0, %v600
        %v602 = vpop.f32.mrb[0].mxu0
        %v603 = vadd.f32 0.0, %v602
        %604 = vmatprep.mubr.bf16.mxu0 0
        %605 = vmatmul.mubr.bf16.gmra.mrb[0].mxu0 %v550
        %v606 = vpop.f32.mrb[0].mxu0
        %v607 = vadd.f32 0.0, %v606
        %v608 = vpop.f32.mrb[0].mxu0
        %v609 = vadd.f32 0.0, %v608
        %v610 = vpop.f32.mrb[0].mxu0
        %v611 = vadd.f32 0.0, %v610
        %v612 = vpop.f32.mrb[0].mxu0
        %v613 = vadd.f32 0.0, %v612
        %614 = vmatprep.mubr.bf16.mxu0 0
        %615 = vmatmul.mubr.bf16.gmra.mrb[0].mxu0 %v553
        %v616 = vpop.f32.mrb[0].mxu0
        %v617 = vadd.f32 0.0, %v616
        %v618 = vpop.f32.mrb[0].mxu0
        %v619 = vadd.f32 0.0, %v618
        %v620 = vpop.f32.mrb[0].mxu0
        %v621 = vpop.f32.mrb[0].mxu0
        %622 = vdwg.mxu0
        %v628 = vunpack.c.l.b16 %v487
        %v629 = vunpack.c.l.b16 %v488
        %v630 = vunpack.c.l.b16 %v489
        %v631 = vunpack.c.l.b16 %v490
        %v632 = vunpack.c.l.b16 %v491
        %v633 = vpack.c.b16 %v629, %v628
        %v634 = vpack.c.b16 %v631, %v630
        %v635 = vpack.c.b16 %v632, %v632
        %v637 = vsel %vm545, %v633, 0
        %v640 = vsel %vm545, %v634, 0
        %v643 = vsel %vm545, %v635, 0
        %v646 = vsel %vm555, %v492, 0
        %v649 = vsel %vm555, %v493, 0
        %651 = vmatprep.subr.bf16.mxu0 %v649
        %652 = vmatpush1.bf16.msra.mxu0 %v646
        %653 = vmatprep.subr.bf16.mxu0 0
        %654 = vmatpush1.bf16.msra.mxu0 0
        %655 = vmatprep.subr.bf16.mxu0 0
        %656 = vmatpush1.bf16.msra.mxu0 0
        %657 = vmatprep.subr.bf16.mxu0 0
        %658 = vmatpush1.bf16.msra.mxu0 0
        %659 = vmatprep.subr.bf16.mxu0 0
        %660 = vmatpush1.bf16.msra.mxu0 0
        %661 = vmatprep.subr.bf16.mxu0 0
        %662 = vmatpush1.bf16.msra.mxu0 0
        %663 = vmatprep.subr.bf16.mxu0 0
        %664 = vmatpush1.bf16.msra.mxu0 0
        %665 = vmatprep.subr.bf16.mxu0 0
        %666 = vmatpush1.bf16.msra.mxu0 0
        %667 = vmatprep.subr.bf16.mxu0 0
        %668 = vmatpush1.bf16.msra.mxu0 0
        %669 = vmatprep.subr.bf16.mxu0 0
        %670 = vmatpush1.bf16.msra.mxu0 0
        %671 = vmatprep.subr.bf16.mxu0 0
        %672 = vmatpush1.bf16.msra.mxu0 0
        %673 = vmatprep.subr.bf16.mxu0 0
        %674 = vmatpush1.bf16.msra.mxu0 0
        %675 = vmatprep.subr.bf16.mxu0 0
        %676 = vmatpush1.bf16.msra.mxu0 0
        %677 = vmatprep.subr.bf16.mxu0 0
        %678 = vmatpush1.bf16.msra.mxu0 0
        %679 = vmatprep.subr.bf16.mxu0 0
        %680 = vmatpush1.bf16.msra.mxu0 0
        %681 = vmatprep.subr.bf16.mxu0 0
        %682 = vmatpush1.bf16.msra.mxu0 0
        %683 = vmatprep.mubr.bf16.mxu0 0
        %684 = vmatmul.mubr.bf16.gmra.mrb[0].mxu0 %v637
        %v685 = vpop.f32.mrb[0].mxu0
        %v686 = vadd.f32 %v597, %v685
        %v687 = vpop.f32.mrb[0].mxu0
        %v688 = vadd.f32 %v599, %v687
        %v689 = vpop.f32.mrb[0].mxu0
        %v690 = vadd.f32 %v601, %v689
        %v691 = vpop.f32.mrb[0].mxu0
        %v692 = vadd.f32 %v603, %v691
        %693 = vmatprep.mubr.bf16.mxu0 0
        %694 = vmatmul.mubr.bf16.gmra.mrb[0].mxu0 %v640
        %v695 = vpop.f32.mrb[0].mxu0
        %v696 = vadd.f32 %v607, %v695
        %v697 = vpop.f32.mrb[0].mxu0
        %v698 = vadd.f32 %v609, %v697
        %v699 = vpop.f32.mrb[0].mxu0
        %v700 = vadd.f32 %v611, %v699
        %v701 = vpop.f32.mrb[0].mxu0
        %v702 = vadd.f32 %v613, %v701
        %703 = vmatprep.mubr.bf16.mxu0 0
        %704 = vmatmul.mubr.bf16.gmra.mrb[0].mxu0 %v643
        %v705 = vpop.f32.mrb[0].mxu0
        %v706 = vadd.f32 %v617, %v705
        %v707 = vpop.f32.mrb[0].mxu0
        %v708 = vadd.f32 %v619, %v707
        %v709 = vpop.f32.mrb[0].mxu0
        %v710 = vpop.f32.mrb[0].mxu0
        %711 = vdwg.mxu0
        %712 = vrot.lane.b32.xlu0 %v452, 15
        %v713 = vpop.permute.xlu0 %712
        %714 = vrot.lane.b32.xlu0 %v454, 15
        %v715 = vpop.permute.xlu0 %714
        %716 = vrot.lane.b32.xlu0 %v453, 15
        %v717 = vpop.permute.xlu0 %716
        %718 = vrot.lane.b32.xlu0 %v455, 15
        %v719 = vpop.permute.xlu0 %718
        %vm720 = vcmp.lt.s32.totalorder %v465, 15
        %v721 = vsel %vm720, %v713, %v717
        %v722 = vsel %vm720, %v715, %v719
        %v723 = vsel %vm720, %v717, %v713
        %v724 = vsel %vm720, %v719, %v715
        %s725 = scalar_lea.vmem %s1, 4
        %v726 = vld [vmem:[%s725] sm:$0x3]
        %v728 = vlaneseq
        %v729 = vshrl.u32 %v728, 7
        %v730 = vsub.s32 0, %v729
        %v731 = vrot.slane %v726, %v730
        %v732 = vlaneseq
        %v733 = vshrl.u32 %v732, 7
        %v734 = vsub.s32 1, %v733
        %v735 = vrot.slane %v726, %v734
        %v738 = vmul.f32 %v723, %v731
        %v739 = vmul.f32 %v721, %v735
        %v740 = vmul.f32 %v724, %v731
        %v741 = vmul.f32 %v722, %v735
        %s742 = scalar_lea.vmem %s2, 40
        %v743 = vld [vmem:[%s742] sm:$0xf]
        %v744 = vld [vmem:[%s742 + $0x4] sm:$0xf]
        %v745 = vld [vmem:[%s742 + $0x8] sm:$0xf]
        %v746 = vld [vmem:[%s742 + $0xc] sm:$0xf]
        %v747 = vld [vmem:[%s742 + $0x10] sm:$0xf]
        %v748 = vpack.c.bf16 %v740, %v738
        %v749 = vpack.c.bf16 %v741, %v739
        %v755 = vunpack.c.l.b16 %v743
        %v756 = vunpack.c.l.b16 %v744
        %v757 = vunpack.c.l.b16 %v745
        %v758 = vunpack.c.l.b16 %v746
        %v759 = vunpack.c.l.b16 %v747
        %v760 = vpack.c.b16 %v756, %v755
        %v761 = vpack.c.b16 %v758, %v757
        %v762 = vpack.c.b16 %v759, %v759
        %v764 = vsel %vm545, %v760, 0
        %v767 = vsel %vm545, %v761, 0
        %v770 = vsel %vm545, %v762, 0
        %v773 = vsel %vm555, %v748, 0
        %v776 = vsel %vm555, %v749, 0
        %778 = vmatprep.subr.bf16.mxu0 %v776
        %779 = vmatpush1.bf16.msra.mxu0 %v773
        %780 = vmatprep.subr.bf16.mxu0 0
        %781 = vmatpush1.bf16.msra.mxu0 0
        %782 = vmatprep.subr.bf16.mxu0 0
        %783 = vmatpush1.bf16.msra.mxu0 0
        %784 = vmatprep.subr.bf16.mxu0 0
        %785 = vmatpush1.bf16.msra.mxu0 0
        %786 = vmatprep.subr.bf16.mxu0 0
        %787 = vmatpush1.bf16.msra.mxu0 0
        %788 = vmatprep.subr.bf16.mxu0 0
        %789 = vmatpush1.bf16.msra.mxu0 0
        %790 = vmatprep.subr.bf16.mxu0 0
        %791 = vmatpush1.bf16.msra.mxu0 0
        %792 = vmatprep.subr.bf16.mxu0 0
        %793 = vmatpush1.bf16.msra.mxu0 0
        %794 = vmatprep.subr.bf16.mxu0 0
        %795 = vmatpush1.bf16.msra.mxu0 0
        %796 = vmatprep.subr.bf16.mxu0 0
        %797 = vmatpush1.bf16.msra.mxu0 0
        %798 = vmatprep.subr.bf16.mxu0 0
        %799 = vmatpush1.bf16.msra.mxu0 0
        %800 = vmatprep.subr.bf16.mxu0 0
        %801 = vmatpush1.bf16.msra.mxu0 0
        %802 = vmatprep.subr.bf16.mxu0 0
        %803 = vmatpush1.bf16.msra.mxu0 0
        %804 = vmatprep.subr.bf16.mxu0 0
        %805 = vmatpush1.bf16.msra.mxu0 0
        %806 = vmatprep.subr.bf16.mxu0 0
        %807 = vmatpush1.bf16.msra.mxu0 0
        %808 = vmatprep.subr.bf16.mxu0 0
        %809 = vmatpush1.bf16.msra.mxu0 0
        %810 = vmatprep.mubr.bf16.mxu0 0
        %811 = vmatmul.mubr.bf16.gmra.mrb[0].mxu0 %v764
        %v812 = vpop.f32.mrb[0].mxu0
        %v813 = vadd.f32 0.0, %v812
        %v814 = vpop.f32.mrb[0].mxu0
        %v815 = vadd.f32 0.0, %v814
        %v816 = vpop.f32.mrb[0].mxu0
        %v817 = vadd.f32 0.0, %v816
        %v818 = vpop.f32.mrb[0].mxu0
        %v819 = vadd.f32 0.0, %v818
        %820 = vmatprep.mubr.bf16.mxu0 0
        %821 = vmatmul.mubr.bf16.gmra.mrb[0].mxu0 %v767
        %v822 = vpop.f32.mrb[0].mxu0
        %v823 = vadd.f32 0.0, %v822
        %v824 = vpop.f32.mrb[0].mxu0
        %v825 = vadd.f32 0.0, %v824
        %v826 = vpop.f32.mrb[0].mxu0
        %v827 = vadd.f32 0.0, %v826
        %v828 = vpop.f32.mrb[0].mxu0
        %v829 = vadd.f32 0.0, %v828
        %830 = vmatprep.mubr.bf16.mxu0 0
        %831 = vmatmul.mubr.bf16.gmra.mrb[0].mxu0 %v770
        %v832 = vpop.f32.mrb[0].mxu0
        %v833 = vadd.f32 0.0, %v832
        %v834 = vpop.f32.mrb[0].mxu0
        %v835 = vadd.f32 0.0, %v834
        %v836 = vpop.f32.mrb[0].mxu0
        %v837 = vpop.f32.mrb[0].mxu0
        %838 = vdwg.mxu0
        %v839 = vadd.f32 %v686, %v813
        %v840 = vadd.f32 %v688, %v815
        %v841 = vadd.f32 %v690, %v817
        %v842 = vadd.f32 %v692, %v819
        %v843 = vadd.f32 %v696, %v823
        %v844 = vadd.f32 %v698, %v825
        %v845 = vadd.f32 %v700, %v827
        %v846 = vadd.f32 %v702, %v829
        %v847 = vadd.f32 %v706, %v833
        %v848 = vadd.f32 %v708, %v835
        %849 = vrot.lane.b32.xlu0 %v452, 1
        %v850 = vpop.permute.xlu0 %849
        %851 = vrot.lane.b32.xlu0 %v454, 1
        %v852 = vpop.permute.xlu0 %851
        %853 = vrot.lane.b32.xlu0 %v453, 1
        %v854 = vpop.permute.xlu0 %853
        %855 = vrot.lane.b32.xlu0 %v455, 1
        %v856 = vpop.permute.xlu0 %855
        %vm857 = vcmp.lt.s32.totalorder %v465, 1
        %v858 = vsel %vm857, %v850, %v854
        %v859 = vsel %vm857, %v852, %v856
        %v860 = vsel %vm857, %v854, %v850
        %v861 = vsel %vm857, %v856, %v852
        %s862 = scalar_lea.vmem %s1, 6
        %v863 = vld [vmem:[%s862] sm:$0x3]
        %v865 = vlaneseq
        %v866 = vshrl.u32 %v865, 7
        %v867 = vsub.s32 0, %v866
        %v868 = vrot.slane %v863, %v867
        %v869 = vlaneseq
        %v870 = vshrl.u32 %v869, 7
        %v871 = vsub.s32 1, %v870
        %v872 = vrot.slane %v863, %v871
        %v875 = vmul.f32 %v860, %v868
        %v876 = vmul.f32 %v858, %v872
        %v877 = vmul.f32 %v861, %v868
        %v878 = vmul.f32 %v859, %v872
        %s879 = scalar_lea.vmem %s2, 60
        %v880 = vld [vmem:[%s879] sm:$0xf]
        %v881 = vld [vmem:[%s879 + $0x4] sm:$0xf]
        %v882 = vld [vmem:[%s879 + $0x8] sm:$0xf]
        %v883 = vld [vmem:[%s879 + $0xc] sm:$0xf]
        %v884 = vld [vmem:[%s879 + $0x10] sm:$0xf]
        %v885 = vpack.c.bf16 %v877, %v875
        %v886 = vpack.c.bf16 %v878, %v876
        %v892 = vunpack.c.l.b16 %v880
        %v893 = vunpack.c.l.b16 %v881
        %v894 = vunpack.c.l.b16 %v882
        %v895 = vunpack.c.l.b16 %v883
        %v896 = vunpack.c.l.b16 %v884
        %v897 = vpack.c.b16 %v893, %v892
        %v898 = vpack.c.b16 %v895, %v894
        %v899 = vpack.c.b16 %v896, %v896
        %v901 = vsel %vm545, %v897, 0
        %v904 = vsel %vm545, %v898, 0
        %v907 = vsel %vm545, %v899, 0
        %v910 = vsel %vm555, %v885, 0
        %v913 = vsel %vm555, %v886, 0
        %915 = vmatprep.subr.bf16.mxu0 %v913
        %916 = vmatpush1.bf16.msra.mxu0 %v910
        %917 = vmatprep.subr.bf16.mxu0 0
        %918 = vmatpush1.bf16.msra.mxu0 0
        %919 = vmatprep.subr.bf16.mxu0 0
        %920 = vmatpush1.bf16.msra.mxu0 0
        %921 = vmatprep.subr.bf16.mxu0 0
        %922 = vmatpush1.bf16.msra.mxu0 0
        %923 = vmatprep.subr.bf16.mxu0 0
        %924 = vmatpush1.bf16.msra.mxu0 0
        %925 = vmatprep.subr.bf16.mxu0 0
        %926 = vmatpush1.bf16.msra.mxu0 0
        %927 = vmatprep.subr.bf16.mxu0 0
        %928 = vmatpush1.bf16.msra.mxu0 0
        %929 = vmatprep.subr.bf16.mxu0 0
        %930 = vmatpush1.bf16.msra.mxu0 0
        %931 = vmatprep.subr.bf16.mxu0 0
        %932 = vmatpush1.bf16.msra.mxu0 0
        %933 = vmatprep.subr.bf16.mxu0 0
        %934 = vmatpush1.bf16.msra.mxu0 0
        %935 = vmatprep.subr.bf16.mxu0 0
        %936 = vmatpush1.bf16.msra.mxu0 0
        %937 = vmatprep.subr.bf16.mxu0 0
        %938 = vmatpush1.bf16.msra.mxu0 0
        %939 = vmatprep.subr.bf16.mxu0 0
        %940 = vmatpush1.bf16.msra.mxu0 0
        %941 = vmatprep.subr.bf16.mxu0 0
        %942 = vmatpush1.bf16.msra.mxu0 0
        %943 = vmatprep.subr.bf16.mxu0 0
        %944 = vmatpush1.bf16.msra.mxu0 0
        %945 = vmatprep.subr.bf16.mxu0 0
        %946 = vmatpush1.bf16.msra.mxu0 0
        %947 = vmatprep.mubr.bf16.mxu0 0
        %948 = vmatmul.mubr.bf16.gmra.mrb[0].mxu0 %v901
        %v949 = vpop.f32.mrb[0].mxu0
        %v950 = vadd.f32 0.0, %v949
        %v951 = vpop.f32.mrb[0].mxu0
        %v952 = vadd.f32 0.0, %v951
        %v953 = vpop.f32.mrb[0].mxu0
        %v954 = vadd.f32 0.0, %v953
        %v955 = vpop.f32.mrb[0].mxu0
        %v956 = vadd.f32 0.0, %v955
        %957 = vmatprep.mubr.bf16.mxu0 0
        %958 = vmatmul.mubr.bf16.gmra.mrb[0].mxu0 %v904
        %v959 = vpop.f32.mrb[0].mxu0
        %v960 = vadd.f32 0.0, %v959
        %v961 = vpop.f32.mrb[0].mxu0
        %v962 = vadd.f32 0.0, %v961
        %v963 = vpop.f32.mrb[0].mxu0
        %v964 = vadd.f32 0.0, %v963
        %v965 = vpop.f32.mrb[0].mxu0
        %v966 = vadd.f32 0.0, %v965
        %967 = vmatprep.mubr.bf16.mxu0 0
        %968 = vmatmul.mubr.bf16.gmra.mrb[0].mxu0 %v907
        %v969 = vpop.f32.mrb[0].mxu0
        %v970 = vadd.f32 0.0, %v969
        %v971 = vpop.f32.mrb[0].mxu0
        %v972 = vadd.f32 0.0, %v971
        %v973 = vpop.f32.mrb[0].mxu0
        %v974 = vpop.f32.mrb[0].mxu0
        %975 = vdwg.mxu0
        %v976 = vadd.f32 %v839, %v950
        %v977 = vadd.f32 %v840, %v952
        %v978 = vadd.f32 %v841, %v954
        %v979 = vadd.f32 %v842, %v956
        %v980 = vadd.f32 %v843, %v960
        %v981 = vadd.f32 %v844, %v962
        %v982 = vadd.f32 %v845, %v964
        %v983 = vadd.f32 %v846, %v966
        %v984 = vadd.f32 %v847, %v970
        %v985 = vadd.f32 %v848, %v972
        %s986 = scalar_lea.vmem %s2, 80
        %v987 = vld [vmem:[%s986] sm:$0xf]
        %v988 = vld [vmem:[%s986 + $0x4] sm:$0xf]
        %v989 = vld [vmem:[%s986 + $0x8] sm:$0xf]
        %v990 = vld [vmem:[%s986 + $0xc] sm:$0xf]
        %v991 = vld [vmem:[%s986 + $0x10] sm:$0xf]
        %v992 = vpack.c.bf16 %v454, %v452
        %v993 = vpack.c.bf16 %v455, %v453
        %v999 = vunpack.c.l.b16 %v987
        %v1000 = vunpack.c.l.b16 %v988
        %v1001 = vunpack.c.l.b16 %v989
        %v1002 = vunpack.c.l.b16 %v990
        %v1003 = vunpack.c.l.b16 %v991
        %v1004 = vpack.c.b16 %v1000, %v999
        %v1005 = vpack.c.b16 %v1002, %v1001
        %v1006 = vpack.c.b16 %v1003, %v1003
        %v1008 = vsel %vm545, %v1004, 0
        %v1011 = vsel %vm545, %v1005, 0
        %v1014 = vsel %vm545, %v1006, 0
        %v1017 = vsel %vm555, %v992, 0
        %v1020 = vsel %vm555, %v993, 0
        %1022 = vmatprep.subr.bf16.mxu0 %v1020
        %1023 = vmatpush1.bf16.msra.mxu0 %v1017
        %1024 = vmatprep.subr.bf16.mxu0 0
        %1025 = vmatpush1.bf16.msra.mxu0 0
        %1026 = vmatprep.subr.bf16.mxu0 0
        %1027 = vmatpush1.bf16.msra.mxu0 0
        %1028 = vmatprep.subr.bf16.mxu0 0
        %1029 = vmatpush1.bf16.msra.mxu0 0
        %1030 = vmatprep.subr.bf16.mxu0 0
        %1031 = vmatpush1.bf16.msra.mxu0 0
        %1032 = vmatprep.subr.bf16.mxu0 0
        %1033 = vmatpush1.bf16.msra.mxu0 0
        %1034 = vmatprep.subr.bf16.mxu0 0
        %1035 = vmatpush1.bf16.msra.mxu0 0
        %1036 = vmatprep.subr.bf16.mxu0 0
        %1037 = vmatpush1.bf16.msra.mxu0 0
        %1038 = vmatprep.subr.bf16.mxu0 0
        %1039 = vmatpush1.bf16.msra.mxu0 0
        %1040 = vmatprep.subr.bf16.mxu0 0
        %1041 = vmatpush1.bf16.msra.mxu0 0
        %1042 = vmatprep.subr.bf16.mxu0 0
        %1043 = vmatpush1.bf16.msra.mxu0 0
        %1044 = vmatprep.subr.bf16.mxu0 0
        %1045 = vmatpush1.bf16.msra.mxu0 0
        %1046 = vmatprep.subr.bf16.mxu0 0
        %1047 = vmatpush1.bf16.msra.mxu0 0
        %1048 = vmatprep.subr.bf16.mxu0 0
        %1049 = vmatpush1.bf16.msra.mxu0 0
        %1050 = vmatprep.subr.bf16.mxu0 0
        %1051 = vmatpush1.bf16.msra.mxu0 0
        %1052 = vmatprep.subr.bf16.mxu0 0
        %1053 = vmatpush1.bf16.msra.mxu0 0
        %1054 = vmatprep.mubr.bf16.mxu0 0
        %1055 = vmatmul.mubr.bf16.gmra.mrb[0].mxu0 %v1008
        %v1056 = vpop.f32.mrb[0].mxu0
        %v1057 = vadd.f32 0.0, %v1056
        %v1058 = vpop.f32.mrb[0].mxu0
        %v1059 = vadd.f32 0.0, %v1058
        %v1060 = vpop.f32.mrb[0].mxu0
        %v1061 = vadd.f32 0.0, %v1060
        %v1062 = vpop.f32.mrb[0].mxu0
        %v1063 = vadd.f32 0.0, %v1062
        %1064 = vmatprep.mubr.bf16.mxu0 0
        %1065 = vmatmul.mubr.bf16.gmra.mrb[0].mxu0 %v1011
        %v1066 = vpop.f32.mrb[0].mxu0
        %v1067 = vadd.f32 0.0, %v1066
        %v1068 = vpop.f32.mrb[0].mxu0
        %v1069 = vadd.f32 0.0, %v1068
        %v1070 = vpop.f32.mrb[0].mxu0
        %v1071 = vadd.f32 0.0, %v1070
        %v1072 = vpop.f32.mrb[0].mxu0
        %v1073 = vadd.f32 0.0, %v1072
        %1074 = vmatprep.mubr.bf16.mxu0 0
        %1075 = vmatmul.mubr.bf16.gmra.mrb[0].mxu0 %v1014
        %v1076 = vpop.f32.mrb[0].mxu0
        %v1077 = vadd.f32 0.0, %v1076
        %v1078 = vpop.f32.mrb[0].mxu0
        %v1079 = vadd.f32 0.0, %v1078
        %v1080 = vpop.f32.mrb[0].mxu0
        %v1081 = vpop.f32.mrb[0].mxu0
        %1082 = vdwg.mxu0
        %v1083 = vadd.f32 %v976, %v1057
        %v1084 = vadd.f32 %v977, %v1059
        %v1085 = vadd.f32 %v978, %v1061
        %v1086 = vadd.f32 %v979, %v1063
        %v1087 = vadd.f32 %v980, %v1067
        %v1088 = vadd.f32 %v981, %v1069
        %v1089 = vadd.f32 %v982, %v1071
        %v1090 = vadd.f32 %v983, %v1073
        %v1091 = vadd.f32 %v984, %v1077
        %v1092 = vadd.f32 %v985, %v1079
        %1093 = vrot.lane.b32.xlu0 %v452, 127
        %v1094 = vpop.permute.xlu0 %1093
        %1095 = vrot.lane.b32.xlu0 %v454, 127
        %v1096 = vpop.permute.xlu0 %1095
        %1097 = vrot.lane.b32.xlu0 %v453, 127
        %v1098 = vpop.permute.xlu0 %1097
        %1099 = vrot.lane.b32.xlu0 %v455, 127
        %v1100 = vpop.permute.xlu0 %1099
        %vm1101 = vcmp.lt.s32.totalorder %v465, 127
        %v1102 = vsel %vm1101, %v1094, %v1098
        %v1103 = vsel %vm1101, %v1096, %v1100
        %v1104 = vsel %vm1101, %v1098, %v1094
        %v1105 = vsel %vm1101, %v1100, %v1096
        %s1106 = scalar_lea.vmem %s1, 10
        %v1107 = vld [vmem:[%s1106] sm:$0x3]
        %v1109 = vlaneseq
        %v1110 = vshrl.u32 %v1109, 7
        %v1111 = vsub.s32 0, %v1110
        %v1112 = vrot.slane %v1107, %v1111
        %v1113 = vlaneseq
        %v1114 = vshrl.u32 %v1113, 7
        %v1115 = vsub.s32 1, %v1114
        %v1116 = vrot.slane %v1107, %v1115
        %v1119 = vmul.f32 %v1102, %v1112
        %v1120 = vmul.f32 %v1104, %v1116
        %v1121 = vmul.f32 %v1103, %v1112
        %v1122 = vmul.f32 %v1105, %v1116
        %s1123 = scalar_lea.vmem %s2, 100
        %v1124 = vld [vmem:[%s1123] sm:$0xf]
        %v1125 = vld [vmem:[%s1123 + $0x4] sm:$0xf]
        %v1126 = vld [vmem:[%s1123 + $0x8] sm:$0xf]
        %v1127 = vld [vmem:[%s1123 + $0xc] sm:$0xf]
        %v1128 = vld [vmem:[%s1123 + $0x10] sm:$0xf]
        %v1129 = vpack.c.bf16 %v1121, %v1119
        %v1130 = vpack.c.bf16 %v1122, %v1120
        %v1136 = vunpack.c.l.b16 %v1124
        %v1137 = vunpack.c.l.b16 %v1125
        %v1138 = vunpack.c.l.b16 %v1126
        %v1139 = vunpack.c.l.b16 %v1127
        %v1140 = vunpack.c.l.b16 %v1128
        %v1141 = vpack.c.b16 %v1137, %v1136
        %v1142 = vpack.c.b16 %v1139, %v1138
        %v1143 = vpack.c.b16 %v1140, %v1140
        %v1145 = vsel %vm545, %v1141, 0
        %v1148 = vsel %vm545, %v1142, 0
        %v1151 = vsel %vm545, %v1143, 0
        %v1154 = vsel %vm555, %v1129, 0
        %v1157 = vsel %vm555, %v1130, 0
        %1159 = vmatprep.subr.bf16.mxu0 %v1157
        %1160 = vmatpush1.bf16.msra.mxu0 %v1154
        %1161 = vmatprep.subr.bf16.mxu0 0
        %1162 = vmatpush1.bf16.msra.mxu0 0
        %1163 = vmatprep.subr.bf16.mxu0 0
        %1164 = vmatpush1.bf16.msra.mxu0 0
        %1165 = vmatprep.subr.bf16.mxu0 0
        %1166 = vmatpush1.bf16.msra.mxu0 0
        %1167 = vmatprep.subr.bf16.mxu0 0
        %1168 = vmatpush1.bf16.msra.mxu0 0
        %1169 = vmatprep.subr.bf16.mxu0 0
        %1170 = vmatpush1.bf16.msra.mxu0 0
        %1171 = vmatprep.subr.bf16.mxu0 0
        %1172 = vmatpush1.bf16.msra.mxu0 0
        %1173 = vmatprep.subr.bf16.mxu0 0
        %1174 = vmatpush1.bf16.msra.mxu0 0
        %1175 = vmatprep.subr.bf16.mxu0 0
        %1176 = vmatpush1.bf16.msra.mxu0 0
        %1177 = vmatprep.subr.bf16.mxu0 0
        %1178 = vmatpush1.bf16.msra.mxu0 0
        %1179 = vmatprep.subr.bf16.mxu0 0
        %1180 = vmatpush1.bf16.msra.mxu0 0
        %1181 = vmatprep.subr.bf16.mxu0 0
        %1182 = vmatpush1.bf16.msra.mxu0 0
        %1183 = vmatprep.subr.bf16.mxu0 0
        %1184 = vmatpush1.bf16.msra.mxu0 0
        %1185 = vmatprep.subr.bf16.mxu0 0
        %1186 = vmatpush1.bf16.msra.mxu0 0
        %1187 = vmatprep.subr.bf16.mxu0 0
        %1188 = vmatpush1.bf16.msra.mxu0 0
        %1189 = vmatprep.subr.bf16.mxu0 0
        %1190 = vmatpush1.bf16.msra.mxu0 0
        %1191 = vmatprep.mubr.bf16.mxu0 0
        %1192 = vmatmul.mubr.bf16.gmra.mrb[0].mxu0 %v1145
        %v1193 = vpop.f32.mrb[0].mxu0
        %v1194 = vadd.f32 0.0, %v1193
        %v1195 = vpop.f32.mrb[0].mxu0
        %v1196 = vadd.f32 0.0, %v1195
        %v1197 = vpop.f32.mrb[0].mxu0
        %v1198 = vadd.f32 0.0, %v1197
        %v1199 = vpop.f32.mrb[0].mxu0
        %v1200 = vadd.f32 0.0, %v1199
        %1201 = vmatprep.mubr.bf16.mxu0 0
        %1202 = vmatmul.mubr.bf16.gmra.mrb[0].mxu0 %v1148
        %v1203 = vpop.f32.mrb[0].mxu0
        %v1204 = vadd.f32 0.0, %v1203
        %v1205 = vpop.f32.mrb[0].mxu0
        %v1206 = vadd.f32 0.0, %v1205
        %v1207 = vpop.f32.mrb[0].mxu0
        %v1208 = vadd.f32 0.0, %v1207
        %v1209 = vpop.f32.mrb[0].mxu0
        %v1210 = vadd.f32 0.0, %v1209
        %1211 = vmatprep.mubr.bf16.mxu0 0
        %1212 = vmatmul.mubr.bf16.gmra.mrb[0].mxu0 %v1151
        %v1213 = vpop.f32.mrb[0].mxu0
        %v1214 = vadd.f32 0.0, %v1213
        %v1215 = vpop.f32.mrb[0].mxu0
        %v1216 = vadd.f32 0.0, %v1215
        %v1217 = vpop.f32.mrb[0].mxu0
        %v1218 = vpop.f32.mrb[0].mxu0
        %1219 = vdwg.mxu0
        %v1220 = vadd.f32 %v1083, %v1194
        %v1221 = vadd.f32 %v1084, %v1196
        %v1222 = vadd.f32 %v1085, %v1198
        %v1223 = vadd.f32 %v1086, %v1200
        %v1224 = vadd.f32 %v1087, %v1204
        %v1225 = vadd.f32 %v1088, %v1206
        %v1226 = vadd.f32 %v1089, %v1208
        %v1227 = vadd.f32 %v1090, %v1210
        %v1228 = vadd.f32 %v1091, %v1214
        %v1229 = vadd.f32 %v1092, %v1216
        %1230 = vrot.lane.b32.xlu0 %v452, 113
        %v1231 = vpop.permute.xlu0 %1230
        %1232 = vrot.lane.b32.xlu0 %v454, 113
        %v1233 = vpop.permute.xlu0 %1232
        %1234 = vrot.lane.b32.xlu0 %v453, 113
        %v1235 = vpop.permute.xlu0 %1234
        %1236 = vrot.lane.b32.xlu0 %v455, 113
        %v1237 = vpop.permute.xlu0 %1236
        %vm1238 = vcmp.lt.s32.totalorder %v465, 113
        %v1239 = vsel %vm1238, %v1231, %v1235
        %v1240 = vsel %vm1238, %v1233, %v1237
        %v1241 = vsel %vm1238, %v1235, %v1231
        %v1242 = vsel %vm1238, %v1237, %v1233
        %s1243 = scalar_lea.vmem %s1, 12
        %v1244 = vld [vmem:[%s1243] sm:$0x3]
        %v1246 = vlaneseq
        %v1247 = vshrl.u32 %v1246, 7
        %v1248 = vsub.s32 0, %v1247
        %v1249 = vrot.slane %v1244, %v1248
        %v1250 = vlaneseq
        %v1251 = vshrl.u32 %v1250, 7
        %v1252 = vsub.s32 1, %v1251
        %v1253 = vrot.slane %v1244, %v1252
        %v1256 = vmul.f32 %v1239, %v1249
        %v1257 = vmul.f32 %v1241, %v1253
        %v1258 = vmul.f32 %v1240, %v1249
        %v1259 = vmul.f32 %v1242, %v1253
        %s1260 = scalar_lea.vmem %s2, 120
        %v1261 = vld [vmem:[%s1260] sm:$0xf]
        %v1262 = vld [vmem:[%s1260 + $0x4] sm:$0xf]
        %v1263 = vld [vmem:[%s1260 + $0x8] sm:$0xf]
        %v1264 = vld [vmem:[%s1260 + $0xc] sm:$0xf]
        %v1265 = vld [vmem:[%s1260 + $0x10] sm:$0xf]
        %v1266 = vpack.c.bf16 %v1258, %v1256
        %v1267 = vpack.c.bf16 %v1259, %v1257
        %v1273 = vunpack.c.l.b16 %v1261
        %v1274 = vunpack.c.l.b16 %v1262
        %v1275 = vunpack.c.l.b16 %v1263
        %v1276 = vunpack.c.l.b16 %v1264
        %v1277 = vunpack.c.l.b16 %v1265
        %v1278 = vpack.c.b16 %v1274, %v1273
        %v1279 = vpack.c.b16 %v1276, %v1275
        %v1280 = vpack.c.b16 %v1277, %v1277
        %v1282 = vsel %vm545, %v1278, 0
        %v1285 = vsel %vm545, %v1279, 0
        %v1288 = vsel %vm545, %v1280, 0
        %v1291 = vsel %vm555, %v1266, 0
        %v1294 = vsel %vm555, %v1267, 0
        %1296 = vmatprep.subr.bf16.mxu0 %v1294
        %1297 = vmatpush1.bf16.msra.mxu0 %v1291
        %1298 = vmatprep.subr.bf16.mxu0 0
        %1299 = vmatpush1.bf16.msra.mxu0 0
        %1300 = vmatprep.subr.bf16.mxu0 0
        %1301 = vmatpush1.bf16.msra.mxu0 0
        %1302 = vmatprep.subr.bf16.mxu0 0
        %1303 = vmatpush1.bf16.msra.mxu0 0
        %1304 = vmatprep.subr.bf16.mxu0 0
        %1305 = vmatpush1.bf16.msra.mxu0 0
        %1306 = vmatprep.subr.bf16.mxu0 0
        %1307 = vmatpush1.bf16.msra.mxu0 0
        %1308 = vmatprep.subr.bf16.mxu0 0
        %1309 = vmatpush1.bf16.msra.mxu0 0
        %1310 = vmatprep.subr.bf16.mxu0 0
        %1311 = vmatpush1.bf16.msra.mxu0 0
        %1312 = vmatprep.subr.bf16.mxu0 0
        %1313 = vmatpush1.bf16.msra.mxu0 0
        %1314 = vmatprep.subr.bf16.mxu0 0
        %1315 = vmatpush1.bf16.msra.mxu0 0
        %1316 = vmatprep.subr.bf16.mxu0 0
        %1317 = vmatpush1.bf16.msra.mxu0 0
        %1318 = vmatprep.subr.bf16.mxu0 0
        %1319 = vmatpush1.bf16.msra.mxu0 0
        %1320 = vmatprep.subr.bf16.mxu0 0
        %1321 = vmatpush1.bf16.msra.mxu0 0
        %1322 = vmatprep.subr.bf16.mxu0 0
        %1323 = vmatpush1.bf16.msra.mxu0 0
        %1324 = vmatprep.subr.bf16.mxu0 0
        %1325 = vmatpush1.bf16.msra.mxu0 0
        %1326 = vmatprep.subr.bf16.mxu0 0
        %1327 = vmatpush1.bf16.msra.mxu0 0
        %1328 = vmatprep.mubr.bf16.mxu0 0
        %1329 = vmatmul.mubr.bf16.gmra.mrb[0].mxu0 %v1282
        %v1330 = vpop.f32.mrb[0].mxu0
        %v1331 = vadd.f32 0.0, %v1330
        %v1332 = vpop.f32.mrb[0].mxu0
        %v1333 = vadd.f32 0.0, %v1332
        %v1334 = vpop.f32.mrb[0].mxu0
        %v1335 = vadd.f32 0.0, %v1334
        %v1336 = vpop.f32.mrb[0].mxu0
        %v1337 = vadd.f32 0.0, %v1336
        %1338 = vmatprep.mubr.bf16.mxu0 0
        %1339 = vmatmul.mubr.bf16.gmra.mrb[0].mxu0 %v1285
        %v1340 = vpop.f32.mrb[0].mxu0
        %v1341 = vadd.f32 0.0, %v1340
        %v1342 = vpop.f32.mrb[0].mxu0
        %v1343 = vadd.f32 0.0, %v1342
        %v1344 = vpop.f32.mrb[0].mxu0
        %v1345 = vadd.f32 0.0, %v1344
        %v1346 = vpop.f32.mrb[0].mxu0
        %v1347 = vadd.f32 0.0, %v1346
        %1348 = vmatprep.mubr.bf16.mxu0 0
        %1349 = vmatmul.mubr.bf16.gmra.mrb[0].mxu0 %v1288
        %v1350 = vpop.f32.mrb[0].mxu0
        %v1351 = vadd.f32 0.0, %v1350
        %v1352 = vpop.f32.mrb[0].mxu0
        %v1353 = vadd.f32 0.0, %v1352
        %v1354 = vpop.f32.mrb[0].mxu0
        %v1355 = vpop.f32.mrb[0].mxu0
        %1356 = vdwg.mxu0
        %v1357 = vadd.f32 %v1220, %v1331
        %v1358 = vadd.f32 %v1221, %v1333
        %v1359 = vadd.f32 %v1222, %v1335
        %v1360 = vadd.f32 %v1223, %v1337
        %v1361 = vadd.f32 %v1224, %v1341
        %v1362 = vadd.f32 %v1225, %v1343
        %v1363 = vadd.f32 %v1226, %v1345
        %v1364 = vadd.f32 %v1227, %v1347
        %v1365 = vadd.f32 %v1228, %v1351
        %v1366 = vadd.f32 %v1229, %v1353
        %1367 = vrot.lane.b32.xlu0 %v452, 112
        %v1368 = vpop.permute.xlu0 %1367
        %1369 = vrot.lane.b32.xlu0 %v454, 112
        %v1370 = vpop.permute.xlu0 %1369
        %1371 = vrot.lane.b32.xlu0 %v453, 112
        %v1372 = vpop.permute.xlu0 %1371
        %1373 = vrot.lane.b32.xlu0 %v455, 112
        %v1374 = vpop.permute.xlu0 %1373
        %vm1375 = vcmp.lt.s32.totalorder %v465, 112
        %v1376 = vsel %vm1375, %v1368, %v1372
        %v1377 = vsel %vm1375, %v1370, %v1374
        %v1378 = vsel %vm1375, %v1372, %v1368
        %v1379 = vsel %vm1375, %v1374, %v1370
        %s1380 = scalar_lea.vmem %s1, 14
        %v1381 = vld [vmem:[%s1380] sm:$0x3]
        %v1383 = vlaneseq
        %v1384 = vshrl.u32 %v1383, 7
        %v1385 = vsub.s32 0, %v1384
        %v1386 = vrot.slane %v1381, %v1385
        %v1387 = vlaneseq
        %v1388 = vshrl.u32 %v1387, 7
        %v1389 = vsub.s32 1, %v1388
        %v1390 = vrot.slane %v1381, %v1389
        %v1393 = vmul.f32 %v1376, %v1386
        %v1394 = vmul.f32 %v1378, %v1390
        %v1395 = vmul.f32 %v1377, %v1386
        %v1396 = vmul.f32 %v1379, %v1390
        %s1397 = scalar_lea.vmem %s2, 140
        %v1398 = vld [vmem:[%s1397] sm:$0xf]
        %v1399 = vld [vmem:[%s1397 + $0x4] sm:$0xf]
        %v1400 = vld [vmem:[%s1397 + $0x8] sm:$0xf]
        %v1401 = vld [vmem:[%s1397 + $0xc] sm:$0xf]
        %v1402 = vld [vmem:[%s1397 + $0x10] sm:$0xf]
        %v1403 = vpack.c.bf16 %v1395, %v1393
        %v1404 = vpack.c.bf16 %v1396, %v1394
        %v1410 = vunpack.c.l.b16 %v1398
        %v1411 = vunpack.c.l.b16 %v1399
        %v1412 = vunpack.c.l.b16 %v1400
        %v1413 = vunpack.c.l.b16 %v1401
        %v1414 = vunpack.c.l.b16 %v1402
        %v1415 = vpack.c.b16 %v1411, %v1410
        %v1416 = vpack.c.b16 %v1413, %v1412
        %v1417 = vpack.c.b16 %v1414, %v1414
        %v1419 = vsel %vm545, %v1415, 0
        %v1422 = vsel %vm545, %v1416, 0
        %v1425 = vsel %vm545, %v1417, 0
        %v1428 = vsel %vm555, %v1403, 0
        %v1431 = vsel %vm555, %v1404, 0
        %1433 = vmatprep.subr.bf16.mxu0 %v1431
        %1434 = vmatpush1.bf16.msra.mxu0 %v1428
        %1435 = vmatprep.subr.bf16.mxu0 0
        %1436 = vmatpush1.bf16.msra.mxu0 0
        %1437 = vmatprep.subr.bf16.mxu0 0
        %1438 = vmatpush1.bf16.msra.mxu0 0
        %1439 = vmatprep.subr.bf16.mxu0 0
        %1440 = vmatpush1.bf16.msra.mxu0 0
        %1441 = vmatprep.subr.bf16.mxu0 0
        %1442 = vmatpush1.bf16.msra.mxu0 0
        %1443 = vmatprep.subr.bf16.mxu0 0
        %1444 = vmatpush1.bf16.msra.mxu0 0
        %1445 = vmatprep.subr.bf16.mxu0 0
        %1446 = vmatpush1.bf16.msra.mxu0 0
        %1447 = vmatprep.subr.bf16.mxu0 0
        %1448 = vmatpush1.bf16.msra.mxu0 0
        %1449 = vmatprep.subr.bf16.mxu0 0
        %1450 = vmatpush1.bf16.msra.mxu0 0
        %1451 = vmatprep.subr.bf16.mxu0 0
        %1452 = vmatpush1.bf16.msra.mxu0 0
        %1453 = vmatprep.subr.bf16.mxu0 0
        %1454 = vmatpush1.bf16.msra.mxu0 0
        %1455 = vmatprep.subr.bf16.mxu0 0
        %1456 = vmatpush1.bf16.msra.mxu0 0
        %1457 = vmatprep.subr.bf16.mxu0 0
        %1458 = vmatpush1.bf16.msra.mxu0 0
        %1459 = vmatprep.subr.bf16.mxu0 0
        %1460 = vmatpush1.bf16.msra.mxu0 0
        %1461 = vmatprep.subr.bf16.mxu0 0
        %1462 = vmatpush1.bf16.msra.mxu0 0
        %1463 = vmatprep.subr.bf16.mxu0 0
        %1464 = vmatpush1.bf16.msra.mxu0 0
        %1465 = vmatprep.mubr.bf16.mxu0 0
        %1466 = vmatmul.mubr.bf16.gmra.mrb[0].mxu0 %v1419
        %v1467 = vpop.f32.mrb[0].mxu0
        %v1468 = vadd.f32 0.0, %v1467
        %v1469 = vpop.f32.mrb[0].mxu0
        %v1470 = vadd.f32 0.0, %v1469
        %v1471 = vpop.f32.mrb[0].mxu0
        %v1472 = vadd.f32 0.0, %v1471
        %v1473 = vpop.f32.mrb[0].mxu0
        %v1474 = vadd.f32 0.0, %v1473
        %1475 = vmatprep.mubr.bf16.mxu0 0
        %1476 = vmatmul.mubr.bf16.gmra.mrb[0].mxu0 %v1422
        %v1477 = vpop.f32.mrb[0].mxu0
        %v1478 = vadd.f32 0.0, %v1477
        %v1479 = vpop.f32.mrb[0].mxu0
        %v1480 = vadd.f32 0.0, %v1479
        %v1481 = vpop.f32.mrb[0].mxu0
        %v1482 = vadd.f32 0.0, %v1481
        %v1483 = vpop.f32.mrb[0].mxu0
        %v1484 = vadd.f32 0.0, %v1483
        %1485 = vmatprep.mubr.bf16.mxu0 0
        %1486 = vmatmul.mubr.bf16.gmra.mrb[0].mxu0 %v1425
        %v1487 = vpop.f32.mrb[0].mxu0
        %v1488 = vadd.f32 0.0, %v1487
        %v1489 = vpop.f32.mrb[0].mxu0
        %v1490 = vadd.f32 0.0, %v1489
        %v1491 = vpop.f32.mrb[0].mxu0
        %v1492 = vpop.f32.mrb[0].mxu0
        %1493 = vdwg.mxu0
        %v1494 = vadd.f32 %v1357, %v1468
        %v1495 = vadd.f32 %v1358, %v1470
        %v1496 = vadd.f32 %v1359, %v1472
        %v1497 = vadd.f32 %v1360, %v1474
        %v1498 = vadd.f32 %v1361, %v1478
        %v1499 = vadd.f32 %v1362, %v1480
        %v1500 = vadd.f32 %v1363, %v1482
        %v1501 = vadd.f32 %v1364, %v1484
        %v1502 = vadd.f32 %v1365, %v1488
        %v1503 = vadd.f32 %v1366, %v1490
        %1504 = vrot.lane.b32.xlu0 %v452, 111
        %v1505 = vpop.permute.xlu0 %1504
        %1506 = vrot.lane.b32.xlu0 %v454, 111
        %v1507 = vpop.permute.xlu0 %1506
        %1508 = vrot.lane.b32.xlu0 %v453, 111
        %v1509 = vpop.permute.xlu0 %1508
        %1510 = vrot.lane.b32.xlu0 %v455, 111
        %v1511 = vpop.permute.xlu0 %1510
        %vm1512 = vcmp.lt.s32.totalorder %v465, 111
        %v1513 = vsel %vm1512, %v1505, %v1509
        %v1514 = vsel %vm1512, %v1507, %v1511
        %v1515 = vsel %vm1512, %v1509, %v1505
        %v1516 = vsel %vm1512, %v1511, %v1507
        %s1517 = scalar_lea.vmem %s1, 16
        %v1518 = vld [vmem:[%s1517] sm:$0x3]
        %v1520 = vlaneseq
        %v1521 = vshrl.u32 %v1520, 7
        %v1522 = vsub.s32 0, %v1521
        %v1523 = vrot.slane %v1518, %v1522
        %v1524 = vlaneseq
        %v1525 = vshrl.u32 %v1524, 7
        %v1526 = vsub.s32 1, %v1525
        %v1527 = vrot.slane %v1518, %v1526
        %v1530 = vmul.f32 %v1513, %v1523
        %v1531 = vmul.f32 %v1515, %v1527
        %v1532 = vmul.f32 %v1514, %v1523
        %v1533 = vmul.f32 %v1516, %v1527
        %s1534 = scalar_lea.vmem %s2, 160
        %v1535 = vld [vmem:[%s1534] sm:$0xf]
        %v1536 = vld [vmem:[%s1534 + $0x4] sm:$0xf]
        %v1537 = vld [vmem:[%s1534 + $0x8] sm:$0xf]
        %v1538 = vld [vmem:[%s1534 + $0xc] sm:$0xf]
        %v1539 = vld [vmem:[%s1534 + $0x10] sm:$0xf]
        %v1540 = vpack.c.bf16 %v1532, %v1530
        %v1541 = vpack.c.bf16 %v1533, %v1531
        %v1547 = vunpack.c.l.b16 %v1535
        %v1548 = vunpack.c.l.b16 %v1536
        %v1549 = vunpack.c.l.b16 %v1537
        %v1550 = vunpack.c.l.b16 %v1538
        %v1551 = vunpack.c.l.b16 %v1539
        %v1552 = vpack.c.b16 %v1548, %v1547
        %v1553 = vpack.c.b16 %v1550, %v1549
        %v1554 = vpack.c.b16 %v1551, %v1551
        %v1556 = vsel %vm545, %v1552, 0
        %v1559 = vsel %vm545, %v1553, 0
        %v1562 = vsel %vm545, %v1554, 0
        %v1565 = vsel %vm555, %v1540, 0
        %v1568 = vsel %vm555, %v1541, 0
        %1570 = vmatprep.subr.bf16.mxu0 %v1568
        %1571 = vmatpush1.bf16.msra.mxu0 %v1565
        %1572 = vmatprep.subr.bf16.mxu0 0
        %1573 = vmatpush1.bf16.msra.mxu0 0
        %1574 = vmatprep.subr.bf16.mxu0 0
        %1575 = vmatpush1.bf16.msra.mxu0 0
        %1576 = vmatprep.subr.bf16.mxu0 0
        %1577 = vmatpush1.bf16.msra.mxu0 0
        %1578 = vmatprep.subr.bf16.mxu0 0
        %1579 = vmatpush1.bf16.msra.mxu0 0
        %1580 = vmatprep.subr.bf16.mxu0 0
        %1581 = vmatpush1.bf16.msra.mxu0 0
        %1582 = vmatprep.subr.bf16.mxu0 0
        %1583 = vmatpush1.bf16.msra.mxu0 0
        %1584 = vmatprep.subr.bf16.mxu0 0
        %1585 = vmatpush1.bf16.msra.mxu0 0
        %1586 = vmatprep.subr.bf16.mxu0 0
        %1587 = vmatpush1.bf16.msra.mxu0 0
        %1588 = vmatprep.subr.bf16.mxu0 0
        %1589 = vmatpush1.bf16.msra.mxu0 0
        %1590 = vmatprep.subr.bf16.mxu0 0
        %1591 = vmatpush1.bf16.msra.mxu0 0
        %1592 = vmatprep.subr.bf16.mxu0 0
        %1593 = vmatpush1.bf16.msra.mxu0 0
        %1594 = vmatprep.subr.bf16.mxu0 0
        %1595 = vmatpush1.bf16.msra.mxu0 0
        %1596 = vmatprep.subr.bf16.mxu0 0
        %1597 = vmatpush1.bf16.msra.mxu0 0
        %1598 = vmatprep.subr.bf16.mxu0 0
        %1599 = vmatpush1.bf16.msra.mxu0 0
        %1600 = vmatprep.subr.bf16.mxu0 0
        %1601 = vmatpush1.bf16.msra.mxu0 0
        %1602 = vmatprep.mubr.bf16.mxu0 0
        %1603 = vmatmul.mubr.bf16.gmra.mrb[0].mxu0 %v1556
        %v1604 = vpop.f32.mrb[0].mxu0
        %v1605 = vadd.f32 0.0, %v1604
        %v1606 = vpop.f32.mrb[0].mxu0
        %v1607 = vadd.f32 0.0, %v1606
        %v1608 = vpop.f32.mrb[0].mxu0
        %v1609 = vadd.f32 0.0, %v1608
        %v1610 = vpop.f32.mrb[0].mxu0
        %v1611 = vadd.f32 0.0, %v1610
        %1612 = vmatprep.mubr.bf16.mxu0 0
        %1613 = vmatmul.mubr.bf16.gmra.mrb[0].mxu0 %v1559
        %v1614 = vpop.f32.mrb[0].mxu0
        %v1615 = vadd.f32 0.0, %v1614
        %v1616 = vpop.f32.mrb[0].mxu0
        %v1617 = vadd.f32 0.0, %v1616
        %v1618 = vpop.f32.mrb[0].mxu0
        %v1619 = vadd.f32 0.0, %v1618
        %v1620 = vpop.f32.mrb[0].mxu0
        %v1621 = vadd.f32 0.0, %v1620
        %1622 = vmatprep.mubr.bf16.mxu0 0
        %1623 = vmatmul.mubr.bf16.gmra.mrb[0].mxu0 %v1562
        %v1624 = vpop.f32.mrb[0].mxu0
        %v1625 = vadd.f32 0.0, %v1624
        %v1626 = vpop.f32.mrb[0].mxu0
        %v1627 = vadd.f32 0.0, %v1626
        %v1628 = vpop.f32.mrb[0].mxu0
        %v1629 = vpop.f32.mrb[0].mxu0
        %1630 = vdwg.mxu0
        %v1631 = vadd.f32 %v1494, %v1605
        %v1632 = vadd.f32 %v1495, %v1607
        %v1633 = vadd.f32 %v1496, %v1609
        %v1634 = vadd.f32 %v1497, %v1611
        %v1635 = vadd.f32 %v1498, %v1615
        %v1636 = vadd.f32 %v1499, %v1617
        %v1637 = vadd.f32 %v1500, %v1619
        %v1638 = vadd.f32 %v1501, %v1621
        %v1639 = vadd.f32 %v1502, %v1625
        %v1640 = vadd.f32 %v1503, %v1627
        %v1641 = vld [vmem:[%s3] sm:$0xff]
        %v1642 = vld [vmem:[%s3 + $0x8] sm:$0xff]
        %v1643 = vld [vmem:[%s3 + $0x10] sm:$0xff]
        %v1644 = vld [vmem:[%s3 + $0x18] sm:$0xff]
        %v1645 = vld [vmem:[%s3 + $0x20] sm:$0xff]
        %1647 = vset.pattern.permute.xlu0 0
        %1648 = vperm.xlu0 %1647, %v1641
        %v1649 = vpop.permute.xlu0 %1648
        %1652 = vset.pattern.permute.xlu0 0
        %1653 = vperm.xlu0 %1652, %v1642
        %v1654 = vpop.permute.xlu0 %1653
        %1657 = vset.pattern.permute.xlu0 0
        %1658 = vperm.xlu0 %1657, %v1643
        %v1659 = vpop.permute.xlu0 %1658
        %1662 = vset.pattern.permute.xlu0 0
        %1663 = vperm.xlu0 %1662, %v1644
        %v1664 = vpop.permute.xlu0 %1663
        %1667 = vset.pattern.permute.xlu0 0
        %1668 = vperm.xlu0 %1667, %v1645
        %v1669 = vpop.permute.xlu0 %1668
        %v1671 = vadd.f32 %v1631, %v1649
        %v1672 = vadd.f32 %v1632, %v1649
        %v1673 = vadd.f32 %v1633, %v1654
        %v1674 = vadd.f32 %v1634, %v1654
        %v1675 = vadd.f32 %v1635, %v1659
        %v1676 = vadd.f32 %v1636, %v1659
        %v1677 = vadd.f32 %v1637, %v1664
        %v1678 = vadd.f32 %v1638, %v1664
        %v1679 = vadd.f32 %v1639, %v1669
        %v1680 = vadd.f32 %v1640, %v1669
        %v1681 = vmax.f32 %v1671, 0.0
        %v1682 = vmax.f32 %v1672, 0.0
        %v1683 = vmax.f32 %v1673, 0.0
        %v1684 = vmax.f32 %v1674, 0.0
        %v1685 = vmax.f32 %v1675, 0.0
        %v1686 = vmax.f32 %v1676, 0.0
        %v1687 = vmax.f32 %v1677, 0.0
        %v1688 = vmax.f32 %v1678, 0.0
        %v1689 = vmax.f32 %v1679, 0.0
        %v1690 = vmax.f32 %v1680, 0.0
        %1691 = vrot.lane.b32.xlu0 %v1681, 17
        %v1692 = vpop.permute.xlu0 %1691
        %1693 = vrot.lane.b32.xlu0 %v1683, 17
        %v1694 = vpop.permute.xlu0 %1693
        %1695 = vrot.lane.b32.xlu0 %v1685, 17
        %v1696 = vpop.permute.xlu0 %1695
        %1697 = vrot.lane.b32.xlu0 %v1687, 17
        %v1698 = vpop.permute.xlu0 %1697
        %1699 = vrot.lane.b32.xlu0 %v1689, 17
        %v1700 = vpop.permute.xlu0 %1699
        %1701 = vrot.lane.b32.xlu0 %v1682, 17
        %v1702 = vpop.permute.xlu0 %1701
        %1703 = vrot.lane.b32.xlu0 %v1684, 17
        %v1704 = vpop.permute.xlu0 %1703
        %1705 = vrot.lane.b32.xlu0 %v1686, 17
        %v1706 = vpop.permute.xlu0 %1705
        %1707 = vrot.lane.b32.xlu0 %v1688, 17
        %v1708 = vpop.permute.xlu0 %1707
        %1709 = vrot.lane.b32.xlu0 %v1690, 17
        %v1710 = vpop.permute.xlu0 %1709
        %v1711 = vsel %vm466, %v1692, %v1702
        %v1712 = vsel %vm466, %v1694, %v1704
        %v1713 = vsel %vm466, %v1696, %v1706
        %v1714 = vsel %vm466, %v1698, %v1708
        %v1715 = vsel %vm466, %v1700, %v1710
        %v1716 = vsel %vm466, %v1702, %v1692
        %v1717 = vsel %vm466, %v1704, %v1694
        %v1718 = vsel %vm466, %v1706, %v1696
        %v1719 = vsel %vm466, %v1708, %v1698
        %v1720 = vsel %vm466, %v1710, %v1700
        %v1721 = vmul.f32 %v1716, %v476
        %v1722 = vmul.f32 %v1711, %v480
        %v1723 = vmul.f32 %v1717, %v476
        %v1724 = vmul.f32 %v1712, %v480
        %v1725 = vmul.f32 %v1718, %v476
        %v1726 = vmul.f32 %v1713, %v480
        %v1727 = vmul.f32 %v1719, %v476
        %v1728 = vmul.f32 %v1714, %v480
        %v1729 = vmul.f32 %v1720, %v476
        %v1730 = vmul.f32 %v1715, %v480
        %v1731 = vld [vmem:[%s4] sm:$0xf]
        %v1732 = vld [vmem:[%s4 + $0x4] sm:$0xf]
        %v1733 = vld [vmem:[%s4 + $0x8] sm:$0xf]
        %v1734 = vld [vmem:[%s4 + $0xc] sm:$0xf]
        %v1735 = vld [vmem:[%s4 + $0x10] sm:$0xf]
        %v1736 = vld [vmem:[%s4 + $0x14] sm:$0xf]
        %v1737 = vld [vmem:[%s4 + $0x18] sm:$0xf]
        %v1738 = vld [vmem:[%s4 + $0x1c] sm:$0xf]
        %v1739 = vld [vmem:[%s4 + $0x20] sm:$0xf]
        %v1740 = vld [vmem:[%s4 + $0x24] sm:$0xf]
        %v1741 = vpack.c.bf16 %v1723, %v1721
        %v1742 = vpack.c.bf16 %v1724, %v1722
        %v1743 = vpack.c.bf16 %v1727, %v1725
        %v1744 = vpack.c.bf16 %v1728, %v1726
        %v1745 = vpack.c.bf16 %v1729, %v1729
        %v1746 = vpack.c.bf16 %v1730, %v1730
        %1747 = vrot.lane.b32.xlu0 %v1681, 16
        %v1748 = vpop.permute.xlu0 %1747
        %1749 = vrot.lane.b32.xlu0 %v1683, 16
        %v1750 = vpop.permute.xlu0 %1749
        %1751 = vrot.lane.b32.xlu0 %v1685, 16
        %v1752 = vpop.permute.xlu0 %1751
        %1753 = vrot.lane.b32.xlu0 %v1687, 16
        %v1754 = vpop.permute.xlu0 %1753
        %1755 = vrot.lane.b32.xlu0 %v1689, 16
        %v1756 = vpop.permute.xlu0 %1755
        %1757 = vrot.lane.b32.xlu0 %v1682, 16
        %v1758 = vpop.permute.xlu0 %1757
        %1759 = vrot.lane.b32.xlu0 %v1684, 16
        %v1760 = vpop.permute.xlu0 %1759
        %1761 = vrot.lane.b32.xlu0 %v1686, 16
        %v1762 = vpop.permute.xlu0 %1761
        %1763 = vrot.lane.b32.xlu0 %v1688, 16
        %v1764 = vpop.permute.xlu0 %1763
        %1765 = vrot.lane.b32.xlu0 %v1690, 16
        %v1766 = vpop.permute.xlu0 %1765
        %v1767 = vsel %vm502, %v1748, %v1758
        %v1768 = vsel %vm502, %v1750, %v1760
        %v1769 = vsel %vm502, %v1752, %v1762
        %v1770 = vsel %vm502, %v1754, %v1764
        %v1771 = vsel %vm502, %v1756, %v1766
        %v1772 = vsel %vm502, %v1758, %v1748
        %v1773 = vsel %vm502, %v1760, %v1750
        %v1774 = vsel %vm502, %v1762, %v1752
        %v1775 = vsel %vm502, %v1764, %v1754
        %v1776 = vsel %vm502, %v1766, %v1756
        %v1777 = vmul.f32 %v1772, %v513
        %v1778 = vmul.f32 %v1767, %v517
        %v1779 = vmul.f32 %v1773, %v513
        %v1780 = vmul.f32 %v1768, %v517
        %v1781 = vmul.f32 %v1774, %v513
        %v1782 = vmul.f32 %v1769, %v517
        %v1783 = vmul.f32 %v1775, %v513
        %v1784 = vmul.f32 %v1770, %v517
        %v1785 = vmul.f32 %v1776, %v513
        %v1786 = vmul.f32 %v1771, %v517
        %s1787 = scalar_lea.vmem %s4, 40
        %v1788 = vld [vmem:[%s1787] sm:$0xf]
        %v1789 = vld [vmem:[%s1787 + $0x4] sm:$0xf]
        %v1790 = vld [vmem:[%s1787 + $0x8] sm:$0xf]
        %v1791 = vld [vmem:[%s1787 + $0xc] sm:$0xf]
        %v1792 = vld [vmem:[%s1787 + $0x10] sm:$0xf]
        %v1793 = vld [vmem:[%s1787 + $0x14] sm:$0xf]
        %v1794 = vld [vmem:[%s1787 + $0x18] sm:$0xf]
        %v1795 = vld [vmem:[%s1787 + $0x1c] sm:$0xf]
        %v1796 = vld [vmem:[%s1787 + $0x20] sm:$0xf]
        %v1797 = vld [vmem:[%s1787 + $0x24] sm:$0xf]
        %v1798 = vpack.c.bf16 %v1779, %v1777
        %v1799 = vpack.c.bf16 %v1780, %v1778
        %v1800 = vpack.c.bf16 %v1783, %v1781
        %v1801 = vpack.c.bf16 %v1784, %v1782
        %v1802 = vpack.c.bf16 %v1785, %v1785
        %v1803 = vpack.c.bf16 %v1786, %v1786
        %v1814 = vunpack.c.l.b16 %v1788
        %v1815 = vunpack.c.l.b16 %v1789
        %v1816 = vunpack.c.l.b16 %v1790
        %v1817 = vunpack.c.l.b16 %v1791
        %v1818 = vunpack.c.l.b16 %v1792
        %v1819 = vunpack.c.l.b16 %v1793
        %v1820 = vunpack.c.l.b16 %v1794
        %v1821 = vunpack.c.l.b16 %v1795
        %v1822 = vunpack.c.l.b16 %v1796
        %v1823 = vunpack.c.l.b16 %v1797
        %v1824 = vpack.c.b16 %v1815, %v1814
        %v1825 = vpack.c.b16 %v1817, %v1816
        %v1826 = vpack.c.b16 %v1819, %v1818
        %v1827 = vpack.c.b16 %v1821, %v1820
        %v1828 = vpack.c.b16 %v1823, %v1822
        %vm1829 = vcmask 326656
        %v1831 = vsel %vm1829, %v1824, 0
        %v1834 = vsel %vm1829, %v1825, 0
        %v1837 = vsel %vm1829, %v1826, 0
        %v1840 = vsel %vm1829, %v1827, 0
        %v1843 = vsel %vm1829, %v1828, 0
        %vm1845 = vcmask 1043456
        %v1847 = vsel %vm1845, %v1802, 0
        %v1850 = vsel %vm1845, %v1803, 0
        %1852 = vmatprep.subr.bf16.mxu0 %v1799
        %1853 = vmatpush1.bf16.msra.mxu0 %v1798
        %1854 = vmatprep.subr.bf16.mxu0 %v1801
        %1855 = vmatpush1.bf16.msra.mxu0 %v1800
        %1856 = vmatprep.subr.bf16.mxu0 %v1850
        %1857 = vmatpush1.bf16.msra.mxu0 %v1847
        %1858 = vmatprep.subr.bf16.mxu0 0
        %1859 = vmatpush1.bf16.msra.mxu0 0
        %1860 = vmatprep.subr.bf16.mxu0 0
        %1861 = vmatpush1.bf16.msra.mxu0 0
        %1862 = vmatprep.subr.bf16.mxu0 0
        %1863 = vmatpush1.bf16.msra.mxu0 0
        %1864 = vmatprep.subr.bf16.mxu0 0
        %1865 = vmatpush1.bf16.msra.mxu0 0
        %1866 = vmatprep.subr.bf16.mxu0 0
        %1867 = vmatpush1.bf16.msra.mxu0 0
        %1868 = vmatprep.subr.bf16.mxu0 0
        %1869 = vmatpush1.bf16.msra.mxu0 0
        %1870 = vmatprep.subr.bf16.mxu0 0
        %1871 = vmatpush1.bf16.msra.mxu0 0
        %1872 = vmatprep.subr.bf16.mxu0 0
        %1873 = vmatpush1.bf16.msra.mxu0 0
        %1874 = vmatprep.subr.bf16.mxu0 0
        %1875 = vmatpush1.bf16.msra.mxu0 0
        %1876 = vmatprep.subr.bf16.mxu0 0
        %1877 = vmatpush1.bf16.msra.mxu0 0
        %1878 = vmatprep.subr.bf16.mxu0 0
        %1879 = vmatpush1.bf16.msra.mxu0 0
        %1880 = vmatprep.subr.bf16.mxu0 0
        %1881 = vmatpush1.bf16.msra.mxu0 0
        %1882 = vmatprep.subr.bf16.mxu0 0
        %1883 = vmatpush1.bf16.msra.mxu0 0
        %1884 = vmatprep.mubr.bf16.mxu0 0
        %1885 = vmatmul.mubr.bf16.gmra.mrb[0].mxu0 %v1831
        %v1886 = vpop.f32.mrb[0].mxu0
        %v1887 = vadd.f32 0.0, %v1886
        %v1888 = vpop.f32.mrb[0].mxu0
        %v1889 = vadd.f32 0.0, %v1888
        %v1890 = vpop.f32.mrb[0].mxu0
        %v1891 = vadd.f32 0.0, %v1890
        %v1892 = vpop.f32.mrb[0].mxu0
        %v1893 = vadd.f32 0.0, %v1892
        %1894 = vmatprep.mubr.bf16.mxu0 0
        %1895 = vmatmul.mubr.bf16.gmra.mrb[0].mxu0 %v1834
        %v1896 = vpop.f32.mrb[0].mxu0
        %v1897 = vadd.f32 0.0, %v1896
        %v1898 = vpop.f32.mrb[0].mxu0
        %v1899 = vadd.f32 0.0, %v1898
        %v1900 = vpop.f32.mrb[0].mxu0
        %v1901 = vadd.f32 0.0, %v1900
        %v1902 = vpop.f32.mrb[0].mxu0
        %v1903 = vadd.f32 0.0, %v1902
        %1904 = vmatprep.mubr.bf16.mxu0 0
        %1905 = vmatmul.mubr.bf16.gmra.mrb[0].mxu0 %v1837
        %v1906 = vpop.f32.mrb[0].mxu0
        %v1907 = vadd.f32 0.0, %v1906
        %v1908 = vpop.f32.mrb[0].mxu0
        %v1909 = vadd.f32 0.0, %v1908
        %v1910 = vpop.f32.mrb[0].mxu0
        %v1911 = vadd.f32 0.0, %v1910
        %v1912 = vpop.f32.mrb[0].mxu0
        %v1913 = vadd.f32 0.0, %v1912
        %1914 = vmatprep.mubr.bf16.mxu0 0
        %1915 = vmatmul.mubr.bf16.gmra.mrb[0].mxu0 %v1840
        %v1916 = vpop.f32.mrb[0].mxu0
        %v1917 = vadd.f32 0.0, %v1916
        %v1918 = vpop.f32.mrb[0].mxu0
        %v1919 = vadd.f32 0.0, %v1918
        %v1920 = vpop.f32.mrb[0].mxu0
        %v1921 = vadd.f32 0.0, %v1920
        %v1922 = vpop.f32.mrb[0].mxu0
        %v1923 = vadd.f32 0.0, %v1922
        %1924 = vmatprep.mubr.bf16.mxu0 0
        %1925 = vmatmul.mubr.bf16.gmra.mrb[0].mxu0 %v1843
        %v1926 = vpop.f32.mrb[0].mxu0
        %v1927 = vadd.f32 0.0, %v1926
        %v1928 = vpop.f32.mrb[0].mxu0
        %v1929 = vadd.f32 0.0, %v1928
        %v1930 = vpop.f32.mrb[0].mxu0
        %v1931 = vadd.f32 0.0, %v1930
        %v1932 = vpop.f32.mrb[0].mxu0
        %v1933 = vadd.f32 0.0, %v1932
        %1934 = vdwg.mxu0
        %v1945 = vunpack.c.l.b16 %v1731
        %v1946 = vunpack.c.l.b16 %v1732
        %v1947 = vunpack.c.l.b16 %v1733
        %v1948 = vunpack.c.l.b16 %v1734
        %v1949 = vunpack.c.l.b16 %v1735
        %v1950 = vunpack.c.l.b16 %v1736
        %v1951 = vunpack.c.l.b16 %v1737
        %v1952 = vunpack.c.l.b16 %v1738
        %v1953 = vunpack.c.l.b16 %v1739
        %v1954 = vunpack.c.l.b16 %v1740
        %v1955 = vpack.c.b16 %v1946, %v1945
        %v1956 = vpack.c.b16 %v1948, %v1947
        %v1957 = vpack.c.b16 %v1950, %v1949
        %v1958 = vpack.c.b16 %v1952, %v1951
        %v1959 = vpack.c.b16 %v1954, %v1953
        %v1961 = vsel %vm1829, %v1955, 0
        %v1964 = vsel %vm1829, %v1956, 0
        %v1967 = vsel %vm1829, %v1957, 0
        %v1970 = vsel %vm1829, %v1958, 0
        %v1973 = vsel %vm1829, %v1959, 0
        %v1976 = vsel %vm1845, %v1745, 0
        %v1979 = vsel %vm1845, %v1746, 0
        %1981 = vmatprep.subr.bf16.mxu0 %v1742
        %1982 = vmatpush1.bf16.msra.mxu0 %v1741
        %1983 = vmatprep.subr.bf16.mxu0 %v1744
        %1984 = vmatpush1.bf16.msra.mxu0 %v1743
        %1985 = vmatprep.subr.bf16.mxu0 %v1979
        %1986 = vmatpush1.bf16.msra.mxu0 %v1976
        %1987 = vmatprep.subr.bf16.mxu0 0
        %1988 = vmatpush1.bf16.msra.mxu0 0
        %1989 = vmatprep.subr.bf16.mxu0 0
        %1990 = vmatpush1.bf16.msra.mxu0 0
        %1991 = vmatprep.subr.bf16.mxu0 0
        %1992 = vmatpush1.bf16.msra.mxu0 0
        %1993 = vmatprep.subr.bf16.mxu0 0
        %1994 = vmatpush1.bf16.msra.mxu0 0
        %1995 = vmatprep.subr.bf16.mxu0 0
        %1996 = vmatpush1.bf16.msra.mxu0 0
        %1997 = vmatprep.subr.bf16.mxu0 0
        %1998 = vmatpush1.bf16.msra.mxu0 0
        %1999 = vmatprep.subr.bf16.mxu0 0
        %2000 = vmatpush1.bf16.msra.mxu0 0
        %2001 = vmatprep.subr.bf16.mxu0 0
        %2002 = vmatpush1.bf16.msra.mxu0 0
        %2003 = vmatprep.subr.bf16.mxu0 0
        %2004 = vmatpush1.bf16.msra.mxu0 0
        %2005 = vmatprep.subr.bf16.mxu0 0
        %2006 = vmatpush1.bf16.msra.mxu0 0
        %2007 = vmatprep.subr.bf16.mxu0 0
        %2008 = vmatpush1.bf16.msra.mxu0 0
        %2009 = vmatprep.subr.bf16.mxu0 0
        %2010 = vmatpush1.bf16.msra.mxu0 0
        %2011 = vmatprep.subr.bf16.mxu0 0
        %2012 = vmatpush1.bf16.msra.mxu0 0
        %2013 = vmatprep.mubr.bf16.mxu0 0
        %2014 = vmatmul.mubr.bf16.gmra.mrb[0].mxu0 %v1961
        %v2015 = vpop.f32.mrb[0].mxu0
        %v2016 = vadd.f32 %v1887, %v2015
        %v2017 = vpop.f32.mrb[0].mxu0
        %v2018 = vadd.f32 %v1889, %v2017
        %v2019 = vpop.f32.mrb[0].mxu0
        %v2020 = vadd.f32 %v1891, %v2019
        %v2021 = vpop.f32.mrb[0].mxu0
        %v2022 = vadd.f32 %v1893, %v2021
        %2023 = vmatprep.mubr.bf16.mxu0 0
        %2024 = vmatmul.mubr.bf16.gmra.mrb[0].mxu0 %v1964
        %v2025 = vpop.f32.mrb[0].mxu0
        %v2026 = vadd.f32 %v1897, %v2025
        %v2027 = vpop.f32.mrb[0].mxu0
        %v2028 = vadd.f32 %v1899, %v2027
        %v2029 = vpop.f32.mrb[0].mxu0
        %v2030 = vadd.f32 %v1901, %v2029
        %v2031 = vpop.f32.mrb[0].mxu0
        %v2032 = vadd.f32 %v1903, %v2031
        %2033 = vmatprep.mubr.bf16.mxu0 0
        %2034 = vmatmul.mubr.bf16.gmra.mrb[0].mxu0 %v1967
        %v2035 = vpop.f32.mrb[0].mxu0
        %v2036 = vadd.f32 %v1907, %v2035
        %v2037 = vpop.f32.mrb[0].mxu0
        %v2038 = vadd.f32 %v1909, %v2037
        %v2039 = vpop.f32.mrb[0].mxu0
        %v2040 = vadd.f32 %v1911, %v2039
        %v2041 = vpop.f32.mrb[0].mxu0
        %v2042 = vadd.f32 %v1913, %v2041
        %2043 = vmatprep.mubr.bf16.mxu0 0
        %2044 = vmatmul.mubr.bf16.gmra.mrb[0].mxu0 %v1970
        %v2045 = vpop.f32.mrb[0].mxu0
        %v2046 = vadd.f32 %v1917, %v2045
        %v2047 = vpop.f32.mrb[0].mxu0
        %v2048 = vadd.f32 %v1919, %v2047
        %v2049 = vpop.f32.mrb[0].mxu0
        %v2050 = vadd.f32 %v1921, %v2049
        %v2051 = vpop.f32.mrb[0].mxu0
        %v2052 = vadd.f32 %v1923, %v2051
        %2053 = vmatprep.mubr.bf16.mxu0 0
        %2054 = vmatmul.mubr.bf16.gmra.mrb[0].mxu0 %v1973
        %v2055 = vpop.f32.mrb[0].mxu0
        %v2056 = vadd.f32 %v1927, %v2055
        %v2057 = vpop.f32.mrb[0].mxu0
        %v2058 = vadd.f32 %v1929, %v2057
        %v2059 = vpop.f32.mrb[0].mxu0
        %v2060 = vadd.f32 %v1931, %v2059
        %v2061 = vpop.f32.mrb[0].mxu0
        %v2062 = vadd.f32 %v1933, %v2061
        %2063 = vdwg.mxu0
        %2064 = vrot.lane.b32.xlu0 %v1681, 15
        %v2065 = vpop.permute.xlu0 %2064
        %2066 = vrot.lane.b32.xlu0 %v1683, 15
        %v2067 = vpop.permute.xlu0 %2066
        %2068 = vrot.lane.b32.xlu0 %v1685, 15
        %v2069 = vpop.permute.xlu0 %2068
        %2070 = vrot.lane.b32.xlu0 %v1687, 15
        %v2071 = vpop.permute.xlu0 %2070
        %2072 = vrot.lane.b32.xlu0 %v1689, 15
        %v2073 = vpop.permute.xlu0 %2072
        %2074 = vrot.lane.b32.xlu0 %v1682, 15
        %v2075 = vpop.permute.xlu0 %2074
        %2076 = vrot.lane.b32.xlu0 %v1684, 15
        %v2077 = vpop.permute.xlu0 %2076
        %2078 = vrot.lane.b32.xlu0 %v1686, 15
        %v2079 = vpop.permute.xlu0 %2078
        %2080 = vrot.lane.b32.xlu0 %v1688, 15
        %v2081 = vpop.permute.xlu0 %2080
        %2082 = vrot.lane.b32.xlu0 %v1690, 15
        %v2083 = vpop.permute.xlu0 %2082
        %v2084 = vsel %vm720, %v2065, %v2075
        %v2085 = vsel %vm720, %v2067, %v2077
        %v2086 = vsel %vm720, %v2069, %v2079
        %v2087 = vsel %vm720, %v2071, %v2081
        %v2088 = vsel %vm720, %v2073, %v2083
        %v2089 = vsel %vm720, %v2075, %v2065
        %v2090 = vsel %vm720, %v2077, %v2067
        %v2091 = vsel %vm720, %v2079, %v2069
        %v2092 = vsel %vm720, %v2081, %v2071
        %v2093 = vsel %vm720, %v2083, %v2073
        %v2094 = vmul.f32 %v2089, %v731
        %v2095 = vmul.f32 %v2084, %v735
        %v2096 = vmul.f32 %v2090, %v731
        %v2097 = vmul.f32 %v2085, %v735
        %v2098 = vmul.f32 %v2091, %v731
        %v2099 = vmul.f32 %v2086, %v735
        %v2100 = vmul.f32 %v2092, %v731
        %v2101 = vmul.f32 %v2087, %v735
        %v2102 = vmul.f32 %v2093, %v731
        %v2103 = vmul.f32 %v2088, %v735
        %s2104 = scalar_lea.vmem %s4, 80
        %v2105 = vld [vmem:[%s2104] sm:$0xf]
        %v2106 = vld [vmem:[%s2104 + $0x4] sm:$0xf]
        %v2107 = vld [vmem:[%s2104 + $0x8] sm:$0xf]
        %v2108 = vld [vmem:[%s2104 + $0xc] sm:$0xf]
        %v2109 = vld [vmem:[%s2104 + $0x10] sm:$0xf]
        %v2110 = vld [vmem:[%s2104 + $0x14] sm:$0xf]
        %v2111 = vld [vmem:[%s2104 + $0x18] sm:$0xf]
        %v2112 = vld [vmem:[%s2104 + $0x1c] sm:$0xf]
        %v2113 = vld [vmem:[%s2104 + $0x20] sm:$0xf]
        %v2114 = vld [vmem:[%s2104 + $0x24] sm:$0xf]
        %v2115 = vpack.c.bf16 %v2096, %v2094
        %v2116 = vpack.c.bf16 %v2097, %v2095
        %v2117 = vpack.c.bf16 %v2100, %v2098
        %v2118 = vpack.c.bf16 %v2101, %v2099
        %v2119 = vpack.c.bf16 %v2102, %v2102
        %v2120 = vpack.c.bf16 %v2103, %v2103
        %v2131 = vunpack.c.l.b16 %v2105
        %v2132 = vunpack.c.l.b16 %v2106
        %v2133 = vunpack.c.l.b16 %v2107
        %v2134 = vunpack.c.l.b16 %v2108
        %v2135 = vunpack.c.l.b16 %v2109
        %v2136 = vunpack.c.l.b16 %v2110
        %v2137 = vunpack.c.l.b16 %v2111
        %v2138 = vunpack.c.l.b16 %v2112
        %v2139 = vunpack.c.l.b16 %v2113
        %v2140 = vunpack.c.l.b16 %v2114
        %v2141 = vpack.c.b16 %v2132, %v2131
        %v2142 = vpack.c.b16 %v2134, %v2133
        %v2143 = vpack.c.b16 %v2136, %v2135
        %v2144 = vpack.c.b16 %v2138, %v2137
        %v2145 = vpack.c.b16 %v2140, %v2139
        %v2147 = vsel %vm1829, %v2141, 0
        %v2150 = vsel %vm1829, %v2142, 0
        %v2153 = vsel %vm1829, %v2143, 0
        %v2156 = vsel %vm1829, %v2144, 0
        %v2159 = vsel %vm1829, %v2145, 0
        %v2162 = vsel %vm1845, %v2119, 0
        %v2165 = vsel %vm1845, %v2120, 0
        %2167 = vmatprep.subr.bf16.mxu0 %v2116
        %2168 = vmatpush1.bf16.msra.mxu0 %v2115
        %2169 = vmatprep.subr.bf16.mxu0 %v2118
        %2170 = vmatpush1.bf16.msra.mxu0 %v2117
        %2171 = vmatprep.subr.bf16.mxu0 %v2165
        %2172 = vmatpush1.bf16.msra.mxu0 %v2162
        %2173 = vmatprep.subr.bf16.mxu0 0
        %2174 = vmatpush1.bf16.msra.mxu0 0
        %2175 = vmatprep.subr.bf16.mxu0 0
        %2176 = vmatpush1.bf16.msra.mxu0 0
        %2177 = vmatprep.subr.bf16.mxu0 0
        %2178 = vmatpush1.bf16.msra.mxu0 0
        %2179 = vmatprep.subr.bf16.mxu0 0
        %2180 = vmatpush1.bf16.msra.mxu0 0
        %2181 = vmatprep.subr.bf16.mxu0 0
        %2182 = vmatpush1.bf16.msra.mxu0 0
        %2183 = vmatprep.subr.bf16.mxu0 0
        %2184 = vmatpush1.bf16.msra.mxu0 0
        %2185 = vmatprep.subr.bf16.mxu0 0
        %2186 = vmatpush1.bf16.msra.mxu0 0
        %2187 = vmatprep.subr.bf16.mxu0 0
        %2188 = vmatpush1.bf16.msra.mxu0 0
        %2189 = vmatprep.subr.bf16.mxu0 0
        %2190 = vmatpush1.bf16.msra.mxu0 0
        %2191 = vmatprep.subr.bf16.mxu0 0
        %2192 = vmatpush1.bf16.msra.mxu0 0
        %2193 = vmatprep.subr.bf16.mxu0 0
        %2194 = vmatpush1.bf16.msra.mxu0 0
        %2195 = vmatprep.subr.bf16.mxu0 0
        %2196 = vmatpush1.bf16.msra.mxu0 0
        %2197 = vmatprep.subr.bf16.mxu0 0
        %2198 = vmatpush1.bf16.msra.mxu0 0
        %2199 = vmatprep.mubr.bf16.mxu0 0
        %2200 = vmatmul.mubr.bf16.gmra.mrb[0].mxu0 %v2147
        %v2201 = vpop.f32.mrb[0].mxu0
        %v2202 = vadd.f32 0.0, %v2201
        %v2203 = vpop.f32.mrb[0].mxu0
        %v2204 = vadd.f32 0.0, %v2203
        %v2205 = vpop.f32.mrb[0].mxu0
        %v2206 = vadd.f32 0.0, %v2205
        %v2207 = vpop.f32.mrb[0].mxu0
        %v2208 = vadd.f32 0.0, %v2207
        %2209 = vmatprep.mubr.bf16.mxu0 0
        %2210 = vmatmul.mubr.bf16.gmra.mrb[0].mxu0 %v2150
        %v2211 = vpop.f32.mrb[0].mxu0
        %v2212 = vadd.f32 0.0, %v2211
        %v2213 = vpop.f32.mrb[0].mxu0
        %v2214 = vadd.f32 0.0, %v2213
        %v2215 = vpop.f32.mrb[0].mxu0
        %v2216 = vadd.f32 0.0, %v2215
        %v2217 = vpop.f32.mrb[0].mxu0
        %v2218 = vadd.f32 0.0, %v2217
        %2219 = vmatprep.mubr.bf16.mxu0 0
        %2220 = vmatmul.mubr.bf16.gmra.mrb[0].mxu0 %v2153
        %v2221 = vpop.f32.mrb[0].mxu0
        %v2222 = vadd.f32 0.0, %v2221
        %v2223 = vpop.f32.mrb[0].mxu0
        %v2224 = vadd.f32 0.0, %v2223
        %v2225 = vpop.f32.mrb[0].mxu0
        %v2226 = vadd.f32 0.0, %v2225
        %v2227 = vpop.f32.mrb[0].mxu0
        %v2228 = vadd.f32 0.0, %v2227
        %2229 = vmatprep.mubr.bf16.mxu0 0
        %2230 = vmatmul.mubr.bf16.gmra.mrb[0].mxu0 %v2156
        %v2231 = vpop.f32.mrb[0].mxu0
        %v2232 = vadd.f32 0.0, %v2231
        %v2233 = vpop.f32.mrb[0].mxu0
        %v2234 = vadd.f32 0.0, %v2233
        %v2235 = vpop.f32.mrb[0].mxu0
        %v2236 = vadd.f32 0.0, %v2235
        %v2237 = vpop.f32.mrb[0].mxu0
        %v2238 = vadd.f32 0.0, %v2237
        %2239 = vmatprep.mubr.bf16.mxu0 0
        %2240 = vmatmul.mubr.bf16.gmra.mrb[0].mxu0 %v2159
        %v2241 = vpop.f32.mrb[0].mxu0
        %v2242 = vadd.f32 0.0, %v2241
        %v2243 = vpop.f32.mrb[0].mxu0
        %v2244 = vadd.f32 0.0, %v2243
        %v2245 = vpop.f32.mrb[0].mxu0
        %v2246 = vadd.f32 0.0, %v2245
        %v2247 = vpop.f32.mrb[0].mxu0
        %v2248 = vadd.f32 0.0, %v2247
        %2249 = vdwg.mxu0
        %v2250 = vadd.f32 %v2016, %v2202
        %v2251 = vadd.f32 %v2018, %v2204
        %v2252 = vadd.f32 %v2020, %v2206
        %v2253 = vadd.f32 %v2022, %v2208
        %v2254 = vadd.f32 %v2026, %v2212
        %v2255 = vadd.f32 %v2028, %v2214
        %v2256 = vadd.f32 %v2030, %v2216
        %v2257 = vadd.f32 %v2032, %v2218
        %v2258 = vadd.f32 %v2036, %v2222
        %v2259 = vadd.f32 %v2038, %v2224
        %v2260 = vadd.f32 %v2040, %v2226
        %v2261 = vadd.f32 %v2042, %v2228
        %v2262 = vadd.f32 %v2046, %v2232
        %v2263 = vadd.f32 %v2048, %v2234
        %v2264 = vadd.f32 %v2050, %v2236
        %v2265 = vadd.f32 %v2052, %v2238
        %v2266 = vadd.f32 %v2056, %v2242
        %v2267 = vadd.f32 %v2058, %v2244
        %v2268 = vadd.f32 %v2060, %v2246
        %v2269 = vadd.f32 %v2062, %v2248
        %2270 = vrot.lane.b32.xlu0 %v1681, 1
        %v2271 = vpop.permute.xlu0 %2270
        %2272 = vrot.lane.b32.xlu0 %v1683, 1
        %v2273 = vpop.permute.xlu0 %2272
        %2274 = vrot.lane.b32.xlu0 %v1685, 1
        %v2275 = vpop.permute.xlu0 %2274
        %2276 = vrot.lane.b32.xlu0 %v1687, 1
        %v2277 = vpop.permute.xlu0 %2276
        %2278 = vrot.lane.b32.xlu0 %v1689, 1
        %v2279 = vpop.permute.xlu0 %2278
        %2280 = vrot.lane.b32.xlu0 %v1682, 1
        %v2281 = vpop.permute.xlu0 %2280
        %2282 = vrot.lane.b32.xlu0 %v1684, 1
        %v2283 = vpop.permute.xlu0 %2282
        %2284 = vrot.lane.b32.xlu0 %v1686, 1
        %v2285 = vpop.permute.xlu0 %2284
        %2286 = vrot.lane.b32.xlu0 %v1688, 1
        %v2287 = vpop.permute.xlu0 %2286
        %2288 = vrot.lane.b32.xlu0 %v1690, 1
        %v2289 = vpop.permute.xlu0 %2288
        %v2290 = vsel %vm857, %v2271, %v2281
        %v2291 = vsel %vm857, %v2273, %v2283
        %v2292 = vsel %vm857, %v2275, %v2285
        %v2293 = vsel %vm857, %v2277, %v2287
        %v2294 = vsel %vm857, %v2279, %v2289
        %v2295 = vsel %vm857, %v2281, %v2271
        %v2296 = vsel %vm857, %v2283, %v2273
        %v2297 = vsel %vm857, %v2285, %v2275
        %v2298 = vsel %vm857, %v2287, %v2277
        %v2299 = vsel %vm857, %v2289, %v2279
        %v2300 = vmul.f32 %v2295, %v868
        %v2301 = vmul.f32 %v2290, %v872
        %v2302 = vmul.f32 %v2296, %v868
        %v2303 = vmul.f32 %v2291, %v872
        %v2304 = vmul.f32 %v2297, %v868
        %v2305 = vmul.f32 %v2292, %v872
        %v2306 = vmul.f32 %v2298, %v868
        %v2307 = vmul.f32 %v2293, %v872
        %v2308 = vmul.f32 %v2299, %v868
        %v2309 = vmul.f32 %v2294, %v872
        %s2310 = scalar_lea.vmem %s4, 120
        %v2311 = vld [vmem:[%s2310] sm:$0xf]
        %v2312 = vld [vmem:[%s2310 + $0x4] sm:$0xf]
        %v2313 = vld [vmem:[%s2310 + $0x8] sm:$0xf]
        %v2314 = vld [vmem:[%s2310 + $0xc] sm:$0xf]
        %v2315 = vld [vmem:[%s2310 + $0x10] sm:$0xf]
        %v2316 = vld [vmem:[%s2310 + $0x14] sm:$0xf]
        %v2317 = vld [vmem:[%s2310 + $0x18] sm:$0xf]
        %v2318 = vld [vmem:[%s2310 + $0x1c] sm:$0xf]
        %v2319 = vld [vmem:[%s2310 + $0x20] sm:$0xf]
        %v2320 = vld [vmem:[%s2310 + $0x24] sm:$0xf]
        %v2321 = vpack.c.bf16 %v2302, %v2300
        %v2322 = vpack.c.bf16 %v2303, %v2301
        %v2323 = vpack.c.bf16 %v2306, %v2304
        %v2324 = vpack.c.bf16 %v2307, %v2305
        %v2325 = vpack.c.bf16 %v2308, %v2308
        %v2326 = vpack.c.bf16 %v2309, %v2309
        %v2337 = vunpack.c.l.b16 %v2311
        %v2338 = vunpack.c.l.b16 %v2312
        %v2339 = vunpack.c.l.b16 %v2313
        %v2340 = vunpack.c.l.b16 %v2314
        %v2341 = vunpack.c.l.b16 %v2315
        %v2342 = vunpack.c.l.b16 %v2316
        %v2343 = vunpack.c.l.b16 %v2317
        %v2344 = vunpack.c.l.b16 %v2318
        %v2345 = vunpack.c.l.b16 %v2319
        %v2346 = vunpack.c.l.b16 %v2320
        %v2347 = vpack.c.b16 %v2338, %v2337
        %v2348 = vpack.c.b16 %v2340, %v2339
        %v2349 = vpack.c.b16 %v2342, %v2341
        %v2350 = vpack.c.b16 %v2344, %v2343
        %v2351 = vpack.c.b16 %v2346, %v2345
        %v2353 = vsel %vm1829, %v2347, 0
        %v2356 = vsel %vm1829, %v2348, 0
        %v2359 = vsel %vm1829, %v2349, 0
        %v2362 = vsel %vm1829, %v2350, 0
        %v2365 = vsel %vm1829, %v2351, 0
        %v2368 = vsel %vm1845, %v2325, 0
        %v2371 = vsel %vm1845, %v2326, 0
        %2373 = vmatprep.subr.bf16.mxu0 %v2322
        %2374 = vmatpush1.bf16.msra.mxu0 %v2321
        %2375 = vmatprep.subr.bf16.mxu0 %v2324
        %2376 = vmatpush1.bf16.msra.mxu0 %v2323
        %2377 = vmatprep.subr.bf16.mxu0 %v2371
        %2378 = vmatpush1.bf16.msra.mxu0 %v2368
        %2379 = vmatprep.subr.bf16.mxu0 0
        %2380 = vmatpush1.bf16.msra.mxu0 0
        %2381 = vmatprep.subr.bf16.mxu0 0
        %2382 = vmatpush1.bf16.msra.mxu0 0
        %2383 = vmatprep.subr.bf16.mxu0 0
        %2384 = vmatpush1.bf16.msra.mxu0 0
        %2385 = vmatprep.subr.bf16.mxu0 0
        %2386 = vmatpush1.bf16.msra.mxu0 0
        %2387 = vmatprep.subr.bf16.mxu0 0
        %2388 = vmatpush1.bf16.msra.mxu0 0
        %2389 = vmatprep.subr.bf16.mxu0 0
        %2390 = vmatpush1.bf16.msra.mxu0 0
        %2391 = vmatprep.subr.bf16.mxu0 0
        %2392 = vmatpush1.bf16.msra.mxu0 0
        %2393 = vmatprep.subr.bf16.mxu0 0
        %2394 = vmatpush1.bf16.msra.mxu0 0
        %2395 = vmatprep.subr.bf16.mxu0 0
        %2396 = vmatpush1.bf16.msra.mxu0 0
        %2397 = vmatprep.subr.bf16.mxu0 0
        %2398 = vmatpush1.bf16.msra.mxu0 0
        %2399 = vmatprep.subr.bf16.mxu0 0
        %2400 = vmatpush1.bf16.msra.mxu0 0
        %2401 = vmatprep.subr.bf16.mxu0 0
        %2402 = vmatpush1.bf16.msra.mxu0 0
        %2403 = vmatprep.subr.bf16.mxu0 0
        %2404 = vmatpush1.bf16.msra.mxu0 0
        %2405 = vmatprep.mubr.bf16.mxu0 0
        %2406 = vmatmul.mubr.bf16.gmra.mrb[0].mxu0 %v2353
        %v2407 = vpop.f32.mrb[0].mxu0
        %v2408 = vadd.f32 0.0, %v2407
        %v2409 = vpop.f32.mrb[0].mxu0
        %v2410 = vadd.f32 0.0, %v2409
        %v2411 = vpop.f32.mrb[0].mxu0
        %v2412 = vadd.f32 0.0, %v2411
        %v2413 = vpop.f32.mrb[0].mxu0
        %v2414 = vadd.f32 0.0, %v2413
        %2415 = vmatprep.mubr.bf16.mxu0 0
        %2416 = vmatmul.mubr.bf16.gmra.mrb[0].mxu0 %v2356
        %v2417 = vpop.f32.mrb[0].mxu0
        %v2418 = vadd.f32 0.0, %v2417
        %v2419 = vpop.f32.mrb[0].mxu0
        %v2420 = vadd.f32 0.0, %v2419
        %v2421 = vpop.f32.mrb[0].mxu0
        %v2422 = vadd.f32 0.0, %v2421
        %v2423 = vpop.f32.mrb[0].mxu0
        %v2424 = vadd.f32 0.0, %v2423
        %2425 = vmatprep.mubr.bf16.mxu0 0
        %2426 = vmatmul.mubr.bf16.gmra.mrb[0].mxu0 %v2359
        %v2427 = vpop.f32.mrb[0].mxu0
        %v2428 = vadd.f32 0.0, %v2427
        %v2429 = vpop.f32.mrb[0].mxu0
        %v2430 = vadd.f32 0.0, %v2429
        %v2431 = vpop.f32.mrb[0].mxu0
        %v2432 = vadd.f32 0.0, %v2431
        %v2433 = vpop.f32.mrb[0].mxu0
        %v2434 = vadd.f32 0.0, %v2433
        %2435 = vmatprep.mubr.bf16.mxu0 0
        %2436 = vmatmul.mubr.bf16.gmra.mrb[0].mxu0 %v2362
        %v2437 = vpop.f32.mrb[0].mxu0
        %v2438 = vadd.f32 0.0, %v2437
        %v2439 = vpop.f32.mrb[0].mxu0
        %v2440 = vadd.f32 0.0, %v2439
        %v2441 = vpop.f32.mrb[0].mxu0
        %v2442 = vadd.f32 0.0, %v2441
        %v2443 = vpop.f32.mrb[0].mxu0
        %v2444 = vadd.f32 0.0, %v2443
        %2445 = vmatprep.mubr.bf16.mxu0 0
        %2446 = vmatmul.mubr.bf16.gmra.mrb[0].mxu0 %v2365
        %v2447 = vpop.f32.mrb[0].mxu0
        %v2448 = vadd.f32 0.0, %v2447
        %v2449 = vpop.f32.mrb[0].mxu0
        %v2450 = vadd.f32 0.0, %v2449
        %v2451 = vpop.f32.mrb[0].mxu0
        %v2452 = vadd.f32 0.0, %v2451
        %v2453 = vpop.f32.mrb[0].mxu0
        %v2454 = vadd.f32 0.0, %v2453
        %2455 = vdwg.mxu0
        %v2456 = vadd.f32 %v2250, %v2408
        %v2457 = vadd.f32 %v2251, %v2410
        %v2458 = vadd.f32 %v2252, %v2412
        %v2459 = vadd.f32 %v2253, %v2414
        %v2460 = vadd.f32 %v2254, %v2418
        %v2461 = vadd.f32 %v2255, %v2420
        %v2462 = vadd.f32 %v2256, %v2422
        %v2463 = vadd.f32 %v2257, %v2424
        %v2464 = vadd.f32 %v2258, %v2428
        %v2465 = vadd.f32 %v2259, %v2430
        %v2466 = vadd.f32 %v2260, %v2432
        %v2467 = vadd.f32 %v2261, %v2434
        %v2468 = vadd.f32 %v2262, %v2438
        %v2469 = vadd.f32 %v2263, %v2440
        %v2470 = vadd.f32 %v2264, %v2442
        %v2471 = vadd.f32 %v2265, %v2444
        %v2472 = vadd.f32 %v2266, %v2448
        %v2473 = vadd.f32 %v2267, %v2450
        %v2474 = vadd.f32 %v2268, %v2452
        %v2475 = vadd.f32 %v2269, %v2454
        %s2476 = scalar_lea.vmem %s4, 160
        %v2477 = vld [vmem:[%s2476] sm:$0xf]
        %v2478 = vld [vmem:[%s2476 + $0x4] sm:$0xf]
        %v2479 = vld [vmem:[%s2476 + $0x8] sm:$0xf]
        %v2480 = vld [vmem:[%s2476 + $0xc] sm:$0xf]
        %v2481 = vld [vmem:[%s2476 + $0x10] sm:$0xf]
        %v2482 = vld [vmem:[%s2476 + $0x14] sm:$0xf]
        %v2483 = vld [vmem:[%s2476 + $0x18] sm:$0xf]
        %v2484 = vld [vmem:[%s2476 + $0x1c] sm:$0xf]
        %v2485 = vld [vmem:[%s2476 + $0x20] sm:$0xf]
        %v2486 = vld [vmem:[%s2476 + $0x24] sm:$0xf]
        %v2487 = vpack.c.bf16 %v1683, %v1681
        %v2488 = vpack.c.bf16 %v1684, %v1682
        %v2489 = vpack.c.bf16 %v1687, %v1685
        %v2490 = vpack.c.bf16 %v1688, %v1686
        %v2491 = vpack.c.bf16 %v1689, %v1689
        %v2492 = vpack.c.bf16 %v1690, %v1690
        %v2503 = vunpack.c.l.b16 %v2477
        %v2504 = vunpack.c.l.b16 %v2478
        %v2505 = vunpack.c.l.b16 %v2479
        %v2506 = vunpack.c.l.b16 %v2480
        %v2507 = vunpack.c.l.b16 %v2481
        %v2508 = vunpack.c.l.b16 %v2482
        %v2509 = vunpack.c.l.b16 %v2483
        %v2510 = vunpack.c.l.b16 %v2484
        %v2511 = vunpack.c.l.b16 %v2485
        %v2512 = vunpack.c.l.b16 %v2486
        %v2513 = vpack.c.b16 %v2504, %v2503
        %v2514 = vpack.c.b16 %v2506, %v2505
        %v2515 = vpack.c.b16 %v2508, %v2507
        %v2516 = vpack.c.b16 %v2510, %v2509
        %v2517 = vpack.c.b16 %v2512, %v2511
        %v2519 = vsel %vm1829, %v2513, 0
        %v2522 = vsel %vm1829, %v2514, 0
        %v2525 = vsel %vm1829, %v2515, 0
        %v2528 = vsel %vm1829, %v2516, 0
        %v2531 = vsel %vm1829, %v2517, 0
        %v2534 = vsel %vm1845, %v2491, 0
        %v2537 = vsel %vm1845, %v2492, 0
        %2539 = vmatprep.subr.bf16.mxu0 %v2488
        %2540 = vmatpush1.bf16.msra.mxu0 %v2487
        %2541 = vmatprep.subr.bf16.mxu0 %v2490
        %2542 = vmatpush1.bf16.msra.mxu0 %v2489
        %2543 = vmatprep.subr.bf16.mxu0 %v2537
        %2544 = vmatpush1.bf16.msra.mxu0 %v2534
        %2545 = vmatprep.subr.bf16.mxu0 0
        %2546 = vmatpush1.bf16.msra.mxu0 0
        %2547 = vmatprep.subr.bf16.mxu0 0
        %2548 = vmatpush1.bf16.msra.mxu0 0
        %2549 = vmatprep.subr.bf16.mxu0 0
        %2550 = vmatpush1.bf16.msra.mxu0 0
        %2551 = vmatprep.subr.bf16.mxu0 0
        %2552 = vmatpush1.bf16.msra.mxu0 0
        %2553 = vmatprep.subr.bf16.mxu0 0
        %2554 = vmatpush1.bf16.msra.mxu0 0
        %2555 = vmatprep.subr.bf16.mxu0 0
        %2556 = vmatpush1.bf16.msra.mxu0 0
        %2557 = vmatprep.subr.bf16.mxu0 0
        %2558 = vmatpush1.bf16.msra.mxu0 0
        %2559 = vmatprep.subr.bf16.mxu0 0
        %2560 = vmatpush1.bf16.msra.mxu0 0
        %2561 = vmatprep.subr.bf16.mxu0 0
        %2562 = vmatpush1.bf16.msra.mxu0 0
        %2563 = vmatprep.subr.bf16.mxu0 0
        %2564 = vmatpush1.bf16.msra.mxu0 0
        %2565 = vmatprep.subr.bf16.mxu0 0
        %2566 = vmatpush1.bf16.msra.mxu0 0
        %2567 = vmatprep.subr.bf16.mxu0 0
        %2568 = vmatpush1.bf16.msra.mxu0 0
        %2569 = vmatprep.subr.bf16.mxu0 0
        %2570 = vmatpush1.bf16.msra.mxu0 0
        %2571 = vmatprep.mubr.bf16.mxu0 0
        %2572 = vmatmul.mubr.bf16.gmra.mrb[0].mxu0 %v2519
        %v2573 = vpop.f32.mrb[0].mxu0
        %v2574 = vadd.f32 0.0, %v2573
        %v2575 = vpop.f32.mrb[0].mxu0
        %v2576 = vadd.f32 0.0, %v2575
        %v2577 = vpop.f32.mrb[0].mxu0
        %v2578 = vadd.f32 0.0, %v2577
        %v2579 = vpop.f32.mrb[0].mxu0
        %v2580 = vadd.f32 0.0, %v2579
        %2581 = vmatprep.mubr.bf16.mxu0 0
        %2582 = vmatmul.mubr.bf16.gmra.mrb[0].mxu0 %v2522
        %v2583 = vpop.f32.mrb[0].mxu0
        %v2584 = vadd.f32 0.0, %v2583
        %v2585 = vpop.f32.mrb[0].mxu0
        %v2586 = vadd.f32 0.0, %v2585
        %v2587 = vpop.f32.mrb[0].mxu0
        %v2588 = vadd.f32 0.0, %v2587
        %v2589 = vpop.f32.mrb[0].mxu0
        %v2590 = vadd.f32 0.0, %v2589
        %2591 = vmatprep.mubr.bf16.mxu0 0
        %2592 = vmatmul.mubr.bf16.gmra.mrb[0].mxu0 %v2525
        %v2593 = vpop.f32.mrb[0].mxu0
        %v2594 = vadd.f32 0.0, %v2593
        %v2595 = vpop.f32.mrb[0].mxu0
        %v2596 = vadd.f32 0.0, %v2595
        %v2597 = vpop.f32.mrb[0].mxu0
        %v2598 = vadd.f32 0.0, %v2597
        %v2599 = vpop.f32.mrb[0].mxu0
        %v2600 = vadd.f32 0.0, %v2599
        %2601 = vmatprep.mubr.bf16.mxu0 0
        %2602 = vmatmul.mubr.bf16.gmra.mrb[0].mxu0 %v2528
        %v2603 = vpop.f32.mrb[0].mxu0
        %v2604 = vadd.f32 0.0, %v2603
        %v2605 = vpop.f32.mrb[0].mxu0
        %v2606 = vadd.f32 0.0, %v2605
        %v2607 = vpop.f32.mrb[0].mxu0
        %v2608 = vadd.f32 0.0, %v2607
        %v2609 = vpop.f32.mrb[0].mxu0
        %v2610 = vadd.f32 0.0, %v2609
        %2611 = vmatprep.mubr.bf16.mxu0 0
        %2612 = vmatmul.mubr.bf16.gmra.mrb[0].mxu0 %v2531
        %v2613 = vpop.f32.mrb[0].mxu0
        %v2614 = vadd.f32 0.0, %v2613
        %v2615 = vpop.f32.mrb[0].mxu0
        %v2616 = vadd.f32 0.0, %v2615
        %v2617 = vpop.f32.mrb[0].mxu0
        %v2618 = vadd.f32 0.0, %v2617
        %v2619 = vpop.f32.mrb[0].mxu0
        %v2620 = vadd.f32 0.0, %v2619
        %2621 = vdwg.mxu0
        %v2622 = vadd.f32 %v2456, %v2574
        %v2623 = vadd.f32 %v2457, %v2576
        %v2624 = vadd.f32 %v2458, %v2578
        %v2625 = vadd.f32 %v2459, %v2580
        %v2626 = vadd.f32 %v2460, %v2584
        %v2627 = vadd.f32 %v2461, %v2586
        %v2628 = vadd.f32 %v2462, %v2588
        %v2629 = vadd.f32 %v2463, %v2590
        %v2630 = vadd.f32 %v2464, %v2594
        %v2631 = vadd.f32 %v2465, %v2596
        %v2632 = vadd.f32 %v2466, %v2598
        %v2633 = vadd.f32 %v2467, %v2600
        %v2634 = vadd.f32 %v2468, %v2604
        %v2635 = vadd.f32 %v2469, %v2606
        %v2636 = vadd.f32 %v2470, %v2608
        %v2637 = vadd.f32 %v2471, %v2610
        %v2638 = vadd.f32 %v2472, %v2614
        %v2639 = vadd.f32 %v2473, %v2616
        %v2640 = vadd.f32 %v2474, %v2618
        %v2641 = vadd.f32 %v2475, %v2620
        %2642 = vrot.lane.b32.xlu0 %v1681, 127
        %v2643 = vpop.permute.xlu0 %2642
        %2644 = vrot.lane.b32.xlu0 %v1683, 127
        %v2645 = vpop.permute.xlu0 %2644
        %2646 = vrot.lane.b32.xlu0 %v1685, 127
        %v2647 = vpop.permute.xlu0 %2646
        %2648 = vrot.lane.b32.xlu0 %v1687, 127
        %v2649 = vpop.permute.xlu0 %2648
        %2650 = vrot.lane.b32.xlu0 %v1689, 127
        %v2651 = vpop.permute.xlu0 %2650
        %2652 = vrot.lane.b32.xlu0 %v1682, 127
        %v2653 = vpop.permute.xlu0 %2652
        %2654 = vrot.lane.b32.xlu0 %v1684, 127
        %v2655 = vpop.permute.xlu0 %2654
        %2656 = vrot.lane.b32.xlu0 %v1686, 127
        %v2657 = vpop.permute.xlu0 %2656
        %2658 = vrot.lane.b32.xlu0 %v1688, 127
        %v2659 = vpop.permute.xlu0 %2658
        %2660 = vrot.lane.b32.xlu0 %v1690, 127
        %v2661 = vpop.permute.xlu0 %2660
        %v2662 = vsel %vm1101, %v2643, %v2653
        %v2663 = vsel %vm1101, %v2645, %v2655
        %v2664 = vsel %vm1101, %v2647, %v2657
        %v2665 = vsel %vm1101, %v2649, %v2659
        %v2666 = vsel %vm1101, %v2651, %v2661
        %v2667 = vsel %vm1101, %v2653, %v2643
        %v2668 = vsel %vm1101, %v2655, %v2645
        %v2669 = vsel %vm1101, %v2657, %v2647
        %v2670 = vsel %vm1101, %v2659, %v2649
        %v2671 = vsel %vm1101, %v2661, %v2651
        %v2672 = vmul.f32 %v2662, %v1112
        %v2673 = vmul.f32 %v2667, %v1116
        %v2674 = vmul.f32 %v2663, %v1112
        %v2675 = vmul.f32 %v2668, %v1116
        %v2676 = vmul.f32 %v2664, %v1112
        %v2677 = vmul.f32 %v2669, %v1116
        %v2678 = vmul.f32 %v2665, %v1112
        %v2679 = vmul.f32 %v2670, %v1116
        %v2680 = vmul.f32 %v2666, %v1112
        %v2681 = vmul.f32 %v2671, %v1116
        %s2682 = scalar_lea.vmem %s4, 200
        %v2683 = vld [vmem:[%s2682] sm:$0xf]
        %v2684 = vld [vmem:[%s2682 + $0x4] sm:$0xf]
        %v2685 = vld [vmem:[%s2682 + $0x8] sm:$0xf]
        %v2686 = vld [vmem:[%s2682 + $0xc] sm:$0xf]
        %v2687 = vld [vmem:[%s2682 + $0x10] sm:$0xf]
        %v2688 = vld [vmem:[%s2682 + $0x14] sm:$0xf]
        %v2689 = vld [vmem:[%s2682 + $0x18] sm:$0xf]
        %v2690 = vld [vmem:[%s2682 + $0x1c] sm:$0xf]
        %v2691 = vld [vmem:[%s2682 + $0x20] sm:$0xf]
        %v2692 = vld [vmem:[%s2682 + $0x24] sm:$0xf]
        %v2693 = vpack.c.bf16 %v2674, %v2672
        %v2694 = vpack.c.bf16 %v2675, %v2673
        %v2695 = vpack.c.bf16 %v2678, %v2676
        %v2696 = vpack.c.bf16 %v2679, %v2677
        %v2697 = vpack.c.bf16 %v2680, %v2680
        %v2698 = vpack.c.bf16 %v2681, %v2681
        %v2709 = vunpack.c.l.b16 %v2683
        %v2710 = vunpack.c.l.b16 %v2684
        %v2711 = vunpack.c.l.b16 %v2685
        %v2712 = vunpack.c.l.b16 %v2686
        %v2713 = vunpack.c.l.b16 %v2687
        %v2714 = vunpack.c.l.b16 %v2688
        %v2715 = vunpack.c.l.b16 %v2689
        %v2716 = vunpack.c.l.b16 %v2690
        %v2717 = vunpack.c.l.b16 %v2691
        %v2718 = vunpack.c.l.b16 %v2692
        %v2719 = vpack.c.b16 %v2710, %v2709
        %v2720 = vpack.c.b16 %v2712, %v2711
        %v2721 = vpack.c.b16 %v2714, %v2713
        %v2722 = vpack.c.b16 %v2716, %v2715
        %v2723 = vpack.c.b16 %v2718, %v2717
        %v2725 = vsel %vm1829, %v2719, 0
        %v2728 = vsel %vm1829, %v2720, 0
        %v2731 = vsel %vm1829, %v2721, 0
        %v2734 = vsel %vm1829, %v2722, 0
        %v2737 = vsel %vm1829, %v2723, 0
        %v2740 = vsel %vm1845, %v2697, 0
        %v2743 = vsel %vm1845, %v2698, 0
        %2745 = vmatprep.subr.bf16.mxu0 %v2694
        %2746 = vmatpush1.bf16.msra.mxu0 %v2693
        %2747 = vmatprep.subr.bf16.mxu0 %v2696
        %2748 = vmatpush1.bf16.msra.mxu0 %v2695
        %2749 = vmatprep.subr.bf16.mxu0 %v2743
        %2750 = vmatpush1.bf16.msra.mxu0 %v2740
        %2751 = vmatprep.subr.bf16.mxu0 0
        %2752 = vmatpush1.bf16.msra.mxu0 0
        %2753 = vmatprep.subr.bf16.mxu0 0
        %2754 = vmatpush1.bf16.msra.mxu0 0
        %2755 = vmatprep.subr.bf16.mxu0 0
        %2756 = vmatpush1.bf16.msra.mxu0 0
        %2757 = vmatprep.subr.bf16.mxu0 0
        %2758 = vmatpush1.bf16.msra.mxu0 0
        %2759 = vmatprep.subr.bf16.mxu0 0
        %2760 = vmatpush1.bf16.msra.mxu0 0
        %2761 = vmatprep.subr.bf16.mxu0 0
        %2762 = vmatpush1.bf16.msra.mxu0 0
        %2763 = vmatprep.subr.bf16.mxu0 0
        %2764 = vmatpush1.bf16.msra.mxu0 0
        %2765 = vmatprep.subr.bf16.mxu0 0
        %2766 = vmatpush1.bf16.msra.mxu0 0
        %2767 = vmatprep.subr.bf16.mxu0 0
        %2768 = vmatpush1.bf16.msra.mxu0 0
        %2769 = vmatprep.subr.bf16.mxu0 0
        %2770 = vmatpush1.bf16.msra.mxu0 0
        %2771 = vmatprep.subr.bf16.mxu0 0
        %2772 = vmatpush1.bf16.msra.mxu0 0
        %2773 = vmatprep.subr.bf16.mxu0 0
        %2774 = vmatpush1.bf16.msra.mxu0 0
        %2775 = vmatprep.subr.bf16.mxu0 0
        %2776 = vmatpush1.bf16.msra.mxu0 0
        %2777 = vmatprep.mubr.bf16.mxu0 0
        %2778 = vmatmul.mubr.bf16.gmra.mrb[0].mxu0 %v2725
        %v2779 = vpop.f32.mrb[0].mxu0
        %v2780 = vadd.f32 0.0, %v2779
        %v2781 = vpop.f32.mrb[0].mxu0
        %v2782 = vadd.f32 0.0, %v2781
        %v2783 = vpop.f32.mrb[0].mxu0
        %v2784 = vadd.f32 0.0, %v2783
        %v2785 = vpop.f32.mrb[0].mxu0
        %v2786 = vadd.f32 0.0, %v2785
        %2787 = vmatprep.mubr.bf16.mxu0 0
        %2788 = vmatmul.mubr.bf16.gmra.mrb[0].mxu0 %v2728
        %v2789 = vpop.f32.mrb[0].mxu0
        %v2790 = vadd.f32 0.0, %v2789
        %v2791 = vpop.f32.mrb[0].mxu0
        %v2792 = vadd.f32 0.0, %v2791
        %v2793 = vpop.f32.mrb[0].mxu0
        %v2794 = vadd.f32 0.0, %v2793
        %v2795 = vpop.f32.mrb[0].mxu0
        %v2796 = vadd.f32 0.0, %v2795
        %2797 = vmatprep.mubr.bf16.mxu0 0
        %2798 = vmatmul.mubr.bf16.gmra.mrb[0].mxu0 %v2731
        %v2799 = vpop.f32.mrb[0].mxu0
        %v2800 = vadd.f32 0.0, %v2799
        %v2801 = vpop.f32.mrb[0].mxu0
        %v2802 = vadd.f32 0.0, %v2801
        %v2803 = vpop.f32.mrb[0].mxu0
        %v2804 = vadd.f32 0.0, %v2803
        %v2805 = vpop.f32.mrb[0].mxu0
        %v2806 = vadd.f32 0.0, %v2805
        %2807 = vmatprep.mubr.bf16.mxu0 0
        %2808 = vmatmul.mubr.bf16.gmra.mrb[0].mxu0 %v2734
        %v2809 = vpop.f32.mrb[0].mxu0
        %v2810 = vadd.f32 0.0, %v2809
        %v2811 = vpop.f32.mrb[0].mxu0
        %v2812 = vadd.f32 0.0, %v2811
        %v2813 = vpop.f32.mrb[0].mxu0
        %v2814 = vadd.f32 0.0, %v2813
        %v2815 = vpop.f32.mrb[0].mxu0
        %v2816 = vadd.f32 0.0, %v2815
        %2817 = vmatprep.mubr.bf16.mxu0 0
        %2818 = vmatmul.mubr.bf16.gmra.mrb[0].mxu0 %v2737
        %v2819 = vpop.f32.mrb[0].mxu0
        %v2820 = vadd.f32 0.0, %v2819
        %v2821 = vpop.f32.mrb[0].mxu0
        %v2822 = vadd.f32 0.0, %v2821
        %v2823 = vpop.f32.mrb[0].mxu0
        %v2824 = vadd.f32 0.0, %v2823
        %v2825 = vpop.f32.mrb[0].mxu0
        %v2826 = vadd.f32 0.0, %v2825
        %2827 = vdwg.mxu0
        %v2828 = vadd.f32 %v2622, %v2780
        %v2829 = vadd.f32 %v2623, %v2782
        %v2830 = vadd.f32 %v2624, %v2784
        %v2831 = vadd.f32 %v2625, %v2786
        %v2832 = vadd.f32 %v2626, %v2790
        %v2833 = vadd.f32 %v2627, %v2792
        %v2834 = vadd.f32 %v2628, %v2794
        %v2835 = vadd.f32 %v2629, %v2796
        %v2836 = vadd.f32 %v2630, %v2800
        %v2837 = vadd.f32 %v2631, %v2802
        %v2838 = vadd.f32 %v2632, %v2804
        %v2839 = vadd.f32 %v2633, %v2806
        %v2840 = vadd.f32 %v2634, %v2810
        %v2841 = vadd.f32 %v2635, %v2812
        %v2842 = vadd.f32 %v2636, %v2814
        %v2843 = vadd.f32 %v2637, %v2816
        %v2844 = vadd.f32 %v2638, %v2820
        %v2845 = vadd.f32 %v2639, %v2822
        %v2846 = vadd.f32 %v2640, %v2824
        %v2847 = vadd.f32 %v2641, %v2826
        %2848 = vrot.lane.b32.xlu0 %v1681, 113
        %v2849 = vpop.permute.xlu0 %2848
        %2850 = vrot.lane.b32.xlu0 %v1683, 113
        %v2851 = vpop.permute.xlu0 %2850
        %2852 = vrot.lane.b32.xlu0 %v1685, 113
        %v2853 = vpop.permute.xlu0 %2852
        %2854 = vrot.lane.b32.xlu0 %v1687, 113
        %v2855 = vpop.permute.xlu0 %2854
        %2856 = vrot.lane.b32.xlu0 %v1689, 113
        %v2857 = vpop.permute.xlu0 %2856
        %2858 = vrot.lane.b32.xlu0 %v1682, 113
        %v2859 = vpop.permute.xlu0 %2858
        %2860 = vrot.lane.b32.xlu0 %v1684, 113
        %v2861 = vpop.permute.xlu0 %2860
        %2862 = vrot.lane.b32.xlu0 %v1686, 113
        %v2863 = vpop.permute.xlu0 %2862
        %2864 = vrot.lane.b32.xlu0 %v1688, 113
        %v2865 = vpop.permute.xlu0 %2864
        %2866 = vrot.lane.b32.xlu0 %v1690, 113
        %v2867 = vpop.permute.xlu0 %2866
        %v2868 = vsel %vm1238, %v2849, %v2859
        %v2869 = vsel %vm1238, %v2851, %v2861
        %v2870 = vsel %vm1238, %v2853, %v2863
        %v2871 = vsel %vm1238, %v2855, %v2865
        %v2872 = vsel %vm1238, %v2857, %v2867
        %v2873 = vsel %vm1238, %v2859, %v2849
        %v2874 = vsel %vm1238, %v2861, %v2851
        %v2875 = vsel %vm1238, %v2863, %v2853
        %v2876 = vsel %vm1238, %v2865, %v2855
        %v2877 = vsel %vm1238, %v2867, %v2857
        %v2878 = vmul.f32 %v2868, %v1249
        %v2879 = vmul.f32 %v2873, %v1253
        %v2880 = vmul.f32 %v2869, %v1249
        %v2881 = vmul.f32 %v2874, %v1253
        %v2882 = vmul.f32 %v2870, %v1249
        %v2883 = vmul.f32 %v2875, %v1253
        %v2884 = vmul.f32 %v2871, %v1249
        %v2885 = vmul.f32 %v2876, %v1253
        %v2886 = vmul.f32 %v2872, %v1249
        %v2887 = vmul.f32 %v2877, %v1253
        %s2888 = scalar_lea.vmem %s4, 240
        %v2889 = vld [vmem:[%s2888] sm:$0xf]
        %v2890 = vld [vmem:[%s2888 + $0x4] sm:$0xf]
        %v2891 = vld [vmem:[%s2888 + $0x8] sm:$0xf]
        %v2892 = vld [vmem:[%s2888 + $0xc] sm:$0xf]
        %v2893 = vld [vmem:[%s2888 + $0x10] sm:$0xf]
        %v2894 = vld [vmem:[%s2888 + $0x14] sm:$0xf]
        %v2895 = vld [vmem:[%s2888 + $0x18] sm:$0xf]
        %v2896 = vld [vmem:[%s2888 + $0x1c] sm:$0xf]
        %v2897 = vld [vmem:[%s2888 + $0x20] sm:$0xf]
        %v2898 = vld [vmem:[%s2888 + $0x24] sm:$0xf]
        %v2899 = vpack.c.bf16 %v2880, %v2878
        %v2900 = vpack.c.bf16 %v2881, %v2879
        %v2901 = vpack.c.bf16 %v2884, %v2882
        %v2902 = vpack.c.bf16 %v2885, %v2883
        %v2903 = vpack.c.bf16 %v2886, %v2886
        %v2904 = vpack.c.bf16 %v2887, %v2887
        %v2915 = vunpack.c.l.b16 %v2889
        %v2916 = vunpack.c.l.b16 %v2890
        %v2917 = vunpack.c.l.b16 %v2891
        %v2918 = vunpack.c.l.b16 %v2892
        %v2919 = vunpack.c.l.b16 %v2893
        %v2920 = vunpack.c.l.b16 %v2894
        %v2921 = vunpack.c.l.b16 %v2895
        %v2922 = vunpack.c.l.b16 %v2896
        %v2923 = vunpack.c.l.b16 %v2897
        %v2924 = vunpack.c.l.b16 %v2898
        %v2925 = vpack.c.b16 %v2916, %v2915
        %v2926 = vpack.c.b16 %v2918, %v2917
        %v2927 = vpack.c.b16 %v2920, %v2919
        %v2928 = vpack.c.b16 %v2922, %v2921
        %v2929 = vpack.c.b16 %v2924, %v2923
        %v2931 = vsel %vm1829, %v2925, 0
        %v2934 = vsel %vm1829, %v2926, 0
        %v2937 = vsel %vm1829, %v2927, 0
        %v2940 = vsel %vm1829, %v2928, 0
        %v2943 = vsel %vm1829, %v2929, 0
        %v2946 = vsel %vm1845, %v2903, 0
        %v2949 = vsel %vm1845, %v2904, 0
        %2951 = vmatprep.subr.bf16.mxu0 %v2900
        %2952 = vmatpush1.bf16.msra.mxu0 %v2899
        %2953 = vmatprep.subr.bf16.mxu0 %v2902
        %2954 = vmatpush1.bf16.msra.mxu0 %v2901
        %2955 = vmatprep.subr.bf16.mxu0 %v2949
        %2956 = vmatpush1.bf16.msra.mxu0 %v2946
        %2957 = vmatprep.subr.bf16.mxu0 0
        %2958 = vmatpush1.bf16.msra.mxu0 0
        %2959 = vmatprep.subr.bf16.mxu0 0
        %2960 = vmatpush1.bf16.msra.mxu0 0
        %2961 = vmatprep.subr.bf16.mxu0 0
        %2962 = vmatpush1.bf16.msra.mxu0 0
        %2963 = vmatprep.subr.bf16.mxu0 0
        %2964 = vmatpush1.bf16.msra.mxu0 0
        %2965 = vmatprep.subr.bf16.mxu0 0
        %2966 = vmatpush1.bf16.msra.mxu0 0
        %2967 = vmatprep.subr.bf16.mxu0 0
        %2968 = vmatpush1.bf16.msra.mxu0 0
        %2969 = vmatprep.subr.bf16.mxu0 0
        %2970 = vmatpush1.bf16.msra.mxu0 0
        %2971 = vmatprep.subr.bf16.mxu0 0
        %2972 = vmatpush1.bf16.msra.mxu0 0
        %2973 = vmatprep.subr.bf16.mxu0 0
        %2974 = vmatpush1.bf16.msra.mxu0 0
        %2975 = vmatprep.subr.bf16.mxu0 0
        %2976 = vmatpush1.bf16.msra.mxu0 0
        %2977 = vmatprep.subr.bf16.mxu0 0
        %2978 = vmatpush1.bf16.msra.mxu0 0
        %2979 = vmatprep.subr.bf16.mxu0 0
        %2980 = vmatpush1.bf16.msra.mxu0 0
        %2981 = vmatprep.subr.bf16.mxu0 0
        %2982 = vmatpush1.bf16.msra.mxu0 0
        %2983 = vmatprep.mubr.bf16.mxu0 0
        %2984 = vmatmul.mubr.bf16.gmra.mrb[0].mxu0 %v2931
        %v2985 = vpop.f32.mrb[0].mxu0
        %v2986 = vadd.f32 0.0, %v2985
        %v2987 = vpop.f32.mrb[0].mxu0
        %v2988 = vadd.f32 0.0, %v2987
        %v2989 = vpop.f32.mrb[0].mxu0
        %v2990 = vadd.f32 0.0, %v2989
        %v2991 = vpop.f32.mrb[0].mxu0
        %v2992 = vadd.f32 0.0, %v2991
        %2993 = vmatprep.mubr.bf16.mxu0 0
        %2994 = vmatmul.mubr.bf16.gmra.mrb[0].mxu0 %v2934
        %v2995 = vpop.f32.mrb[0].mxu0
        %v2996 = vadd.f32 0.0, %v2995
        %v2997 = vpop.f32.mrb[0].mxu0
        %v2998 = vadd.f32 0.0, %v2997
        %v2999 = vpop.f32.mrb[0].mxu0
        %v3000 = vadd.f32 0.0, %v2999
        %v3001 = vpop.f32.mrb[0].mxu0
        %v3002 = vadd.f32 0.0, %v3001
        %3003 = vmatprep.mubr.bf16.mxu0 0
        %3004 = vmatmul.mubr.bf16.gmra.mrb[0].mxu0 %v2937
        %v3005 = vpop.f32.mrb[0].mxu0
        %v3006 = vadd.f32 0.0, %v3005
        %v3007 = vpop.f32.mrb[0].mxu0
        %v3008 = vadd.f32 0.0, %v3007
        %v3009 = vpop.f32.mrb[0].mxu0
        %v3010 = vadd.f32 0.0, %v3009
        %v3011 = vpop.f32.mrb[0].mxu0
        %v3012 = vadd.f32 0.0, %v3011
        %3013 = vmatprep.mubr.bf16.mxu0 0
        %3014 = vmatmul.mubr.bf16.gmra.mrb[0].mxu0 %v2940
        %v3015 = vpop.f32.mrb[0].mxu0
        %v3016 = vadd.f32 0.0, %v3015
        %v3017 = vpop.f32.mrb[0].mxu0
        %v3018 = vadd.f32 0.0, %v3017
        %v3019 = vpop.f32.mrb[0].mxu0
        %v3020 = vadd.f32 0.0, %v3019
        %v3021 = vpop.f32.mrb[0].mxu0
        %v3022 = vadd.f32 0.0, %v3021
        %3023 = vmatprep.mubr.bf16.mxu0 0
        %3024 = vmatmul.mubr.bf16.gmra.mrb[0].mxu0 %v2943
        %v3025 = vpop.f32.mrb[0].mxu0
        %v3026 = vadd.f32 0.0, %v3025
        %v3027 = vpop.f32.mrb[0].mxu0
        %v3028 = vadd.f32 0.0, %v3027
        %v3029 = vpop.f32.mrb[0].mxu0
        %v3030 = vadd.f32 0.0, %v3029
        %v3031 = vpop.f32.mrb[0].mxu0
        %v3032 = vadd.f32 0.0, %v3031
        %3033 = vdwg.mxu0
        %v3034 = vadd.f32 %v2828, %v2986
        %v3035 = vadd.f32 %v2829, %v2988
        %v3036 = vadd.f32 %v2830, %v2990
        %v3037 = vadd.f32 %v2831, %v2992
        %v3038 = vadd.f32 %v2832, %v2996
        %v3039 = vadd.f32 %v2833, %v2998
        %v3040 = vadd.f32 %v2834, %v3000
        %v3041 = vadd.f32 %v2835, %v3002
        %v3042 = vadd.f32 %v2836, %v3006
        %v3043 = vadd.f32 %v2837, %v3008
        %v3044 = vadd.f32 %v2838, %v3010
        %v3045 = vadd.f32 %v2839, %v3012
        %v3046 = vadd.f32 %v2840, %v3016
        %v3047 = vadd.f32 %v2841, %v3018
        %v3048 = vadd.f32 %v2842, %v3020
        %v3049 = vadd.f32 %v2843, %v3022
        %v3050 = vadd.f32 %v2844, %v3026
        %v3051 = vadd.f32 %v2845, %v3028
        %v3052 = vadd.f32 %v2846, %v3030
        %v3053 = vadd.f32 %v2847, %v3032
        %3054 = vrot.lane.b32.xlu0 %v1681, 112
        %v3055 = vpop.permute.xlu0 %3054
        %3056 = vrot.lane.b32.xlu0 %v1683, 112
        %v3057 = vpop.permute.xlu0 %3056
        %3058 = vrot.lane.b32.xlu0 %v1685, 112
        %v3059 = vpop.permute.xlu0 %3058
        %3060 = vrot.lane.b32.xlu0 %v1687, 112
        %v3061 = vpop.permute.xlu0 %3060
        %3062 = vrot.lane.b32.xlu0 %v1689, 112
        %v3063 = vpop.permute.xlu0 %3062
        %3064 = vrot.lane.b32.xlu0 %v1682, 112
        %v3065 = vpop.permute.xlu0 %3064
        %3066 = vrot.lane.b32.xlu0 %v1684, 112
        %v3067 = vpop.permute.xlu0 %3066
        %3068 = vrot.lane.b32.xlu0 %v1686, 112
        %v3069 = vpop.permute.xlu0 %3068
        %3070 = vrot.lane.b32.xlu0 %v1688, 112
        %v3071 = vpop.permute.xlu0 %3070
        %3072 = vrot.lane.b32.xlu0 %v1690, 112
        %v3073 = vpop.permute.xlu0 %3072
        %v3074 = vsel %vm1375, %v3055, %v3065
        %v3075 = vsel %vm1375, %v3057, %v3067
        %v3076 = vsel %vm1375, %v3059, %v3069
        %v3077 = vsel %vm1375, %v3061, %v3071
        %v3078 = vsel %vm1375, %v3063, %v3073
        %v3079 = vsel %vm1375, %v3065, %v3055
        %v3080 = vsel %vm1375, %v3067, %v3057
        %v3081 = vsel %vm1375, %v3069, %v3059
        %v3082 = vsel %vm1375, %v3071, %v3061
        %v3083 = vsel %vm1375, %v3073, %v3063
        %v3084 = vmul.f32 %v3074, %v1386
        %v3085 = vmul.f32 %v3079, %v1390
        %v3086 = vmul.f32 %v3075, %v1386
        %v3087 = vmul.f32 %v3080, %v1390
        %v3088 = vmul.f32 %v3076, %v1386
        %v3089 = vmul.f32 %v3081, %v1390
        %v3090 = vmul.f32 %v3077, %v1386
        %v3091 = vmul.f32 %v3082, %v1390
        %v3092 = vmul.f32 %v3078, %v1386
        %v3093 = vmul.f32 %v3083, %v1390
        %s3094 = scalar_lea.vmem %s4, 280
        %v3095 = vld [vmem:[%s3094] sm:$0xf]
        %v3096 = vld [vmem:[%s3094 + $0x4] sm:$0xf]
        %v3097 = vld [vmem:[%s3094 + $0x8] sm:$0xf]
        %v3098 = vld [vmem:[%s3094 + $0xc] sm:$0xf]
        %v3099 = vld [vmem:[%s3094 + $0x10] sm:$0xf]
        %v3100 = vld [vmem:[%s3094 + $0x14] sm:$0xf]
        %v3101 = vld [vmem:[%s3094 + $0x18] sm:$0xf]
        %v3102 = vld [vmem:[%s3094 + $0x1c] sm:$0xf]
        %v3103 = vld [vmem:[%s3094 + $0x20] sm:$0xf]
        %v3104 = vld [vmem:[%s3094 + $0x24] sm:$0xf]
        %v3105 = vpack.c.bf16 %v3086, %v3084
        %v3106 = vpack.c.bf16 %v3087, %v3085
        %v3107 = vpack.c.bf16 %v3090, %v3088
        %v3108 = vpack.c.bf16 %v3091, %v3089
        %v3109 = vpack.c.bf16 %v3092, %v3092
        %v3110 = vpack.c.bf16 %v3093, %v3093
        %v3121 = vunpack.c.l.b16 %v3095
        %v3122 = vunpack.c.l.b16 %v3096
        %v3123 = vunpack.c.l.b16 %v3097
        %v3124 = vunpack.c.l.b16 %v3098
        %v3125 = vunpack.c.l.b16 %v3099
        %v3126 = vunpack.c.l.b16 %v3100
        %v3127 = vunpack.c.l.b16 %v3101
        %v3128 = vunpack.c.l.b16 %v3102
        %v3129 = vunpack.c.l.b16 %v3103
        %v3130 = vunpack.c.l.b16 %v3104
        %v3131 = vpack.c.b16 %v3122, %v3121
        %v3132 = vpack.c.b16 %v3124, %v3123
        %v3133 = vpack.c.b16 %v3126, %v3125
        %v3134 = vpack.c.b16 %v3128, %v3127
        %v3135 = vpack.c.b16 %v3130, %v3129
        %v3137 = vsel %vm1829, %v3131, 0
        %v3140 = vsel %vm1829, %v3132, 0
        %v3143 = vsel %vm1829, %v3133, 0
        %v3146 = vsel %vm1829, %v3134, 0
        %v3149 = vsel %vm1829, %v3135, 0
        %v3152 = vsel %vm1845, %v3109, 0
        %v3155 = vsel %vm1845, %v3110, 0
        %3157 = vmatprep.subr.bf16.mxu0 %v3106
        %3158 = vmatpush1.bf16.msra.mxu0 %v3105
        %3159 = vmatprep.subr.bf16.mxu0 %v3108
        %3160 = vmatpush1.bf16.msra.mxu0 %v3107
        %3161 = vmatprep.subr.bf16.mxu0 %v3155
        %3162 = vmatpush1.bf16.msra.mxu0 %v3152
        %3163 = vmatprep.subr.bf16.mxu0 0
        %3164 = vmatpush1.bf16.msra.mxu0 0
        %3165 = vmatprep.subr.bf16.mxu0 0
        %3166 = vmatpush1.bf16.msra.mxu0 0
        %3167 = vmatprep.subr.bf16.mxu0 0
        %3168 = vmatpush1.bf16.msra.mxu0 0
        %3169 = vmatprep.subr.bf16.mxu0 0
        %3170 = vmatpush1.bf16.msra.mxu0 0
        %3171 = vmatprep.subr.bf16.mxu0 0
        %3172 = vmatpush1.bf16.msra.mxu0 0
        %3173 = vmatprep.subr.bf16.mxu0 0
        %3174 = vmatpush1.bf16.msra.mxu0 0
        %3175 = vmatprep.subr.bf16.mxu0 0
        %3176 = vmatpush1.bf16.msra.mxu0 0
        %3177 = vmatprep.subr.bf16.mxu0 0
        %3178 = vmatpush1.bf16.msra.mxu0 0
        %3179 = vmatprep.subr.bf16.mxu0 0
        %3180 = vmatpush1.bf16.msra.mxu0 0
        %3181 = vmatprep.subr.bf16.mxu0 0
        %3182 = vmatpush1.bf16.msra.mxu0 0
        %3183 = vmatprep.subr.bf16.mxu0 0
        %3184 = vmatpush1.bf16.msra.mxu0 0
        %3185 = vmatprep.subr.bf16.mxu0 0
        %3186 = vmatpush1.bf16.msra.mxu0 0
        %3187 = vmatprep.subr.bf16.mxu0 0
        %3188 = vmatpush1.bf16.msra.mxu0 0
        %3189 = vmatprep.mubr.bf16.mxu0 0
        %3190 = vmatmul.mubr.bf16.gmra.mrb[0].mxu0 %v3137
        %v3191 = vpop.f32.mrb[0].mxu0
        %v3192 = vadd.f32 0.0, %v3191
        %v3193 = vpop.f32.mrb[0].mxu0
        %v3194 = vadd.f32 0.0, %v3193
        %v3195 = vpop.f32.mrb[0].mxu0
        %v3196 = vadd.f32 0.0, %v3195
        %v3197 = vpop.f32.mrb[0].mxu0
        %v3198 = vadd.f32 0.0, %v3197
        %3199 = vmatprep.mubr.bf16.mxu0 0
        %3200 = vmatmul.mubr.bf16.gmra.mrb[0].mxu0 %v3140
        %v3201 = vpop.f32.mrb[0].mxu0
        %v3202 = vadd.f32 0.0, %v3201
        %v3203 = vpop.f32.mrb[0].mxu0
        %v3204 = vadd.f32 0.0, %v3203
        %v3205 = vpop.f32.mrb[0].mxu0
        %v3206 = vadd.f32 0.0, %v3205
        %v3207 = vpop.f32.mrb[0].mxu0
        %v3208 = vadd.f32 0.0, %v3207
        %3209 = vmatprep.mubr.bf16.mxu0 0
        %3210 = vmatmul.mubr.bf16.gmra.mrb[0].mxu0 %v3143
        %v3211 = vpop.f32.mrb[0].mxu0
        %v3212 = vadd.f32 0.0, %v3211
        %v3213 = vpop.f32.mrb[0].mxu0
        %v3214 = vadd.f32 0.0, %v3213
        %v3215 = vpop.f32.mrb[0].mxu0
        %v3216 = vadd.f32 0.0, %v3215
        %v3217 = vpop.f32.mrb[0].mxu0
        %v3218 = vadd.f32 0.0, %v3217
        %3219 = vmatprep.mubr.bf16.mxu0 0
        %3220 = vmatmul.mubr.bf16.gmra.mrb[0].mxu0 %v3146
        %v3221 = vpop.f32.mrb[0].mxu0
        %v3222 = vadd.f32 0.0, %v3221
        %v3223 = vpop.f32.mrb[0].mxu0
        %v3224 = vadd.f32 0.0, %v3223
        %v3225 = vpop.f32.mrb[0].mxu0
        %v3226 = vadd.f32 0.0, %v3225
        %v3227 = vpop.f32.mrb[0].mxu0
        %v3228 = vadd.f32 0.0, %v3227
        %3229 = vmatprep.mubr.bf16.mxu0 0
        %3230 = vmatmul.mubr.bf16.gmra.mrb[0].mxu0 %v3149
        %v3231 = vpop.f32.mrb[0].mxu0
        %v3232 = vadd.f32 0.0, %v3231
        %v3233 = vpop.f32.mrb[0].mxu0
        %v3234 = vadd.f32 0.0, %v3233
        %v3235 = vpop.f32.mrb[0].mxu0
        %v3236 = vadd.f32 0.0, %v3235
        %v3237 = vpop.f32.mrb[0].mxu0
        %v3238 = vadd.f32 0.0, %v3237
        %3239 = vdwg.mxu0
        %v3240 = vadd.f32 %v3034, %v3192
        %v3241 = vadd.f32 %v3035, %v3194
        %v3242 = vadd.f32 %v3036, %v3196
        %v3243 = vadd.f32 %v3037, %v3198
        %v3244 = vadd.f32 %v3038, %v3202
        %v3245 = vadd.f32 %v3039, %v3204
        %v3246 = vadd.f32 %v3040, %v3206
        %v3247 = vadd.f32 %v3041, %v3208
        %v3248 = vadd.f32 %v3042, %v3212
        %v3249 = vadd.f32 %v3043, %v3214
        %v3250 = vadd.f32 %v3044, %v3216
        %v3251 = vadd.f32 %v3045, %v3218
        %v3252 = vadd.f32 %v3046, %v3222
        %v3253 = vadd.f32 %v3047, %v3224
        %v3254 = vadd.f32 %v3048, %v3226
        %v3255 = vadd.f32 %v3049, %v3228
        %v3256 = vadd.f32 %v3050, %v3232
        %v3257 = vadd.f32 %v3051, %v3234
        %v3258 = vadd.f32 %v3052, %v3236
        %v3259 = vadd.f32 %v3053, %v3238
        %3260 = vrot.lane.b32.xlu0 %v1681, 111
        %v3261 = vpop.permute.xlu0 %3260
        %3262 = vrot.lane.b32.xlu0 %v1683, 111
        %v3263 = vpop.permute.xlu0 %3262
        %3264 = vrot.lane.b32.xlu0 %v1685, 111
        %v3265 = vpop.permute.xlu0 %3264
        %3266 = vrot.lane.b32.xlu0 %v1687, 111
        %v3267 = vpop.permute.xlu0 %3266
        %3268 = vrot.lane.b32.xlu0 %v1689, 111
        %v3269 = vpop.permute.xlu0 %3268
        %3270 = vrot.lane.b32.xlu0 %v1682, 111
        %v3271 = vpop.permute.xlu0 %3270
        %3272 = vrot.lane.b32.xlu0 %v1684, 111
        %v3273 = vpop.permute.xlu0 %3272
        %3274 = vrot.lane.b32.xlu0 %v1686, 111
        %v3275 = vpop.permute.xlu0 %3274
        %3276 = vrot.lane.b32.xlu0 %v1688, 111
        %v3277 = vpop.permute.xlu0 %3276
        %3278 = vrot.lane.b32.xlu0 %v1690, 111
        %v3279 = vpop.permute.xlu0 %3278
        %v3280 = vsel %vm1512, %v3261, %v3271
        %v3281 = vsel %vm1512, %v3263, %v3273
        %v3282 = vsel %vm1512, %v3265, %v3275
        %v3283 = vsel %vm1512, %v3267, %v3277
        %v3284 = vsel %vm1512, %v3269, %v3279
        %v3285 = vsel %vm1512, %v3271, %v3261
        %v3286 = vsel %vm1512, %v3273, %v3263
        %v3287 = vsel %vm1512, %v3275, %v3265
        %v3288 = vsel %vm1512, %v3277, %v3267
        %v3289 = vsel %vm1512, %v3279, %v3269
        %v3290 = vmul.f32 %v3280, %v1523
        %v3291 = vmul.f32 %v3285, %v1527
        %v3292 = vmul.f32 %v3281, %v1523
        %v3293 = vmul.f32 %v3286, %v1527
        %v3294 = vmul.f32 %v3282, %v1523
        %v3295 = vmul.f32 %v3287, %v1527
        %v3296 = vmul.f32 %v3283, %v1523
        %v3297 = vmul.f32 %v3288, %v1527
        %v3298 = vmul.f32 %v3284, %v1523
        %v3299 = vmul.f32 %v3289, %v1527
        %s3300 = scalar_lea.vmem %s4, 320
        %v3301 = vld [vmem:[%s3300] sm:$0xf]
        %v3302 = vld [vmem:[%s3300 + $0x4] sm:$0xf]
        %v3303 = vld [vmem:[%s3300 + $0x8] sm:$0xf]
        %v3304 = vld [vmem:[%s3300 + $0xc] sm:$0xf]
        %v3305 = vld [vmem:[%s3300 + $0x10] sm:$0xf]
        %v3306 = vld [vmem:[%s3300 + $0x14] sm:$0xf]
        %v3307 = vld [vmem:[%s3300 + $0x18] sm:$0xf]
        %v3308 = vld [vmem:[%s3300 + $0x1c] sm:$0xf]
        %v3309 = vld [vmem:[%s3300 + $0x20] sm:$0xf]
        %v3310 = vld [vmem:[%s3300 + $0x24] sm:$0xf]
        %v3311 = vpack.c.bf16 %v3292, %v3290
        %v3312 = vpack.c.bf16 %v3293, %v3291
        %v3313 = vpack.c.bf16 %v3296, %v3294
        %v3314 = vpack.c.bf16 %v3297, %v3295
        %v3315 = vpack.c.bf16 %v3298, %v3298
        %v3316 = vpack.c.bf16 %v3299, %v3299
        %v3327 = vunpack.c.l.b16 %v3301
        %v3328 = vunpack.c.l.b16 %v3302
        %v3329 = vunpack.c.l.b16 %v3303
        %v3330 = vunpack.c.l.b16 %v3304
        %v3331 = vunpack.c.l.b16 %v3305
        %v3332 = vunpack.c.l.b16 %v3306
        %v3333 = vunpack.c.l.b16 %v3307
        %v3334 = vunpack.c.l.b16 %v3308
        %v3335 = vunpack.c.l.b16 %v3309
        %v3336 = vunpack.c.l.b16 %v3310
        %v3337 = vpack.c.b16 %v3328, %v3327
        %v3338 = vpack.c.b16 %v3330, %v3329
        %v3339 = vpack.c.b16 %v3332, %v3331
        %v3340 = vpack.c.b16 %v3334, %v3333
        %v3341 = vpack.c.b16 %v3336, %v3335
        %v3343 = vsel %vm1829, %v3337, 0
        %v3346 = vsel %vm1829, %v3338, 0
        %v3349 = vsel %vm1829, %v3339, 0
        %v3352 = vsel %vm1829, %v3340, 0
        %v3355 = vsel %vm1829, %v3341, 0
        %v3358 = vsel %vm1845, %v3315, 0
        %v3361 = vsel %vm1845, %v3316, 0
        %3363 = vmatprep.subr.bf16.mxu0 %v3312
        %3364 = vmatpush1.bf16.msra.mxu0 %v3311
        %3365 = vmatprep.subr.bf16.mxu0 %v3314
        %3366 = vmatpush1.bf16.msra.mxu0 %v3313
        %3367 = vmatprep.subr.bf16.mxu0 %v3361
        %3368 = vmatpush1.bf16.msra.mxu0 %v3358
        %3369 = vmatprep.subr.bf16.mxu0 0
        %3370 = vmatpush1.bf16.msra.mxu0 0
        %3371 = vmatprep.subr.bf16.mxu0 0
        %3372 = vmatpush1.bf16.msra.mxu0 0
        %3373 = vmatprep.subr.bf16.mxu0 0
        %3374 = vmatpush1.bf16.msra.mxu0 0
        %3375 = vmatprep.subr.bf16.mxu0 0
        %3376 = vmatpush1.bf16.msra.mxu0 0
        %3377 = vmatprep.subr.bf16.mxu0 0
        %3378 = vmatpush1.bf16.msra.mxu0 0
        %3379 = vmatprep.subr.bf16.mxu0 0
        %3380 = vmatpush1.bf16.msra.mxu0 0
        %3381 = vmatprep.subr.bf16.mxu0 0
        %3382 = vmatpush1.bf16.msra.mxu0 0
        %3383 = vmatprep.subr.bf16.mxu0 0
        %3384 = vmatpush1.bf16.msra.mxu0 0
        %3385 = vmatprep.subr.bf16.mxu0 0
        %3386 = vmatpush1.bf16.msra.mxu0 0
        %3387 = vmatprep.subr.bf16.mxu0 0
        %3388 = vmatpush1.bf16.msra.mxu0 0
        %3389 = vmatprep.subr.bf16.mxu0 0
        %3390 = vmatpush1.bf16.msra.mxu0 0
        %3391 = vmatprep.subr.bf16.mxu0 0
        %3392 = vmatpush1.bf16.msra.mxu0 0
        %3393 = vmatprep.subr.bf16.mxu0 0
        %3394 = vmatpush1.bf16.msra.mxu0 0
        %3395 = vmatprep.mubr.bf16.mxu0 0
        %3396 = vmatmul.mubr.bf16.gmra.mrb[0].mxu0 %v3343
        %v3397 = vpop.f32.mrb[0].mxu0
        %v3398 = vadd.f32 0.0, %v3397
        %v3399 = vpop.f32.mrb[0].mxu0
        %v3400 = vadd.f32 0.0, %v3399
        %v3401 = vpop.f32.mrb[0].mxu0
        %v3402 = vadd.f32 0.0, %v3401
        %v3403 = vpop.f32.mrb[0].mxu0
        %v3404 = vadd.f32 0.0, %v3403
        %3405 = vmatprep.mubr.bf16.mxu0 0
        %3406 = vmatmul.mubr.bf16.gmra.mrb[0].mxu0 %v3346
        %v3407 = vpop.f32.mrb[0].mxu0
        %v3408 = vadd.f32 0.0, %v3407
        %v3409 = vpop.f32.mrb[0].mxu0
        %v3410 = vadd.f32 0.0, %v3409
        %v3411 = vpop.f32.mrb[0].mxu0
        %v3412 = vadd.f32 0.0, %v3411
        %v3413 = vpop.f32.mrb[0].mxu0
        %v3414 = vadd.f32 0.0, %v3413
        %3415 = vmatprep.mubr.bf16.mxu0 0
        %3416 = vmatmul.mubr.bf16.gmra.mrb[0].mxu0 %v3349
        %v3417 = vpop.f32.mrb[0].mxu0
        %v3418 = vadd.f32 0.0, %v3417
        %v3419 = vpop.f32.mrb[0].mxu0
        %v3420 = vadd.f32 0.0, %v3419
        %v3421 = vpop.f32.mrb[0].mxu0
        %v3422 = vadd.f32 0.0, %v3421
        %v3423 = vpop.f32.mrb[0].mxu0
        %v3424 = vadd.f32 0.0, %v3423
        %3425 = vmatprep.mubr.bf16.mxu0 0
        %3426 = vmatmul.mubr.bf16.gmra.mrb[0].mxu0 %v3352
        %v3427 = vpop.f32.mrb[0].mxu0
        %v3428 = vadd.f32 0.0, %v3427
        %v3429 = vpop.f32.mrb[0].mxu0
        %v3430 = vadd.f32 0.0, %v3429
        %v3431 = vpop.f32.mrb[0].mxu0
        %v3432 = vadd.f32 0.0, %v3431
        %v3433 = vpop.f32.mrb[0].mxu0
        %v3434 = vadd.f32 0.0, %v3433
        %3435 = vmatprep.mubr.bf16.mxu0 0
        %3436 = vmatmul.mubr.bf16.gmra.mrb[0].mxu0 %v3355
        %v3437 = vpop.f32.mrb[0].mxu0
        %v3438 = vadd.f32 0.0, %v3437
        %v3439 = vpop.f32.mrb[0].mxu0
        %v3440 = vadd.f32 0.0, %v3439
        %v3441 = vpop.f32.mrb[0].mxu0
        %v3442 = vadd.f32 0.0, %v3441
        %v3443 = vpop.f32.mrb[0].mxu0
        %v3444 = vadd.f32 0.0, %v3443
        %3445 = vdwg.mxu0
        %v3446 = vadd.f32 %v3240, %v3398
        %v3447 = vadd.f32 %v3241, %v3400
        %v3448 = vadd.f32 %v3242, %v3402
        %v3449 = vadd.f32 %v3243, %v3404
        %v3450 = vadd.f32 %v3244, %v3408
        %v3451 = vadd.f32 %v3245, %v3410
        %v3452 = vadd.f32 %v3246, %v3412
        %v3453 = vadd.f32 %v3247, %v3414
        %v3454 = vadd.f32 %v3248, %v3418
        %v3455 = vadd.f32 %v3249, %v3420
        %v3456 = vadd.f32 %v3250, %v3422
        %v3457 = vadd.f32 %v3251, %v3424
        %v3458 = vadd.f32 %v3252, %v3428
        %v3459 = vadd.f32 %v3253, %v3430
        %v3460 = vadd.f32 %v3254, %v3432
        %v3461 = vadd.f32 %v3255, %v3434
        %v3462 = vadd.f32 %v3256, %v3438
        %v3463 = vadd.f32 %v3257, %v3440
        %v3464 = vadd.f32 %v3258, %v3442
        %v3465 = vadd.f32 %v3259, %v3444
        %v3466 = vld [vmem:[%s5] sm:$0xff]
        %v3467 = vld [vmem:[%s5 + $0x8] sm:$0xff]
        %v3468 = vld [vmem:[%s5 + $0x10] sm:$0xff]
        %v3469 = vld [vmem:[%s5 + $0x18] sm:$0xff]
        %v3470 = vld [vmem:[%s5 + $0x20] sm:$0xff]
        %v3471 = vld [vmem:[%s5 + $0x28] sm:$0xff]
        %v3472 = vld [vmem:[%s5 + $0x30] sm:$0xff]
        %v3473 = vld [vmem:[%s5 + $0x38] sm:$0xff]
        %v3474 = vld [vmem:[%s5 + $0x40] sm:$0xff]
        %v3475 = vld [vmem:[%s5 + $0x48] sm:$0xff]
        %3477 = vset.pattern.permute.xlu0 0
        %3478 = vperm.xlu0 %3477, %v3466
        %v3479 = vpop.permute.xlu0 %3478
        %3482 = vset.pattern.permute.xlu0 0
        %3483 = vperm.xlu0 %3482, %v3467
        %v3484 = vpop.permute.xlu0 %3483
        %3487 = vset.pattern.permute.xlu0 0
        %3488 = vperm.xlu0 %3487, %v3468
        %v3489 = vpop.permute.xlu0 %3488
        %3492 = vset.pattern.permute.xlu0 0
        %3493 = vperm.xlu0 %3492, %v3469
        %v3494 = vpop.permute.xlu0 %3493
        %3497 = vset.pattern.permute.xlu0 0
        %3498 = vperm.xlu0 %3497, %v3470
        %v3499 = vpop.permute.xlu0 %3498
        %3502 = vset.pattern.permute.xlu0 0
        %3503 = vperm.xlu0 %3502, %v3471
        %v3504 = vpop.permute.xlu0 %3503
        %3507 = vset.pattern.permute.xlu0 0
        %3508 = vperm.xlu0 %3507, %v3472
        %v3509 = vpop.permute.xlu0 %3508
        %3512 = vset.pattern.permute.xlu0 0
        %3513 = vperm.xlu0 %3512, %v3473
        %v3514 = vpop.permute.xlu0 %3513
        %3517 = vset.pattern.permute.xlu0 0
        %3518 = vperm.xlu0 %3517, %v3474
        %v3519 = vpop.permute.xlu0 %3518
        %3522 = vset.pattern.permute.xlu0 0
        %3523 = vperm.xlu0 %3522, %v3475
        %v3524 = vpop.permute.xlu0 %3523
        %v3526 = vadd.f32 %v3446, %v3479
        %v3527 = vadd.f32 %v3447, %v3479
        %v3528 = vadd.f32 %v3448, %v3484
        %v3529 = vadd.f32 %v3449, %v3484
        %v3530 = vadd.f32 %v3450, %v3489
        %v3531 = vadd.f32 %v3451, %v3489
        %v3532 = vadd.f32 %v3452, %v3494
        %v3533 = vadd.f32 %v3453, %v3494
        %v3534 = vadd.f32 %v3454, %v3499
        %v3535 = vadd.f32 %v3455, %v3499
        %v3536 = vadd.f32 %v3456, %v3504
        %v3537 = vadd.f32 %v3457, %v3504
        %v3538 = vadd.f32 %v3458, %v3509
        %v3539 = vadd.f32 %v3459, %v3509
        %v3540 = vadd.f32 %v3460, %v3514
        %v3541 = vadd.f32 %v3461, %v3514
        %v3542 = vadd.f32 %v3462, %v3519
        %v3543 = vadd.f32 %v3463, %v3519
        %v3544 = vadd.f32 %v3464, %v3524
        %v3545 = vadd.f32 %v3465, %v3524
        %v3546 = vmax.f32 %v3526, 0.0
        %v3547 = vmax.f32 %v3527, 0.0
        %v3548 = vmax.f32 %v3528, 0.0
        %v3549 = vmax.f32 %v3529, 0.0
        %v3550 = vmax.f32 %v3530, 0.0
        %v3551 = vmax.f32 %v3531, 0.0
        %v3552 = vmax.f32 %v3532, 0.0
        %v3553 = vmax.f32 %v3533, 0.0
        %v3554 = vmax.f32 %v3534, 0.0
        %v3555 = vmax.f32 %v3535, 0.0
        %v3556 = vmax.f32 %v3536, 0.0
        %v3557 = vmax.f32 %v3537, 0.0
        %v3558 = vmax.f32 %v3538, 0.0
        %v3559 = vmax.f32 %v3539, 0.0
        %v3560 = vmax.f32 %v3540, 0.0
        %v3561 = vmax.f32 %v3541, 0.0
        %v3562 = vmax.f32 %v3542, 0.0
        %v3563 = vmax.f32 %v3543, 0.0
        %v3564 = vmax.f32 %v3544, 0.0
        %v3565 = vmax.f32 %v3545, 0.0
        %v3566 = vadd.f32 %v3550, %v3546
        %v3567 = vadd.f32 %v3551, %v3547
        %v3568 = vadd.f32 %v3552, %v3548
        %v3569 = vadd.f32 %v3553, %v3549
        %v3570 = vadd.f32 %v3554, %v3546
        %v3571 = vadd.f32 %v3555, %v3547
        %v3572 = vadd.f32 %v3556, %v3548
        %v3573 = vadd.f32 %v3557, %v3549
        %v3574 = vadd.f32 %v3558, %v3546
        %v3575 = vadd.f32 %v3559, %v3547
        %v3576 = vadd.f32 %v3560, %v3548
        %v3577 = vadd.f32 %v3561, %v3549
        %v3578 = vadd.f32 %v3562, %v3546
        %v3579 = vadd.f32 %v3563, %v3547
        %v3580 = vadd.f32 %v3564, %v3548
        %v3581 = vadd.f32 %v3565, %v3549
        %3582 = vrot.lane.b32.xlu0 %v3550, 17
        %v3583 = vpop.permute.xlu0 %3582
        %3584 = vrot.lane.b32.xlu0 %v3552, 17
        %v3585 = vpop.permute.xlu0 %3584
        %3586 = vrot.lane.b32.xlu0 %v3554, 17
        %v3587 = vpop.permute.xlu0 %3586
        %3588 = vrot.lane.b32.xlu0 %v3556, 17
        %v3589 = vpop.permute.xlu0 %3588
        %3590 = vrot.lane.b32.xlu0 %v3558, 17
        %v3591 = vpop.permute.xlu0 %3590
        %3592 = vrot.lane.b32.xlu0 %v3560, 17
        %v3593 = vpop.permute.xlu0 %3592
        %3594 = vrot.lane.b32.xlu0 %v3562, 17
        %v3595 = vpop.permute.xlu0 %3594
        %3596 = vrot.lane.b32.xlu0 %v3564, 17
        %v3597 = vpop.permute.xlu0 %3596
        %3598 = vrot.lane.b32.xlu0 %v3551, 17
        %v3599 = vpop.permute.xlu0 %3598
        %3600 = vrot.lane.b32.xlu0 %v3553, 17
        %v3601 = vpop.permute.xlu0 %3600
        %3602 = vrot.lane.b32.xlu0 %v3555, 17
        %v3603 = vpop.permute.xlu0 %3602
        %3604 = vrot.lane.b32.xlu0 %v3557, 17
        %v3605 = vpop.permute.xlu0 %3604
        %3606 = vrot.lane.b32.xlu0 %v3559, 17
        %v3607 = vpop.permute.xlu0 %3606
        %3608 = vrot.lane.b32.xlu0 %v3561, 17
        %v3609 = vpop.permute.xlu0 %3608
        %3610 = vrot.lane.b32.xlu0 %v3563, 17
        %v3611 = vpop.permute.xlu0 %3610
        %3612 = vrot.lane.b32.xlu0 %v3565, 17
        %v3613 = vpop.permute.xlu0 %3612
        %v3614 = vsel %vm466, %v3583, %v3599
        %v3615 = vsel %vm466, %v3585, %v3601
        %v3616 = vsel %vm466, %v3587, %v3603
        %v3617 = vsel %vm466, %v3589, %v3605
        %v3618 = vsel %vm466, %v3591, %v3607
        %v3619 = vsel %vm466, %v3593, %v3609
        %v3620 = vsel %vm466, %v3595, %v3611
        %v3621 = vsel %vm466, %v3597, %v3613
        %v3622 = vsel %vm466, %v3599, %v3583
        %v3623 = vsel %vm466, %v3601, %v3585
        %v3624 = vsel %vm466, %v3603, %v3587
        %v3625 = vsel %vm466, %v3605, %v3589
        %v3626 = vsel %vm466, %v3607, %v3591
        %v3627 = vsel %vm466, %v3609, %v3593
        %v3628 = vsel %vm466, %v3611, %v3595
        %v3629 = vsel %vm466, %v3613, %v3597
        %v3630 = vmul.f32 %v3622, %v476
        %v3631 = vmul.f32 %v3614, %v480
        %v3632 = vmul.f32 %v3623, %v476
        %v3633 = vmul.f32 %v3615, %v480
        %v3634 = vmul.f32 %v3624, %v476
        %v3635 = vmul.f32 %v3616, %v480
        %v3636 = vmul.f32 %v3625, %v476
        %v3637 = vmul.f32 %v3617, %v480
        %v3638 = vmul.f32 %v3626, %v476
        %v3639 = vmul.f32 %v3618, %v480
        %v3640 = vmul.f32 %v3627, %v476
        %v3641 = vmul.f32 %v3619, %v480
        %v3642 = vmul.f32 %v3628, %v476
        %v3643 = vmul.f32 %v3620, %v480
        %v3644 = vmul.f32 %v3629, %v476
        %v3645 = vmul.f32 %v3621, %v480
        %v3646 = vld [vmem:[%s6] sm:$0xf]
        %v3647 = vld [vmem:[%s6 + $0x4] sm:$0xf]
        %v3648 = vld [vmem:[%s6 + $0x8] sm:$0xf]
        %v3649 = vld [vmem:[%s6 + $0xc] sm:$0xf]
        %v3650 = vld [vmem:[%s6 + $0x10] sm:$0xf]
        %v3651 = vld [vmem:[%s6 + $0x14] sm:$0xf]
        %v3652 = vld [vmem:[%s6 + $0x18] sm:$0xf]
        %v3653 = vld [vmem:[%s6 + $0x1c] sm:$0xf]
        %v3654 = vpack.c.bf16 %v3632, %v3630
        %v3655 = vpack.c.bf16 %v3633, %v3631
        %v3656 = vpack.c.bf16 %v3636, %v3634
        %v3657 = vpack.c.bf16 %v3637, %v3635
        %v3658 = vpack.c.bf16 %v3640, %v3638
        %v3659 = vpack.c.bf16 %v3641, %v3639
        %v3660 = vpack.c.bf16 %v3644, %v3642
        %v3661 = vpack.c.bf16 %v3645, %v3643
        %3662 = vrot.lane.b32.xlu0 %v3550, 16
        %v3663 = vpop.permute.xlu0 %3662
        %3664 = vrot.lane.b32.xlu0 %v3552, 16
        %v3665 = vpop.permute.xlu0 %3664
        %3666 = vrot.lane.b32.xlu0 %v3554, 16
        %v3667 = vpop.permute.xlu0 %3666
        %3668 = vrot.lane.b32.xlu0 %v3556, 16
        %v3669 = vpop.permute.xlu0 %3668
        %3670 = vrot.lane.b32.xlu0 %v3558, 16
        %v3671 = vpop.permute.xlu0 %3670
        %3672 = vrot.lane.b32.xlu0 %v3560, 16
        %v3673 = vpop.permute.xlu0 %3672
        %3674 = vrot.lane.b32.xlu0 %v3562, 16
        %v3675 = vpop.permute.xlu0 %3674
        %3676 = vrot.lane.b32.xlu0 %v3564, 16
        %v3677 = vpop.permute.xlu0 %3676
        %3678 = vrot.lane.b32.xlu0 %v3551, 16
        %v3679 = vpop.permute.xlu0 %3678
        %3680 = vrot.lane.b32.xlu0 %v3553, 16
        %v3681 = vpop.permute.xlu0 %3680
        %3682 = vrot.lane.b32.xlu0 %v3555, 16
        %v3683 = vpop.permute.xlu0 %3682
        %3684 = vrot.lane.b32.xlu0 %v3557, 16
        %v3685 = vpop.permute.xlu0 %3684
        %3686 = vrot.lane.b32.xlu0 %v3559, 16
        %v3687 = vpop.permute.xlu0 %3686
        %3688 = vrot.lane.b32.xlu0 %v3561, 16
        %v3689 = vpop.permute.xlu0 %3688
        %3690 = vrot.lane.b32.xlu0 %v3563, 16
        %v3691 = vpop.permute.xlu0 %3690
        %3692 = vrot.lane.b32.xlu0 %v3565, 16
        %v3693 = vpop.permute.xlu0 %3692
        %v3694 = vsel %vm502, %v3663, %v3679
        %v3695 = vsel %vm502, %v3665, %v3681
        %v3696 = vsel %vm502, %v3667, %v3683
        %v3697 = vsel %vm502, %v3669, %v3685
        %v3698 = vsel %vm502, %v3671, %v3687
        %v3699 = vsel %vm502, %v3673, %v3689
        %v3700 = vsel %vm502, %v3675, %v3691
        %v3701 = vsel %vm502, %v3677, %v3693
        %v3702 = vsel %vm502, %v3679, %v3663
        %v3703 = vsel %vm502, %v3681, %v3665
        %v3704 = vsel %vm502, %v3683, %v3667
        %v3705 = vsel %vm502, %v3685, %v3669
        %v3706 = vsel %vm502, %v3687, %v3671
        %v3707 = vsel %vm502, %v3689, %v3673
        %v3708 = vsel %vm502, %v3691, %v3675
        %v3709 = vsel %vm502, %v3693, %v3677
        %v3710 = vmul.f32 %v3702, %v513
        %v3711 = vmul.f32 %v3694, %v517
        %v3712 = vmul.f32 %v3703, %v513
        %v3713 = vmul.f32 %v3695, %v517
        %v3714 = vmul.f32 %v3704, %v513
        %v3715 = vmul.f32 %v3696, %v517
        %v3716 = vmul.f32 %v3705, %v513
        %v3717 = vmul.f32 %v3697, %v517
        %v3718 = vmul.f32 %v3706, %v513
        %v3719 = vmul.f32 %v3698, %v517
        %v3720 = vmul.f32 %v3707, %v513
        %v3721 = vmul.f32 %v3699, %v517
        %v3722 = vmul.f32 %v3708, %v513
        %v3723 = vmul.f32 %v3700, %v517
        %v3724 = vmul.f32 %v3709, %v513
        %v3725 = vmul.f32 %v3701, %v517
        %s3726 = scalar_lea.vmem %s6, 32
        %v3727 = vld [vmem:[%s3726] sm:$0xf]
        %v3728 = vld [vmem:[%s3726 + $0x4] sm:$0xf]
        %v3729 = vld [vmem:[%s3726 + $0x8] sm:$0xf]
        %v3730 = vld [vmem:[%s3726 + $0xc] sm:$0xf]
        %v3731 = vld [vmem:[%s3726 + $0x10] sm:$0xf]
        %v3732 = vld [vmem:[%s3726 + $0x14] sm:$0xf]
        %v3733 = vld [vmem:[%s3726 + $0x18] sm:$0xf]
        %v3734 = vld [vmem:[%s3726 + $0x1c] sm:$0xf]
        %v3735 = vpack.c.bf16 %v3712, %v3710
        %v3736 = vpack.c.bf16 %v3713, %v3711
        %v3737 = vpack.c.bf16 %v3716, %v3714
        %v3738 = vpack.c.bf16 %v3717, %v3715
        %v3739 = vpack.c.bf16 %v3720, %v3718
        %v3740 = vpack.c.bf16 %v3721, %v3719
        %v3741 = vpack.c.bf16 %v3724, %v3722
        %v3742 = vpack.c.bf16 %v3725, %v3723
        %v3751 = vunpack.c.l.b16 %v3727
        %v3752 = vunpack.c.l.b16 %v3728
        %v3753 = vunpack.c.l.b16 %v3729
        %v3754 = vunpack.c.l.b16 %v3730
        %v3755 = vunpack.c.l.b16 %v3731
        %v3756 = vunpack.c.l.b16 %v3732
        %v3757 = vunpack.c.l.b16 %v3733
        %v3758 = vunpack.c.l.b16 %v3734
        %v3759 = vpack.c.b16 %v3752, %v3751
        %v3760 = vpack.c.b16 %v3754, %v3753
        %v3761 = vpack.c.b16 %v3756, %v3755
        %v3762 = vpack.c.b16 %v3758, %v3757
        %vm3763 = vcmask 523264
        %v3765 = vsel %vm3763, %v3759, 0
        %v3768 = vsel %vm3763, %v3760, 0
        %v3771 = vsel %vm3763, %v3761, 0
        %v3774 = vsel %vm3763, %v3762, 0
        %3776 = vmatprep.subr.bf16.mxu0 %v3736
        %3777 = vmatpush1.bf16.msra.mxu0 %v3735
        %3778 = vmatprep.subr.bf16.mxu0 %v3738
        %3779 = vmatpush1.bf16.msra.mxu0 %v3737
        %3780 = vmatprep.subr.bf16.mxu0 %v3740
        %3781 = vmatpush1.bf16.msra.mxu0 %v3739
        %3782 = vmatprep.subr.bf16.mxu0 %v3742
        %3783 = vmatpush1.bf16.msra.mxu0 %v3741
        %3784 = vmatprep.subr.bf16.mxu0 0
        %3785 = vmatpush1.bf16.msra.mxu0 0
        %3786 = vmatprep.subr.bf16.mxu0 0
        %3787 = vmatpush1.bf16.msra.mxu0 0
        %3788 = vmatprep.subr.bf16.mxu0 0
        %3789 = vmatpush1.bf16.msra.mxu0 0
        %3790 = vmatprep.subr.bf16.mxu0 0
        %3791 = vmatpush1.bf16.msra.mxu0 0
        %3792 = vmatprep.subr.bf16.mxu0 0
        %3793 = vmatpush1.bf16.msra.mxu0 0
        %3794 = vmatprep.subr.bf16.mxu0 0
        %3795 = vmatpush1.bf16.msra.mxu0 0
        %3796 = vmatprep.subr.bf16.mxu0 0
        %3797 = vmatpush1.bf16.msra.mxu0 0
        %3798 = vmatprep.subr.bf16.mxu0 0
        %3799 = vmatpush1.bf16.msra.mxu0 0
        %3800 = vmatprep.subr.bf16.mxu0 0
        %3801 = vmatpush1.bf16.msra.mxu0 0
        %3802 = vmatprep.subr.bf16.mxu0 0
        %3803 = vmatpush1.bf16.msra.mxu0 0
        %3804 = vmatprep.subr.bf16.mxu0 0
        %3805 = vmatpush1.bf16.msra.mxu0 0
        %3806 = vmatprep.subr.bf16.mxu0 0
        %3807 = vmatpush1.bf16.msra.mxu0 0
        %3808 = vmatprep.mubr.bf16.mxu0 0
        %3809 = vmatmul.mubr.bf16.gmra.mrb[0].mxu0 %v3765
        %v3810 = vpop.f32.mrb[0].mxu0
        %v3811 = vadd.f32 0.0, %v3810
        %v3812 = vpop.f32.mrb[0].mxu0
        %v3813 = vadd.f32 0.0, %v3812
        %v3814 = vpop.f32.mrb[0].mxu0
        %v3815 = vadd.f32 0.0, %v3814
        %v3816 = vpop.f32.mrb[0].mxu0
        %v3817 = vadd.f32 0.0, %v3816
        %3818 = vmatprep.mubr.bf16.mxu0 0
        %3819 = vmatmul.mubr.bf16.gmra.mrb[0].mxu0 %v3768
        %v3820 = vpop.f32.mrb[0].mxu0
        %v3821 = vadd.f32 0.0, %v3820
        %v3822 = vpop.f32.mrb[0].mxu0
        %v3823 = vadd.f32 0.0, %v3822
        %v3824 = vpop.f32.mrb[0].mxu0
        %v3825 = vadd.f32 0.0, %v3824
        %v3826 = vpop.f32.mrb[0].mxu0
        %v3827 = vadd.f32 0.0, %v3826
        %3828 = vmatprep.mubr.bf16.mxu0 0
        %3829 = vmatmul.mubr.bf16.gmra.mrb[0].mxu0 %v3771
        %v3830 = vpop.f32.mrb[0].mxu0
        %v3831 = vadd.f32 0.0, %v3830
        %v3832 = vpop.f32.mrb[0].mxu0
        %v3833 = vadd.f32 0.0, %v3832
        %v3834 = vpop.f32.mrb[0].mxu0
        %v3835 = vadd.f32 0.0, %v3834
        %v3836 = vpop.f32.mrb[0].mxu0
        %v3837 = vadd.f32 0.0, %v3836
        %3838 = vmatprep.mubr.bf16.mxu0 0
        %3839 = vmatmul.mubr.bf16.gmra.mrb[0].mxu0 %v3774
        %v3840 = vpop.f32.mrb[0].mxu0
        %v3841 = vadd.f32 0.0, %v3840
        %v3842 = vpop.f32.mrb[0].mxu0
        %v3843 = vadd.f32 0.0, %v3842
        %v3844 = vpop.f32.mrb[0].mxu0
        %v3845 = vadd.f32 0.0, %v3844
        %v3846 = vpop.f32.mrb[0].mxu0
        %v3847 = vadd.f32 0.0, %v3846
        %3848 = vdwg.mxu0
        %v3857 = vunpack.c.l.b16 %v3646
        %v3858 = vunpack.c.l.b16 %v3647
        %v3859 = vunpack.c.l.b16 %v3648
        %v3860 = vunpack.c.l.b16 %v3649
        %v3861 = vunpack.c.l.b16 %v3650
        %v3862 = vunpack.c.l.b16 %v3651
        %v3863 = vunpack.c.l.b16 %v3652
        %v3864 = vunpack.c.l.b16 %v3653
        %v3865 = vpack.c.b16 %v3858, %v3857
        %v3866 = vpack.c.b16 %v3860, %v3859
        %v3867 = vpack.c.b16 %v3862, %v3861
        %v3868 = vpack.c.b16 %v3864, %v3863
        %v3870 = vsel %vm3763, %v3865, 0
        %v3873 = vsel %vm3763, %v3866, 0
        %v3876 = vsel %vm3763, %v3867, 0
        %v3879 = vsel %vm3763, %v3868, 0
        %3881 = vmatprep.subr.bf16.mxu0 %v3655
        %3882 = vmatpush1.bf16.msra.mxu0 %v3654
        %3883 = vmatprep.subr.bf16.mxu0 %v3657
        %3884 = vmatpush1.bf16.msra.mxu0 %v3656
        %3885 = vmatprep.subr.bf16.mxu0 %v3659
        %3886 = vmatpush1.bf16.msra.mxu0 %v3658
        %3887 = vmatprep.subr.bf16.mxu0 %v3661
        %3888 = vmatpush1.bf16.msra.mxu0 %v3660
        %3889 = vmatprep.subr.bf16.mxu0 0
        %3890 = vmatpush1.bf16.msra.mxu0 0
        %3891 = vmatprep.subr.bf16.mxu0 0
        %3892 = vmatpush1.bf16.msra.mxu0 0
        %3893 = vmatprep.subr.bf16.mxu0 0
        %3894 = vmatpush1.bf16.msra.mxu0 0
        %3895 = vmatprep.subr.bf16.mxu0 0
        %3896 = vmatpush1.bf16.msra.mxu0 0
        %3897 = vmatprep.subr.bf16.mxu0 0
        %3898 = vmatpush1.bf16.msra.mxu0 0
        %3899 = vmatprep.subr.bf16.mxu0 0
        %3900 = vmatpush1.bf16.msra.mxu0 0
        %3901 = vmatprep.subr.bf16.mxu0 0
        %3902 = vmatpush1.bf16.msra.mxu0 0
        %3903 = vmatprep.subr.bf16.mxu0 0
        %3904 = vmatpush1.bf16.msra.mxu0 0
        %3905 = vmatprep.subr.bf16.mxu0 0
        %3906 = vmatpush1.bf16.msra.mxu0 0
        %3907 = vmatprep.subr.bf16.mxu0 0
        %3908 = vmatpush1.bf16.msra.mxu0 0
        %3909 = vmatprep.subr.bf16.mxu0 0
        %3910 = vmatpush1.bf16.msra.mxu0 0
        %3911 = vmatprep.subr.bf16.mxu0 0
        %3912 = vmatpush1.bf16.msra.mxu0 0
        %3913 = vmatprep.mubr.bf16.mxu0 0
        %3914 = vmatmul.mubr.bf16.gmra.mrb[0].mxu0 %v3870
        %v3915 = vpop.f32.mrb[0].mxu0
        %v3916 = vadd.f32 %v3811, %v3915
        %v3917 = vpop.f32.mrb[0].mxu0
        %v3918 = vadd.f32 %v3813, %v3917
        %v3919 = vpop.f32.mrb[0].mxu0
        %v3920 = vadd.f32 %v3815, %v3919
        %v3921 = vpop.f32.mrb[0].mxu0
        %v3922 = vadd.f32 %v3817, %v3921
        %3923 = vmatprep.mubr.bf16.mxu0 0
        %3924 = vmatmul.mubr.bf16.gmra.mrb[0].mxu0 %v3873
        %v3925 = vpop.f32.mrb[0].mxu0
        %v3926 = vadd.f32 %v3821, %v3925
        %v3927 = vpop.f32.mrb[0].mxu0
        %v3928 = vadd.f32 %v3823, %v3927
        %v3929 = vpop.f32.mrb[0].mxu0
        %v3930 = vadd.f32 %v3825, %v3929
        %v3931 = vpop.f32.mrb[0].mxu0
        %v3932 = vadd.f32 %v3827, %v3931
        %3933 = vmatprep.mubr.bf16.mxu0 0
        %3934 = vmatmul.mubr.bf16.gmra.mrb[0].mxu0 %v3876
        %v3935 = vpop.f32.mrb[0].mxu0
        %v3936 = vadd.f32 %v3831, %v3935
        %v3937 = vpop.f32.mrb[0].mxu0
        %v3938 = vadd.f32 %v3833, %v3937
        %v3939 = vpop.f32.mrb[0].mxu0
        %v3940 = vadd.f32 %v3835, %v3939
        %v3941 = vpop.f32.mrb[0].mxu0
        %v3942 = vadd.f32 %v3837, %v3941
        %3943 = vmatprep.mubr.bf16.mxu0 0
        %3944 = vmatmul.mubr.bf16.gmra.mrb[0].mxu0 %v3879
        %v3945 = vpop.f32.mrb[0].mxu0
        %v3946 = vadd.f32 %v3841, %v3945
        %v3947 = vpop.f32.mrb[0].mxu0
        %v3948 = vadd.f32 %v3843, %v3947
        %v3949 = vpop.f32.mrb[0].mxu0
        %v3950 = vadd.f32 %v3845, %v3949
        %v3951 = vpop.f32.mrb[0].mxu0
        %v3952 = vadd.f32 %v3847, %v3951
        %3953 = vdwg.mxu0
        %3954 = vrot.lane.b32.xlu0 %v3550, 15
        %v3955 = vpop.permute.xlu0 %3954
        %3956 = vrot.lane.b32.xlu0 %v3552, 15
        %v3957 = vpop.permute.xlu0 %3956
        %3958 = vrot.lane.b32.xlu0 %v3554, 15
        %v3959 = vpop.permute.xlu0 %3958
        %3960 = vrot.lane.b32.xlu0 %v3556, 15
        %v3961 = vpop.permute.xlu0 %3960
        %3962 = vrot.lane.b32.xlu0 %v3558, 15
        %v3963 = vpop.permute.xlu0 %3962
        %3964 = vrot.lane.b32.xlu0 %v3560, 15
        %v3965 = vpop.permute.xlu0 %3964
        %3966 = vrot.lane.b32.xlu0 %v3562, 15
        %v3967 = vpop.permute.xlu0 %3966
        %3968 = vrot.lane.b32.xlu0 %v3564, 15
        %v3969 = vpop.permute.xlu0 %3968
        %3970 = vrot.lane.b32.xlu0 %v3551, 15
        %v3971 = vpop.permute.xlu0 %3970
        %3972 = vrot.lane.b32.xlu0 %v3553, 15
        %v3973 = vpop.permute.xlu0 %3972
        %3974 = vrot.lane.b32.xlu0 %v3555, 15
        %v3975 = vpop.permute.xlu0 %3974
        %3976 = vrot.lane.b32.xlu0 %v3557, 15
        %v3977 = vpop.permute.xlu0 %3976
        %3978 = vrot.lane.b32.xlu0 %v3559, 15
        %v3979 = vpop.permute.xlu0 %3978
        %3980 = vrot.lane.b32.xlu0 %v3561, 15
        %v3981 = vpop.permute.xlu0 %3980
        %3982 = vrot.lane.b32.xlu0 %v3563, 15
        %v3983 = vpop.permute.xlu0 %3982
        %3984 = vrot.lane.b32.xlu0 %v3565, 15
        %v3985 = vpop.permute.xlu0 %3984
        %v3986 = vsel %vm720, %v3955, %v3971
        %v3987 = vsel %vm720, %v3957, %v3973
        %v3988 = vsel %vm720, %v3959, %v3975
        %v3989 = vsel %vm720, %v3961, %v3977
        %v3990 = vsel %vm720, %v3963, %v3979
        %v3991 = vsel %vm720, %v3965, %v3981
        %v3992 = vsel %vm720, %v3967, %v3983
        %v3993 = vsel %vm720, %v3969, %v3985
        %v3994 = vsel %vm720, %v3971, %v3955
        %v3995 = vsel %vm720, %v3973, %v3957
        %v3996 = vsel %vm720, %v3975, %v3959
        %v3997 = vsel %vm720, %v3977, %v3961
        %v3998 = vsel %vm720, %v3979, %v3963
        %v3999 = vsel %vm720, %v3981, %v3965
        %v4000 = vsel %vm720, %v3983, %v3967
        %v4001 = vsel %vm720, %v3985, %v3969
        %v4002 = vmul.f32 %v3994, %v731
        %v4003 = vmul.f32 %v3986, %v735
        %v4004 = vmul.f32 %v3995, %v731
        %v4005 = vmul.f32 %v3987, %v735
        %v4006 = vmul.f32 %v3996, %v731
        %v4007 = vmul.f32 %v3988, %v735
        %v4008 = vmul.f32 %v3997, %v731
        %v4009 = vmul.f32 %v3989, %v735
        %v4010 = vmul.f32 %v3998, %v731
        %v4011 = vmul.f32 %v3990, %v735
        %v4012 = vmul.f32 %v3999, %v731
        %v4013 = vmul.f32 %v3991, %v735
        %v4014 = vmul.f32 %v4000, %v731
        %v4015 = vmul.f32 %v3992, %v735
        %v4016 = vmul.f32 %v4001, %v731
        %v4017 = vmul.f32 %v3993, %v735
        %s4018 = scalar_lea.vmem %s6, 64
        %v4019 = vld [vmem:[%s4018] sm:$0xf]
        %v4020 = vld [vmem:[%s4018 + $0x4] sm:$0xf]
        %v4021 = vld [vmem:[%s4018 + $0x8] sm:$0xf]
        %v4022 = vld [vmem:[%s4018 + $0xc] sm:$0xf]
        %v4023 = vld [vmem:[%s4018 + $0x10] sm:$0xf]
        %v4024 = vld [vmem:[%s4018 + $0x14] sm:$0xf]
        %v4025 = vld [vmem:[%s4018 + $0x18] sm:$0xf]
        %v4026 = vld [vmem:[%s4018 + $0x1c] sm:$0xf]
        %v4027 = vpack.c.bf16 %v4004, %v4002
        %v4028 = vpack.c.bf16 %v4005, %v4003
        %v4029 = vpack.c.bf16 %v4008, %v4006
        %v4030 = vpack.c.bf16 %v4009, %v4007
        %v4031 = vpack.c.bf16 %v4012, %v4010
        %v4032 = vpack.c.bf16 %v4013, %v4011
        %v4033 = vpack.c.bf16 %v4016, %v4014
        %v4034 = vpack.c.bf16 %v4017, %v4015
        %v4043 = vunpack.c.l.b16 %v4019
        %v4044 = vunpack.c.l.b16 %v4020
        %v4045 = vunpack.c.l.b16 %v4021
        %v4046 = vunpack.c.l.b16 %v4022
        %v4047 = vunpack.c.l.b16 %v4023
        %v4048 = vunpack.c.l.b16 %v4024
        %v4049 = vunpack.c.l.b16 %v4025
        %v4050 = vunpack.c.l.b16 %v4026
        %v4051 = vpack.c.b16 %v4044, %v4043
        %v4052 = vpack.c.b16 %v4046, %v4045
        %v4053 = vpack.c.b16 %v4048, %v4047
        %v4054 = vpack.c.b16 %v4050, %v4049
        %v4056 = vsel %vm3763, %v4051, 0
        %v4059 = vsel %vm3763, %v4052, 0
        %v4062 = vsel %vm3763, %v4053, 0
        %v4065 = vsel %vm3763, %v4054, 0
        %4067 = vmatprep.subr.bf16.mxu0 %v4028
        %4068 = vmatpush1.bf16.msra.mxu0 %v4027
        %4069 = vmatprep.subr.bf16.mxu0 %v4030
        %4070 = vmatpush1.bf16.msra.mxu0 %v4029
        %4071 = vmatprep.subr.bf16.mxu0 %v4032
        %4072 = vmatpush1.bf16.msra.mxu0 %v4031
        %4073 = vmatprep.subr.bf16.mxu0 %v4034
        %4074 = vmatpush1.bf16.msra.mxu0 %v4033
        %4075 = vmatprep.subr.bf16.mxu0 0
        %4076 = vmatpush1.bf16.msra.mxu0 0
        %4077 = vmatprep.subr.bf16.mxu0 0
        %4078 = vmatpush1.bf16.msra.mxu0 0
        %4079 = vmatprep.subr.bf16.mxu0 0
        %4080 = vmatpush1.bf16.msra.mxu0 0
        %4081 = vmatprep.subr.bf16.mxu0 0
        %4082 = vmatpush1.bf16.msra.mxu0 0
        %4083 = vmatprep.subr.bf16.mxu0 0
        %4084 = vmatpush1.bf16.msra.mxu0 0
        %4085 = vmatprep.subr.bf16.mxu0 0
        %4086 = vmatpush1.bf16.msra.mxu0 0
        %4087 = vmatprep.subr.bf16.mxu0 0
        %4088 = vmatpush1.bf16.msra.mxu0 0
        %4089 = vmatprep.subr.bf16.mxu0 0
        %4090 = vmatpush1.bf16.msra.mxu0 0
        %4091 = vmatprep.subr.bf16.mxu0 0
        %4092 = vmatpush1.bf16.msra.mxu0 0
        %4093 = vmatprep.subr.bf16.mxu0 0
        %4094 = vmatpush1.bf16.msra.mxu0 0
        %4095 = vmatprep.subr.bf16.mxu0 0
        %4096 = vmatpush1.bf16.msra.mxu0 0
        %4097 = vmatprep.subr.bf16.mxu0 0
        %4098 = vmatpush1.bf16.msra.mxu0 0
        %4099 = vmatprep.mubr.bf16.mxu0 0
        %4100 = vmatmul.mubr.bf16.gmra.mrb[0].mxu0 %v4056
        %v4101 = vpop.f32.mrb[0].mxu0
        %v4102 = vadd.f32 0.0, %v4101
        %v4103 = vpop.f32.mrb[0].mxu0
        %v4104 = vadd.f32 0.0, %v4103
        %v4105 = vpop.f32.mrb[0].mxu0
        %v4106 = vadd.f32 0.0, %v4105
        %v4107 = vpop.f32.mrb[0].mxu0
        %v4108 = vadd.f32 0.0, %v4107
        %4109 = vmatprep.mubr.bf16.mxu0 0
        %4110 = vmatmul.mubr.bf16.gmra.mrb[0].mxu0 %v4059
        %v4111 = vpop.f32.mrb[0].mxu0
        %v4112 = vadd.f32 0.0, %v4111
        %v4113 = vpop.f32.mrb[0].mxu0
        %v4114 = vadd.f32 0.0, %v4113
        %v4115 = vpop.f32.mrb[0].mxu0
        %v4116 = vadd.f32 0.0, %v4115
        %v4117 = vpop.f32.mrb[0].mxu0
        %v4118 = vadd.f32 0.0, %v4117
        %4119 = vmatprep.mubr.bf16.mxu0 0
        %4120 = vmatmul.mubr.bf16.gmra.mrb[0].mxu0 %v4062
        %v4121 = vpop.f32.mrb[0].mxu0
        %v4122 = vadd.f32 0.0, %v4121
        %v4123 = vpop.f32.mrb[0].mxu0
        %v4124 = vadd.f32 0.0, %v4123
        %v4125 = vpop.f32.mrb[0].mxu0
        %v4126 = vadd.f32 0.0, %v4125
        %v4127 = vpop.f32.mrb[0].mxu0
        %v4128 = vadd.f32 0.0, %v4127
        %4129 = vmatprep.mubr.bf16.mxu0 0
        %4130 = vmatmul.mubr.bf16.gmra.mrb[0].mxu0 %v4065
        %v4131 = vpop.f32.mrb[0].mxu0
        %v4132 = vadd.f32 0.0, %v4131
        %v4133 = vpop.f32.mrb[0].mxu0
        %v4134 = vadd.f32 0.0, %v4133
        %v4135 = vpop.f32.mrb[0].mxu0
        %v4136 = vadd.f32 0.0, %v4135
        %v4137 = vpop.f32.mrb[0].mxu0
        %v4138 = vadd.f32 0.0, %v4137
        %4139 = vdwg.mxu0
        %v4140 = vadd.f32 %v3916, %v4102
        %v4141 = vadd.f32 %v3918, %v4104
        %v4142 = vadd.f32 %v3920, %v4106
        %v4143 = vadd.f32 %v3922, %v4108
        %v4144 = vadd.f32 %v3926, %v4112
        %v4145 = vadd.f32 %v3928, %v4114
        %v4146 = vadd.f32 %v3930, %v4116
        %v4147 = vadd.f32 %v3932, %v4118
        %v4148 = vadd.f32 %v3936, %v4122
        %v4149 = vadd.f32 %v3938, %v4124
        %v4150 = vadd.f32 %v3940, %v4126
        %v4151 = vadd.f32 %v3942, %v4128
        %v4152 = vadd.f32 %v3946, %v4132
        %v4153 = vadd.f32 %v3948, %v4134
        %v4154 = vadd.f32 %v3950, %v4136
        %v4155 = vadd.f32 %v3952, %v4138
        %4156 = vrot.lane.b32.xlu0 %v3550, 1
        %v4157 = vpop.permute.xlu0 %4156
        %4158 = vrot.lane.b32.xlu0 %v3552, 1
        %v4159 = vpop.permute.xlu0 %4158
        %4160 = vrot.lane.b32.xlu0 %v3554, 1
        %v4161 = vpop.permute.xlu0 %4160
        %4162 = vrot.lane.b32.xlu0 %v3556, 1
        %v4163 = vpop.permute.xlu0 %4162
        %4164 = vrot.lane.b32.xlu0 %v3558, 1
        %v4165 = vpop.permute.xlu0 %4164
        %4166 = vrot.lane.b32.xlu0 %v3560, 1
        %v4167 = vpop.permute.xlu0 %4166
        %4168 = vrot.lane.b32.xlu0 %v3562, 1
        %v4169 = vpop.permute.xlu0 %4168
        %4170 = vrot.lane.b32.xlu0 %v3564, 1
        %v4171 = vpop.permute.xlu0 %4170
        %4172 = vrot.lane.b32.xlu0 %v3551, 1
        %v4173 = vpop.permute.xlu0 %4172
        %4174 = vrot.lane.b32.xlu0 %v3553, 1
        %v4175 = vpop.permute.xlu0 %4174
        %4176 = vrot.lane.b32.xlu0 %v3555, 1
        %v4177 = vpop.permute.xlu0 %4176
        %4178 = vrot.lane.b32.xlu0 %v3557, 1
        %v4179 = vpop.permute.xlu0 %4178
        %4180 = vrot.lane.b32.xlu0 %v3559, 1
        %v4181 = vpop.permute.xlu0 %4180
        %4182 = vrot.lane.b32.xlu0 %v3561, 1
        %v4183 = vpop.permute.xlu0 %4182
        %4184 = vrot.lane.b32.xlu0 %v3563, 1
        %v4185 = vpop.permute.xlu0 %4184
        %4186 = vrot.lane.b32.xlu0 %v3565, 1
        %v4187 = vpop.permute.xlu0 %4186
        %v4188 = vsel %vm857, %v4157, %v4173
        %v4189 = vsel %vm857, %v4159, %v4175
        %v4190 = vsel %vm857, %v4161, %v4177
        %v4191 = vsel %vm857, %v4163, %v4179
        %v4192 = vsel %vm857, %v4165, %v4181
        %v4193 = vsel %vm857, %v4167, %v4183
        %v4194 = vsel %vm857, %v4169, %v4185
        %v4195 = vsel %vm857, %v4171, %v4187
        %v4196 = vsel %vm857, %v4173, %v4157
        %v4197 = vsel %vm857, %v4175, %v4159
        %v4198 = vsel %vm857, %v4177, %v4161
        %v4199 = vsel %vm857, %v4179, %v4163
        %v4200 = vsel %vm857, %v4181, %v4165
        %v4201 = vsel %vm857, %v4183, %v4167
        %v4202 = vsel %vm857, %v4185, %v4169
        %v4203 = vsel %vm857, %v4187, %v4171
        %v4204 = vmul.f32 %v4196, %v868
        %v4205 = vmul.f32 %v4188, %v872
        %v4206 = vmul.f32 %v4197, %v868
        %v4207 = vmul.f32 %v4189, %v872
        %v4208 = vmul.f32 %v4198, %v868
        %v4209 = vmul.f32 %v4190, %v872
        %v4210 = vmul.f32 %v4199, %v868
        %v4211 = vmul.f32 %v4191, %v872
        %v4212 = vmul.f32 %v4200, %v868
        %v4213 = vmul.f32 %v4192, %v872
        %v4214 = vmul.f32 %v4201, %v868
        %v4215 = vmul.f32 %v4193, %v872
        %v4216 = vmul.f32 %v4202, %v868
        %v4217 = vmul.f32 %v4194, %v872
        %v4218 = vmul.f32 %v4203, %v868
        %v4219 = vmul.f32 %v4195, %v872
        %s4220 = scalar_lea.vmem %s6, 96
        %v4221 = vld [vmem:[%s4220] sm:$0xf]
        %v4222 = vld [vmem:[%s4220 + $0x4] sm:$0xf]
        %v4223 = vld [vmem:[%s4220 + $0x8] sm:$0xf]
        %v4224 = vld [vmem:[%s4220 + $0xc] sm:$0xf]
        %v4225 = vld [vmem:[%s4220 + $0x10] sm:$0xf]
        %v4226 = vld [vmem:[%s4220 + $0x14] sm:$0xf]
        %v4227 = vld [vmem:[%s4220 + $0x18] sm:$0xf]
        %v4228 = vld [vmem:[%s4220 + $0x1c] sm:$0xf]
        %v4229 = vpack.c.bf16 %v4206, %v4204
        %v4230 = vpack.c.bf16 %v4207, %v4205
        %v4231 = vpack.c.bf16 %v4210, %v4208
        %v4232 = vpack.c.bf16 %v4211, %v4209
        %v4233 = vpack.c.bf16 %v4214, %v4212
        %v4234 = vpack.c.bf16 %v4215, %v4213
        %v4235 = vpack.c.bf16 %v4218, %v4216
        %v4236 = vpack.c.bf16 %v4219, %v4217
        %v4245 = vunpack.c.l.b16 %v4221
        %v4246 = vunpack.c.l.b16 %v4222
        %v4247 = vunpack.c.l.b16 %v4223
        %v4248 = vunpack.c.l.b16 %v4224
        %v4249 = vunpack.c.l.b16 %v4225
        %v4250 = vunpack.c.l.b16 %v4226
        %v4251 = vunpack.c.l.b16 %v4227
        %v4252 = vunpack.c.l.b16 %v4228
        %v4253 = vpack.c.b16 %v4246, %v4245
        %v4254 = vpack.c.b16 %v4248, %v4247
        %v4255 = vpack.c.b16 %v4250, %v4249
        %v4256 = vpack.c.b16 %v4252, %v4251
        %v4258 = vsel %vm3763, %v4253, 0
        %v4261 = vsel %vm3763, %v4254, 0
        %v4264 = vsel %vm3763, %v4255, 0
        %v4267 = vsel %vm3763, %v4256, 0
        %4269 = vmatprep.subr.bf16.mxu0 %v4230
        %4270 = vmatpush1.bf16.msra.mxu0 %v4229
        %4271 = vmatprep.subr.bf16.mxu0 %v4232
        %4272 = vmatpush1.bf16.msra.mxu0 %v4231
        %4273 = vmatprep.subr.bf16.mxu0 %v4234
        %4274 = vmatpush1.bf16.msra.mxu0 %v4233
        %4275 = vmatprep.subr.bf16.mxu0 %v4236
        %4276 = vmatpush1.bf16.msra.mxu0 %v4235
        %4277 = vmatprep.subr.bf16.mxu0 0
        %4278 = vmatpush1.bf16.msra.mxu0 0
        %4279 = vmatprep.subr.bf16.mxu0 0
        %4280 = vmatpush1.bf16.msra.mxu0 0
        %4281 = vmatprep.subr.bf16.mxu0 0
        %4282 = vmatpush1.bf16.msra.mxu0 0
        %4283 = vmatprep.subr.bf16.mxu0 0
        %4284 = vmatpush1.bf16.msra.mxu0 0
        %4285 = vmatprep.subr.bf16.mxu0 0
        %4286 = vmatpush1.bf16.msra.mxu0 0
        %4287 = vmatprep.subr.bf16.mxu0 0
        %4288 = vmatpush1.bf16.msra.mxu0 0
        %4289 = vmatprep.subr.bf16.mxu0 0
        %4290 = vmatpush1.bf16.msra.mxu0 0
        %4291 = vmatprep.subr.bf16.mxu0 0
        %4292 = vmatpush1.bf16.msra.mxu0 0
        %4293 = vmatprep.subr.bf16.mxu0 0
        %4294 = vmatpush1.bf16.msra.mxu0 0
        %4295 = vmatprep.subr.bf16.mxu0 0
        %4296 = vmatpush1.bf16.msra.mxu0 0
        %4297 = vmatprep.subr.bf16.mxu0 0
        %4298 = vmatpush1.bf16.msra.mxu0 0
        %4299 = vmatprep.subr.bf16.mxu0 0
        %4300 = vmatpush1.bf16.msra.mxu0 0
        %4301 = vmatprep.mubr.bf16.mxu0 0
        %4302 = vmatmul.mubr.bf16.gmra.mrb[0].mxu0 %v4258
        %v4303 = vpop.f32.mrb[0].mxu0
        %v4304 = vadd.f32 0.0, %v4303
        %v4305 = vpop.f32.mrb[0].mxu0
        %v4306 = vadd.f32 0.0, %v4305
        %v4307 = vpop.f32.mrb[0].mxu0
        %v4308 = vadd.f32 0.0, %v4307
        %v4309 = vpop.f32.mrb[0].mxu0
        %v4310 = vadd.f32 0.0, %v4309
        %4311 = vmatprep.mubr.bf16.mxu0 0
        %4312 = vmatmul.mubr.bf16.gmra.mrb[0].mxu0 %v4261
        %v4313 = vpop.f32.mrb[0].mxu0
        %v4314 = vadd.f32 0.0, %v4313
        %v4315 = vpop.f32.mrb[0].mxu0
        %v4316 = vadd.f32 0.0, %v4315
        %v4317 = vpop.f32.mrb[0].mxu0
        %v4318 = vadd.f32 0.0, %v4317
        %v4319 = vpop.f32.mrb[0].mxu0
        %v4320 = vadd.f32 0.0, %v4319
        %4321 = vmatprep.mubr.bf16.mxu0 0
        %4322 = vmatmul.mubr.bf16.gmra.mrb[0].mxu0 %v4264
        %v4323 = vpop.f32.mrb[0].mxu0
        %v4324 = vadd.f32 0.0, %v4323
        %v4325 = vpop.f32.mrb[0].mxu0
        %v4326 = vadd.f32 0.0, %v4325
        %v4327 = vpop.f32.mrb[0].mxu0
        %v4328 = vadd.f32 0.0, %v4327
        %v4329 = vpop.f32.mrb[0].mxu0
        %v4330 = vadd.f32 0.0, %v4329
        %4331 = vmatprep.mubr.bf16.mxu0 0
        %4332 = vmatmul.mubr.bf16.gmra.mrb[0].mxu0 %v4267
        %v4333 = vpop.f32.mrb[0].mxu0
        %v4334 = vadd.f32 0.0, %v4333
        %v4335 = vpop.f32.mrb[0].mxu0
        %v4336 = vadd.f32 0.0, %v4335
        %v4337 = vpop.f32.mrb[0].mxu0
        %v4338 = vadd.f32 0.0, %v4337
        %v4339 = vpop.f32.mrb[0].mxu0
        %v4340 = vadd.f32 0.0, %v4339
        %4341 = vdwg.mxu0
        %v4342 = vadd.f32 %v4140, %v4304
        %v4343 = vadd.f32 %v4141, %v4306
        %v4344 = vadd.f32 %v4142, %v4308
        %v4345 = vadd.f32 %v4143, %v4310
        %v4346 = vadd.f32 %v4144, %v4314
        %v4347 = vadd.f32 %v4145, %v4316
        %v4348 = vadd.f32 %v4146, %v4318
        %v4349 = vadd.f32 %v4147, %v4320
        %v4350 = vadd.f32 %v4148, %v4324
        %v4351 = vadd.f32 %v4149, %v4326
        %v4352 = vadd.f32 %v4150, %v4328
        %v4353 = vadd.f32 %v4151, %v4330
        %v4354 = vadd.f32 %v4152, %v4334
        %v4355 = vadd.f32 %v4153, %v4336
        %v4356 = vadd.f32 %v4154, %v4338
        %v4357 = vadd.f32 %v4155, %v4340
        %s4358 = scalar_lea.vmem %s6, 128
        %v4359 = vld [vmem:[%s4358] sm:$0xf]
        %v4360 = vld [vmem:[%s4358 + $0x4] sm:$0xf]
        %v4361 = vld [vmem:[%s4358 + $0x8] sm:$0xf]
        %v4362 = vld [vmem:[%s4358 + $0xc] sm:$0xf]
        %v4363 = vld [vmem:[%s4358 + $0x10] sm:$0xf]
        %v4364 = vld [vmem:[%s4358 + $0x14] sm:$0xf]
        %v4365 = vld [vmem:[%s4358 + $0x18] sm:$0xf]
        %v4366 = vld [vmem:[%s4358 + $0x1c] sm:$0xf]
        %v4367 = vpack.c.bf16 %v3552, %v3550
        %v4368 = vpack.c.bf16 %v3553, %v3551
        %v4369 = vpack.c.bf16 %v3556, %v3554
        %v4370 = vpack.c.bf16 %v3557, %v3555
        %v4371 = vpack.c.bf16 %v3560, %v3558
        %v4372 = vpack.c.bf16 %v3561, %v3559
        %v4373 = vpack.c.bf16 %v3564, %v3562
        %v4374 = vpack.c.bf16 %v3565, %v3563
        %v4383 = vunpack.c.l.b16 %v4359
        %v4384 = vunpack.c.l.b16 %v4360
        %v4385 = vunpack.c.l.b16 %v4361
        %v4386 = vunpack.c.l.b16 %v4362
        %v4387 = vunpack.c.l.b16 %v4363
        %v4388 = vunpack.c.l.b16 %v4364
        %v4389 = vunpack.c.l.b16 %v4365
        %v4390 = vunpack.c.l.b16 %v4366
        %v4391 = vpack.c.b16 %v4384, %v4383
        %v4392 = vpack.c.b16 %v4386, %v4385
        %v4393 = vpack.c.b16 %v4388, %v4387
        %v4394 = vpack.c.b16 %v4390, %v4389
        %v4396 = vsel %vm3763, %v4391, 0
        %v4399 = vsel %vm3763, %v4392, 0
        %v4402 = vsel %vm3763, %v4393, 0
        %v4405 = vsel %vm3763, %v4394, 0
        %4407 = vmatprep.subr.bf16.mxu0 %v4368
        %4408 = vmatpush1.bf16.msra.mxu0 %v4367
        %4409 = vmatprep.subr.bf16.mxu0 %v4370
        %4410 = vmatpush1.bf16.msra.mxu0 %v4369
        %4411 = vmatprep.subr.bf16.mxu0 %v4372
        %4412 = vmatpush1.bf16.msra.mxu0 %v4371
        %4413 = vmatprep.subr.bf16.mxu0 %v4374
        %4414 = vmatpush1.bf16.msra.mxu0 %v4373
        %4415 = vmatprep.subr.bf16.mxu0 0
        %4416 = vmatpush1.bf16.msra.mxu0 0
        %4417 = vmatprep.subr.bf16.mxu0 0
        %4418 = vmatpush1.bf16.msra.mxu0 0
        %4419 = vmatprep.subr.bf16.mxu0 0
        %4420 = vmatpush1.bf16.msra.mxu0 0
        %4421 = vmatprep.subr.bf16.mxu0 0
        %4422 = vmatpush1.bf16.msra.mxu0 0
        %4423 = vmatprep.subr.bf16.mxu0 0
        %4424 = vmatpush1.bf16.msra.mxu0 0
        %4425 = vmatprep.subr.bf16.mxu0 0
        %4426 = vmatpush1.bf16.msra.mxu0 0
        %4427 = vmatprep.subr.bf16.mxu0 0
        %4428 = vmatpush1.bf16.msra.mxu0 0
        %4429 = vmatprep.subr.bf16.mxu0 0
        %4430 = vmatpush1.bf16.msra.mxu0 0
        %4431 = vmatprep.subr.bf16.mxu0 0
        %4432 = vmatpush1.bf16.msra.mxu0 0
        %4433 = vmatprep.subr.bf16.mxu0 0
        %4434 = vmatpush1.bf16.msra.mxu0 0
        %4435 = vmatprep.subr.bf16.mxu0 0
        %4436 = vmatpush1.bf16.msra.mxu0 0
        %4437 = vmatprep.subr.bf16.mxu0 0
        %4438 = vmatpush1.bf16.msra.mxu0 0
        %4439 = vmatprep.mubr.bf16.mxu0 0
        %4440 = vmatmul.mubr.bf16.gmra.mrb[0].mxu0 %v4396
        %v4441 = vpop.f32.mrb[0].mxu0
        %v4442 = vadd.f32 0.0, %v4441
        %v4443 = vpop.f32.mrb[0].mxu0
        %v4444 = vadd.f32 0.0, %v4443
        %v4445 = vpop.f32.mrb[0].mxu0
        %v4446 = vadd.f32 0.0, %v4445
        %v4447 = vpop.f32.mrb[0].mxu0
        %v4448 = vadd.f32 0.0, %v4447
        %4449 = vmatprep.mubr.bf16.mxu0 0
        %4450 = vmatmul.mubr.bf16.gmra.mrb[0].mxu0 %v4399
        %v4451 = vpop.f32.mrb[0].mxu0
        %v4452 = vadd.f32 0.0, %v4451
        %v4453 = vpop.f32.mrb[0].mxu0
        %v4454 = vadd.f32 0.0, %v4453
        %v4455 = vpop.f32.mrb[0].mxu0
        %v4456 = vadd.f32 0.0, %v4455
        %v4457 = vpop.f32.mrb[0].mxu0
        %v4458 = vadd.f32 0.0, %v4457
        %4459 = vmatprep.mubr.bf16.mxu0 0
        %4460 = vmatmul.mubr.bf16.gmra.mrb[0].mxu0 %v4402
        %v4461 = vpop.f32.mrb[0].mxu0
        %v4462 = vadd.f32 0.0, %v4461
        %v4463 = vpop.f32.mrb[0].mxu0
        %v4464 = vadd.f32 0.0, %v4463
        %v4465 = vpop.f32.mrb[0].mxu0
        %v4466 = vadd.f32 0.0, %v4465
        %v4467 = vpop.f32.mrb[0].mxu0
        %v4468 = vadd.f32 0.0, %v4467
        %4469 = vmatprep.mubr.bf16.mxu0 0
        %4470 = vmatmul.mubr.bf16.gmra.mrb[0].mxu0 %v4405
        %v4471 = vpop.f32.mrb[0].mxu0
        %v4472 = vadd.f32 0.0, %v4471
        %v4473 = vpop.f32.mrb[0].mxu0
        %v4474 = vadd.f32 0.0, %v4473
        %v4475 = vpop.f32.mrb[0].mxu0
        %v4476 = vadd.f32 0.0, %v4475
        %v4477 = vpop.f32.mrb[0].mxu0
        %v4478 = vadd.f32 0.0, %v4477
        %4479 = vdwg.mxu0
        %v4480 = vadd.f32 %v4342, %v4442
        %v4481 = vadd.f32 %v4343, %v4444
        %v4482 = vadd.f32 %v4344, %v4446
        %v4483 = vadd.f32 %v4345, %v4448
        %v4484 = vadd.f32 %v4346, %v4452
        %v4485 = vadd.f32 %v4347, %v4454
        %v4486 = vadd.f32 %v4348, %v4456
        %v4487 = vadd.f32 %v4349, %v4458
        %v4488 = vadd.f32 %v4350, %v4462
        %v4489 = vadd.f32 %v4351, %v4464
        %v4490 = vadd.f32 %v4352, %v4466
        %v4491 = vadd.f32 %v4353, %v4468
        %v4492 = vadd.f32 %v4354, %v4472
        %v4493 = vadd.f32 %v4355, %v4474
        %v4494 = vadd.f32 %v4356, %v4476
        %v4495 = vadd.f32 %v4357, %v4478
        %4496 = vrot.lane.b32.xlu0 %v3550, 127
        %v4497 = vpop.permute.xlu0 %4496
        %4498 = vrot.lane.b32.xlu0 %v3552, 127
        %v4499 = vpop.permute.xlu0 %4498
        %4500 = vrot.lane.b32.xlu0 %v3554, 127
        %v4501 = vpop.permute.xlu0 %4500
        %4502 = vrot.lane.b32.xlu0 %v3556, 127
        %v4503 = vpop.permute.xlu0 %4502
        %4504 = vrot.lane.b32.xlu0 %v3558, 127
        %v4505 = vpop.permute.xlu0 %4504
        %4506 = vrot.lane.b32.xlu0 %v3560, 127
        %v4507 = vpop.permute.xlu0 %4506
        %4508 = vrot.lane.b32.xlu0 %v3562, 127
        %v4509 = vpop.permute.xlu0 %4508
        %4510 = vrot.lane.b32.xlu0 %v3564, 127
        %v4511 = vpop.permute.xlu0 %4510
        %4512 = vrot.lane.b32.xlu0 %v3551, 127
        %v4513 = vpop.permute.xlu0 %4512
        %4514 = vrot.lane.b32.xlu0 %v3553, 127
        %v4515 = vpop.permute.xlu0 %4514
        %4516 = vrot.lane.b32.xlu0 %v3555, 127
        %v4517 = vpop.permute.xlu0 %4516
        %4518 = vrot.lane.b32.xlu0 %v3557, 127
        %v4519 = vpop.permute.xlu0 %4518
        %4520 = vrot.lane.b32.xlu0 %v3559, 127
        %v4521 = vpop.permute.xlu0 %4520
        %4522 = vrot.lane.b32.xlu0 %v3561, 127
        %v4523 = vpop.permute.xlu0 %4522
        %4524 = vrot.lane.b32.xlu0 %v3563, 127
        %v4525 = vpop.permute.xlu0 %4524
        %4526 = vrot.lane.b32.xlu0 %v3565, 127
        %v4527 = vpop.permute.xlu0 %4526
        %v4528 = vsel %vm1101, %v4497, %v4513
        %v4529 = vsel %vm1101, %v4499, %v4515
        %v4530 = vsel %vm1101, %v4501, %v4517
        %v4531 = vsel %vm1101, %v4503, %v4519
        %v4532 = vsel %vm1101, %v4505, %v4521
        %v4533 = vsel %vm1101, %v4507, %v4523
        %v4534 = vsel %vm1101, %v4509, %v4525
        %v4535 = vsel %vm1101, %v4511, %v4527
        %v4536 = vsel %vm1101, %v4513, %v4497
        %v4537 = vsel %vm1101, %v4515, %v4499
        %v4538 = vsel %vm1101, %v4517, %v4501
        %v4539 = vsel %vm1101, %v4519, %v4503
        %v4540 = vsel %vm1101, %v4521, %v4505
        %v4541 = vsel %vm1101, %v4523, %v4507
        %v4542 = vsel %vm1101, %v4525, %v4509
        %v4543 = vsel %vm1101, %v4527, %v4511
        %v4544 = vmul.f32 %v4528, %v1112
        %v4545 = vmul.f32 %v4536, %v1116
        %v4546 = vmul.f32 %v4529, %v1112
        %v4547 = vmul.f32 %v4537, %v1116
        %v4548 = vmul.f32 %v4530, %v1112
        %v4549 = vmul.f32 %v4538, %v1116
        %v4550 = vmul.f32 %v4531, %v1112
        %v4551 = vmul.f32 %v4539, %v1116
        %v4552 = vmul.f32 %v4532, %v1112
        %v4553 = vmul.f32 %v4540, %v1116
        %v4554 = vmul.f32 %v4533, %v1112
        %v4555 = vmul.f32 %v4541, %v1116
        %v4556 = vmul.f32 %v4534, %v1112
        %v4557 = vmul.f32 %v4542, %v1116
        %v4558 = vmul.f32 %v4535, %v1112
        %v4559 = vmul.f32 %v4543, %v1116
        %s4560 = scalar_lea.vmem %s6, 160
        %v4561 = vld [vmem:[%s4560] sm:$0xf]
        %v4562 = vld [vmem:[%s4560 + $0x4] sm:$0xf]
        %v4563 = vld [vmem:[%s4560 + $0x8] sm:$0xf]
        %v4564 = vld [vmem:[%s4560 + $0xc] sm:$0xf]
        %v4565 = vld [vmem:[%s4560 + $0x10] sm:$0xf]
        %v4566 = vld [vmem:[%s4560 + $0x14] sm:$0xf]
        %v4567 = vld [vmem:[%s4560 + $0x18] sm:$0xf]
        %v4568 = vld [vmem:[%s4560 + $0x1c] sm:$0xf]
        %v4569 = vpack.c.bf16 %v4546, %v4544
        %v4570 = vpack.c.bf16 %v4547, %v4545
        %v4571 = vpack.c.bf16 %v4550, %v4548
        %v4572 = vpack.c.bf16 %v4551, %v4549
        %v4573 = vpack.c.bf16 %v4554, %v4552
        %v4574 = vpack.c.bf16 %v4555, %v4553
        %v4575 = vpack.c.bf16 %v4558, %v4556
        %v4576 = vpack.c.bf16 %v4559, %v4557
        %v4585 = vunpack.c.l.b16 %v4561
        %v4586 = vunpack.c.l.b16 %v4562
        %v4587 = vunpack.c.l.b16 %v4563
        %v4588 = vunpack.c.l.b16 %v4564
        %v4589 = vunpack.c.l.b16 %v4565
        %v4590 = vunpack.c.l.b16 %v4566
        %v4591 = vunpack.c.l.b16 %v4567
        %v4592 = vunpack.c.l.b16 %v4568
        %v4593 = vpack.c.b16 %v4586, %v4585
        %v4594 = vpack.c.b16 %v4588, %v4587
        %v4595 = vpack.c.b16 %v4590, %v4589
        %v4596 = vpack.c.b16 %v4592, %v4591
        %v4598 = vsel %vm3763, %v4593, 0
        %v4601 = vsel %vm3763, %v4594, 0
        %v4604 = vsel %vm3763, %v4595, 0
        %v4607 = vsel %vm3763, %v4596, 0
        %4609 = vmatprep.subr.bf16.mxu0 %v4570
        %4610 = vmatpush1.bf16.msra.mxu0 %v4569
        %4611 = vmatprep.subr.bf16.mxu0 %v4572
        %4612 = vmatpush1.bf16.msra.mxu0 %v4571
        %4613 = vmatprep.subr.bf16.mxu0 %v4574
        %4614 = vmatpush1.bf16.msra.mxu0 %v4573
        %4615 = vmatprep.subr.bf16.mxu0 %v4576
        %4616 = vmatpush1.bf16.msra.mxu0 %v4575
        %4617 = vmatprep.subr.bf16.mxu0 0
        %4618 = vmatpush1.bf16.msra.mxu0 0
        %4619 = vmatprep.subr.bf16.mxu0 0
        %4620 = vmatpush1.bf16.msra.mxu0 0
        %4621 = vmatprep.subr.bf16.mxu0 0
        %4622 = vmatpush1.bf16.msra.mxu0 0
        %4623 = vmatprep.subr.bf16.mxu0 0
        %4624 = vmatpush1.bf16.msra.mxu0 0
        %4625 = vmatprep.subr.bf16.mxu0 0
        %4626 = vmatpush1.bf16.msra.mxu0 0
        %4627 = vmatprep.subr.bf16.mxu0 0
        %4628 = vmatpush1.bf16.msra.mxu0 0
        %4629 = vmatprep.subr.bf16.mxu0 0
        %4630 = vmatpush1.bf16.msra.mxu0 0
        %4631 = vmatprep.subr.bf16.mxu0 0
        %4632 = vmatpush1.bf16.msra.mxu0 0
        %4633 = vmatprep.subr.bf16.mxu0 0
        %4634 = vmatpush1.bf16.msra.mxu0 0
        %4635 = vmatprep.subr.bf16.mxu0 0
        %4636 = vmatpush1.bf16.msra.mxu0 0
        %4637 = vmatprep.subr.bf16.mxu0 0
        %4638 = vmatpush1.bf16.msra.mxu0 0
        %4639 = vmatprep.subr.bf16.mxu0 0
        %4640 = vmatpush1.bf16.msra.mxu0 0
        %4641 = vmatprep.mubr.bf16.mxu0 0
        %4642 = vmatmul.mubr.bf16.gmra.mrb[0].mxu0 %v4598
        %v4643 = vpop.f32.mrb[0].mxu0
        %v4644 = vadd.f32 0.0, %v4643
        %v4645 = vpop.f32.mrb[0].mxu0
        %v4646 = vadd.f32 0.0, %v4645
        %v4647 = vpop.f32.mrb[0].mxu0
        %v4648 = vadd.f32 0.0, %v4647
        %v4649 = vpop.f32.mrb[0].mxu0
        %v4650 = vadd.f32 0.0, %v4649
        %4651 = vmatprep.mubr.bf16.mxu0 0
        %4652 = vmatmul.mubr.bf16.gmra.mrb[0].mxu0 %v4601
        %v4653 = vpop.f32.mrb[0].mxu0
        %v4654 = vadd.f32 0.0, %v4653
        %v4655 = vpop.f32.mrb[0].mxu0
        %v4656 = vadd.f32 0.0, %v4655
        %v4657 = vpop.f32.mrb[0].mxu0
        %v4658 = vadd.f32 0.0, %v4657
        %v4659 = vpop.f32.mrb[0].mxu0
        %v4660 = vadd.f32 0.0, %v4659
        %4661 = vmatprep.mubr.bf16.mxu0 0
        %4662 = vmatmul.mubr.bf16.gmra.mrb[0].mxu0 %v4604
        %v4663 = vpop.f32.mrb[0].mxu0
        %v4664 = vadd.f32 0.0, %v4663
        %v4665 = vpop.f32.mrb[0].mxu0
        %v4666 = vadd.f32 0.0, %v4665
        %v4667 = vpop.f32.mrb[0].mxu0
        %v4668 = vadd.f32 0.0, %v4667
        %v4669 = vpop.f32.mrb[0].mxu0
        %v4670 = vadd.f32 0.0, %v4669
        %4671 = vmatprep.mubr.bf16.mxu0 0
        %4672 = vmatmul.mubr.bf16.gmra.mrb[0].mxu0 %v4607
        %v4673 = vpop.f32.mrb[0].mxu0
        %v4674 = vadd.f32 0.0, %v4673
        %v4675 = vpop.f32.mrb[0].mxu0
        %v4676 = vadd.f32 0.0, %v4675
        %v4677 = vpop.f32.mrb[0].mxu0
        %v4678 = vadd.f32 0.0, %v4677
        %v4679 = vpop.f32.mrb[0].mxu0
        %v4680 = vadd.f32 0.0, %v4679
        %4681 = vdwg.mxu0
        %v4682 = vadd.f32 %v4480, %v4644
        %v4683 = vadd.f32 %v4481, %v4646
        %v4684 = vadd.f32 %v4482, %v4648
        %v4685 = vadd.f32 %v4483, %v4650
        %v4686 = vadd.f32 %v4484, %v4654
        %v4687 = vadd.f32 %v4485, %v4656
        %v4688 = vadd.f32 %v4486, %v4658
        %v4689 = vadd.f32 %v4487, %v4660
        %v4690 = vadd.f32 %v4488, %v4664
        %v4691 = vadd.f32 %v4489, %v4666
        %v4692 = vadd.f32 %v4490, %v4668
        %v4693 = vadd.f32 %v4491, %v4670
        %v4694 = vadd.f32 %v4492, %v4674
        %v4695 = vadd.f32 %v4493, %v4676
        %v4696 = vadd.f32 %v4494, %v4678
        %v4697 = vadd.f32 %v4495, %v4680
        %4698 = vrot.lane.b32.xlu0 %v3550, 113
        %v4699 = vpop.permute.xlu0 %4698
        %4700 = vrot.lane.b32.xlu0 %v3552, 113
        %v4701 = vpop.permute.xlu0 %4700
        %4702 = vrot.lane.b32.xlu0 %v3554, 113
        %v4703 = vpop.permute.xlu0 %4702
        %4704 = vrot.lane.b32.xlu0 %v3556, 113
        %v4705 = vpop.permute.xlu0 %4704
        %4706 = vrot.lane.b32.xlu0 %v3558, 113
        %v4707 = vpop.permute.xlu0 %4706
        %4708 = vrot.lane.b32.xlu0 %v3560, 113
        %v4709 = vpop.permute.xlu0 %4708
        %4710 = vrot.lane.b32.xlu0 %v3562, 113
        %v4711 = vpop.permute.xlu0 %4710
        %4712 = vrot.lane.b32.xlu0 %v3564, 113
        %v4713 = vpop.permute.xlu0 %4712
        %4714 = vrot.lane.b32.xlu0 %v3551, 113
        %v4715 = vpop.permute.xlu0 %4714
        %4716 = vrot.lane.b32.xlu0 %v3553, 113
        %v4717 = vpop.permute.xlu0 %4716
        %4718 = vrot.lane.b32.xlu0 %v3555, 113
        %v4719 = vpop.permute.xlu0 %4718
        %4720 = vrot.lane.b32.xlu0 %v3557, 113
        %v4721 = vpop.permute.xlu0 %4720
        %4722 = vrot.lane.b32.xlu0 %v3559, 113
        %v4723 = vpop.permute.xlu0 %4722
        %4724 = vrot.lane.b32.xlu0 %v3561, 113
        %v4725 = vpop.permute.xlu0 %4724
        %4726 = vrot.lane.b32.xlu0 %v3563, 113
        %v4727 = vpop.permute.xlu0 %4726
        %4728 = vrot.lane.b32.xlu0 %v3565, 113
        %v4729 = vpop.permute.xlu0 %4728
        %v4730 = vsel %vm1238, %v4699, %v4715
        %v4731 = vsel %vm1238, %v4701, %v4717
        %v4732 = vsel %vm1238, %v4703, %v4719
        %v4733 = vsel %vm1238, %v4705, %v4721
        %v4734 = vsel %vm1238, %v4707, %v4723
        %v4735 = vsel %vm1238, %v4709, %v4725
        %v4736 = vsel %vm1238, %v4711, %v4727
        %v4737 = vsel %vm1238, %v4713, %v4729
        %v4738 = vsel %vm1238, %v4715, %v4699
        %v4739 = vsel %vm1238, %v4717, %v4701
        %v4740 = vsel %vm1238, %v4719, %v4703
        %v4741 = vsel %vm1238, %v4721, %v4705
        %v4742 = vsel %vm1238, %v4723, %v4707
        %v4743 = vsel %vm1238, %v4725, %v4709
        %v4744 = vsel %vm1238, %v4727, %v4711
        %v4745 = vsel %vm1238, %v4729, %v4713
        %v4746 = vmul.f32 %v4730, %v1249
        %v4747 = vmul.f32 %v4738, %v1253
        %v4748 = vmul.f32 %v4731, %v1249
        %v4749 = vmul.f32 %v4739, %v1253
        %v4750 = vmul.f32 %v4732, %v1249
        %v4751 = vmul.f32 %v4740, %v1253
        %v4752 = vmul.f32 %v4733, %v1249
        %v4753 = vmul.f32 %v4741, %v1253
        %v4754 = vmul.f32 %v4734, %v1249
        %v4755 = vmul.f32 %v4742, %v1253
        %v4756 = vmul.f32 %v4735, %v1249
        %v4757 = vmul.f32 %v4743, %v1253
        %v4758 = vmul.f32 %v4736, %v1249
        %v4759 = vmul.f32 %v4744, %v1253
        %v4760 = vmul.f32 %v4737, %v1249
        %v4761 = vmul.f32 %v4745, %v1253
        %s4762 = scalar_lea.vmem %s6, 192
        %v4763 = vld [vmem:[%s4762] sm:$0xf]
        %v4764 = vld [vmem:[%s4762 + $0x4] sm:$0xf]
        %v4765 = vld [vmem:[%s4762 + $0x8] sm:$0xf]
        %v4766 = vld [vmem:[%s4762 + $0xc] sm:$0xf]
        %v4767 = vld [vmem:[%s4762 + $0x10] sm:$0xf]
        %v4768 = vld [vmem:[%s4762 + $0x14] sm:$0xf]
        %v4769 = vld [vmem:[%s4762 + $0x18] sm:$0xf]
        %v4770 = vld [vmem:[%s4762 + $0x1c] sm:$0xf]
        %v4771 = vpack.c.bf16 %v4748, %v4746
        %v4772 = vpack.c.bf16 %v4749, %v4747
        %v4773 = vpack.c.bf16 %v4752, %v4750
        %v4774 = vpack.c.bf16 %v4753, %v4751
        %v4775 = vpack.c.bf16 %v4756, %v4754
        %v4776 = vpack.c.bf16 %v4757, %v4755
        %v4777 = vpack.c.bf16 %v4760, %v4758
        %v4778 = vpack.c.bf16 %v4761, %v4759
        %v4787 = vunpack.c.l.b16 %v4763
        %v4788 = vunpack.c.l.b16 %v4764
        %v4789 = vunpack.c.l.b16 %v4765
        %v4790 = vunpack.c.l.b16 %v4766
        %v4791 = vunpack.c.l.b16 %v4767
        %v4792 = vunpack.c.l.b16 %v4768
        %v4793 = vunpack.c.l.b16 %v4769
        %v4794 = vunpack.c.l.b16 %v4770
        %v4795 = vpack.c.b16 %v4788, %v4787
        %v4796 = vpack.c.b16 %v4790, %v4789
        %v4797 = vpack.c.b16 %v4792, %v4791
        %v4798 = vpack.c.b16 %v4794, %v4793
        %v4800 = vsel %vm3763, %v4795, 0
        %v4803 = vsel %vm3763, %v4796, 0
        %v4806 = vsel %vm3763, %v4797, 0
        %v4809 = vsel %vm3763, %v4798, 0
        %4811 = vmatprep.subr.bf16.mxu0 %v4772
        %4812 = vmatpush1.bf16.msra.mxu0 %v4771
        %4813 = vmatprep.subr.bf16.mxu0 %v4774
        %4814 = vmatpush1.bf16.msra.mxu0 %v4773
        %4815 = vmatprep.subr.bf16.mxu0 %v4776
        %4816 = vmatpush1.bf16.msra.mxu0 %v4775
        %4817 = vmatprep.subr.bf16.mxu0 %v4778
        %4818 = vmatpush1.bf16.msra.mxu0 %v4777
        %4819 = vmatprep.subr.bf16.mxu0 0
        %4820 = vmatpush1.bf16.msra.mxu0 0
        %4821 = vmatprep.subr.bf16.mxu0 0
        %4822 = vmatpush1.bf16.msra.mxu0 0
        %4823 = vmatprep.subr.bf16.mxu0 0
        %4824 = vmatpush1.bf16.msra.mxu0 0
        %4825 = vmatprep.subr.bf16.mxu0 0
        %4826 = vmatpush1.bf16.msra.mxu0 0
        %4827 = vmatprep.subr.bf16.mxu0 0
        %4828 = vmatpush1.bf16.msra.mxu0 0
        %4829 = vmatprep.subr.bf16.mxu0 0
        %4830 = vmatpush1.bf16.msra.mxu0 0
        %4831 = vmatprep.subr.bf16.mxu0 0
        %4832 = vmatpush1.bf16.msra.mxu0 0
        %4833 = vmatprep.subr.bf16.mxu0 0
        %4834 = vmatpush1.bf16.msra.mxu0 0
        %4835 = vmatprep.subr.bf16.mxu0 0
        %4836 = vmatpush1.bf16.msra.mxu0 0
        %4837 = vmatprep.subr.bf16.mxu0 0
        %4838 = vmatpush1.bf16.msra.mxu0 0
        %4839 = vmatprep.subr.bf16.mxu0 0
        %4840 = vmatpush1.bf16.msra.mxu0 0
        %4841 = vmatprep.subr.bf16.mxu0 0
        %4842 = vmatpush1.bf16.msra.mxu0 0
        %4843 = vmatprep.mubr.bf16.mxu0 0
        %4844 = vmatmul.mubr.bf16.gmra.mrb[0].mxu0 %v4800
        %v4845 = vpop.f32.mrb[0].mxu0
        %v4846 = vadd.f32 0.0, %v4845
        %v4847 = vpop.f32.mrb[0].mxu0
        %v4848 = vadd.f32 0.0, %v4847
        %v4849 = vpop.f32.mrb[0].mxu0
        %v4850 = vadd.f32 0.0, %v4849
        %v4851 = vpop.f32.mrb[0].mxu0
        %v4852 = vadd.f32 0.0, %v4851
        %4853 = vmatprep.mubr.bf16.mxu0 0
        %4854 = vmatmul.mubr.bf16.gmra.mrb[0].mxu0 %v4803
        %v4855 = vpop.f32.mrb[0].mxu0
        %v4856 = vadd.f32 0.0, %v4855
        %v4857 = vpop.f32.mrb[0].mxu0
        %v4858 = vadd.f32 0.0, %v4857
        %v4859 = vpop.f32.mrb[0].mxu0
        %v4860 = vadd.f32 0.0, %v4859
        %v4861 = vpop.f32.mrb[0].mxu0
        %v4862 = vadd.f32 0.0, %v4861
        %4863 = vmatprep.mubr.bf16.mxu0 0
        %4864 = vmatmul.mubr.bf16.gmra.mrb[0].mxu0 %v4806
        %v4865 = vpop.f32.mrb[0].mxu0
        %v4866 = vadd.f32 0.0, %v4865
        %v4867 = vpop.f32.mrb[0].mxu0
        %v4868 = vadd.f32 0.0, %v4867
        %v4869 = vpop.f32.mrb[0].mxu0
        %v4870 = vadd.f32 0.0, %v4869
        %v4871 = vpop.f32.mrb[0].mxu0
        %v4872 = vadd.f32 0.0, %v4871
        %4873 = vmatprep.mubr.bf16.mxu0 0
        %4874 = vmatmul.mubr.bf16.gmra.mrb[0].mxu0 %v4809
        %v4875 = vpop.f32.mrb[0].mxu0
        %v4876 = vadd.f32 0.0, %v4875
        %v4877 = vpop.f32.mrb[0].mxu0
        %v4878 = vadd.f32 0.0, %v4877
        %v4879 = vpop.f32.mrb[0].mxu0
        %v4880 = vadd.f32 0.0, %v4879
        %v4881 = vpop.f32.mrb[0].mxu0
        %v4882 = vadd.f32 0.0, %v4881
        %4883 = vdwg.mxu0
        %v4884 = vadd.f32 %v4682, %v4846
        %v4885 = vadd.f32 %v4683, %v4848
        %v4886 = vadd.f32 %v4684, %v4850
        %v4887 = vadd.f32 %v4685, %v4852
        %v4888 = vadd.f32 %v4686, %v4856
        %v4889 = vadd.f32 %v4687, %v4858
        %v4890 = vadd.f32 %v4688, %v4860
        %v4891 = vadd.f32 %v4689, %v4862
        %v4892 = vadd.f32 %v4690, %v4866
        %v4893 = vadd.f32 %v4691, %v4868
        %v4894 = vadd.f32 %v4692, %v4870
        %v4895 = vadd.f32 %v4693, %v4872
        %v4896 = vadd.f32 %v4694, %v4876
        %v4897 = vadd.f32 %v4695, %v4878
        %v4898 = vadd.f32 %v4696, %v4880
        %v4899 = vadd.f32 %v4697, %v4882
        %4900 = vrot.lane.b32.xlu0 %v3550, 112
        %v4901 = vpop.permute.xlu0 %4900
        %4902 = vrot.lane.b32.xlu0 %v3552, 112
        %v4903 = vpop.permute.xlu0 %4902
        %4904 = vrot.lane.b32.xlu0 %v3554, 112
        %v4905 = vpop.permute.xlu0 %4904
        %4906 = vrot.lane.b32.xlu0 %v3556, 112
        %v4907 = vpop.permute.xlu0 %4906
        %4908 = vrot.lane.b32.xlu0 %v3558, 112
        %v4909 = vpop.permute.xlu0 %4908
        %4910 = vrot.lane.b32.xlu0 %v3560, 112
        %v4911 = vpop.permute.xlu0 %4910
        %4912 = vrot.lane.b32.xlu0 %v3562, 112
        %v4913 = vpop.permute.xlu0 %4912
        %4914 = vrot.lane.b32.xlu0 %v3564, 112
        %v4915 = vpop.permute.xlu0 %4914
        %4916 = vrot.lane.b32.xlu0 %v3551, 112
        %v4917 = vpop.permute.xlu0 %4916
        %4918 = vrot.lane.b32.xlu0 %v3553, 112
        %v4919 = vpop.permute.xlu0 %4918
        %4920 = vrot.lane.b32.xlu0 %v3555, 112
        %v4921 = vpop.permute.xlu0 %4920
        %4922 = vrot.lane.b32.xlu0 %v3557, 112
        %v4923 = vpop.permute.xlu0 %4922
        %4924 = vrot.lane.b32.xlu0 %v3559, 112
        %v4925 = vpop.permute.xlu0 %4924
        %4926 = vrot.lane.b32.xlu0 %v3561, 112
        %v4927 = vpop.permute.xlu0 %4926
        %4928 = vrot.lane.b32.xlu0 %v3563, 112
        %v4929 = vpop.permute.xlu0 %4928
        %4930 = vrot.lane.b32.xlu0 %v3565, 112
        %v4931 = vpop.permute.xlu0 %4930
        %v4932 = vsel %vm1375, %v4901, %v4917
        %v4933 = vsel %vm1375, %v4903, %v4919
        %v4934 = vsel %vm1375, %v4905, %v4921
        %v4935 = vsel %vm1375, %v4907, %v4923
        %v4936 = vsel %vm1375, %v4909, %v4925
        %v4937 = vsel %vm1375, %v4911, %v4927
        %v4938 = vsel %vm1375, %v4913, %v4929
        %v4939 = vsel %vm1375, %v4915, %v4931
        %v4940 = vsel %vm1375, %v4917, %v4901
        %v4941 = vsel %vm1375, %v4919, %v4903
        %v4942 = vsel %vm1375, %v4921, %v4905
        %v4943 = vsel %vm1375, %v4923, %v4907
        %v4944 = vsel %vm1375, %v4925, %v4909
        %v4945 = vsel %vm1375, %v4927, %v4911
        %v4946 = vsel %vm1375, %v4929, %v4913
        %v4947 = vsel %vm1375, %v4931, %v4915
        %v4948 = vmul.f32 %v4932, %v1386
        %v4949 = vmul.f32 %v4940, %v1390
        %v4950 = vmul.f32 %v4933, %v1386
        %v4951 = vmul.f32 %v4941, %v1390
        %v4952 = vmul.f32 %v4934, %v1386
        %v4953 = vmul.f32 %v4942, %v1390
        %v4954 = vmul.f32 %v4935, %v1386
        %v4955 = vmul.f32 %v4943, %v1390
        %v4956 = vmul.f32 %v4936, %v1386
        %v4957 = vmul.f32 %v4944, %v1390
        %v4958 = vmul.f32 %v4937, %v1386
        %v4959 = vmul.f32 %v4945, %v1390
        %v4960 = vmul.f32 %v4938, %v1386
        %v4961 = vmul.f32 %v4946, %v1390
        %v4962 = vmul.f32 %v4939, %v1386
        %v4963 = vmul.f32 %v4947, %v1390
        %s4964 = scalar_lea.vmem %s6, 224
        %v4965 = vld [vmem:[%s4964] sm:$0xf]
        %v4966 = vld [vmem:[%s4964 + $0x4] sm:$0xf]
        %v4967 = vld [vmem:[%s4964 + $0x8] sm:$0xf]
        %v4968 = vld [vmem:[%s4964 + $0xc] sm:$0xf]
        %v4969 = vld [vmem:[%s4964 + $0x10] sm:$0xf]
        %v4970 = vld [vmem:[%s4964 + $0x14] sm:$0xf]
        %v4971 = vld [vmem:[%s4964 + $0x18] sm:$0xf]
        %v4972 = vld [vmem:[%s4964 + $0x1c] sm:$0xf]
        %v4973 = vpack.c.bf16 %v4950, %v4948
        %v4974 = vpack.c.bf16 %v4951, %v4949
        %v4975 = vpack.c.bf16 %v4954, %v4952
        %v4976 = vpack.c.bf16 %v4955, %v4953
        %v4977 = vpack.c.bf16 %v4958, %v4956
        %v4978 = vpack.c.bf16 %v4959, %v4957
        %v4979 = vpack.c.bf16 %v4962, %v4960
        %v4980 = vpack.c.bf16 %v4963, %v4961
        %v4989 = vunpack.c.l.b16 %v4965
        %v4990 = vunpack.c.l.b16 %v4966
        %v4991 = vunpack.c.l.b16 %v4967
        %v4992 = vunpack.c.l.b16 %v4968
        %v4993 = vunpack.c.l.b16 %v4969
        %v4994 = vunpack.c.l.b16 %v4970
        %v4995 = vunpack.c.l.b16 %v4971
        %v4996 = vunpack.c.l.b16 %v4972
        %v4997 = vpack.c.b16 %v4990, %v4989
        %v4998 = vpack.c.b16 %v4992, %v4991
        %v4999 = vpack.c.b16 %v4994, %v4993
        %v5000 = vpack.c.b16 %v4996, %v4995
        %v5002 = vsel %vm3763, %v4997, 0
        %v5005 = vsel %vm3763, %v4998, 0
        %v5008 = vsel %vm3763, %v4999, 0
        %v5011 = vsel %vm3763, %v5000, 0
        %5013 = vmatprep.subr.bf16.mxu0 %v4974
        %5014 = vmatpush1.bf16.msra.mxu0 %v4973
        %5015 = vmatprep.subr.bf16.mxu0 %v4976
        %5016 = vmatpush1.bf16.msra.mxu0 %v4975
        %5017 = vmatprep.subr.bf16.mxu0 %v4978
        %5018 = vmatpush1.bf16.msra.mxu0 %v4977
        %5019 = vmatprep.subr.bf16.mxu0 %v4980
        %5020 = vmatpush1.bf16.msra.mxu0 %v4979
        %5021 = vmatprep.subr.bf16.mxu0 0
        %5022 = vmatpush1.bf16.msra.mxu0 0
        %5023 = vmatprep.subr.bf16.mxu0 0
        %5024 = vmatpush1.bf16.msra.mxu0 0
        %5025 = vmatprep.subr.bf16.mxu0 0
        %5026 = vmatpush1.bf16.msra.mxu0 0
        %5027 = vmatprep.subr.bf16.mxu0 0
        %5028 = vmatpush1.bf16.msra.mxu0 0
        %5029 = vmatprep.subr.bf16.mxu0 0
        %5030 = vmatpush1.bf16.msra.mxu0 0
        %5031 = vmatprep.subr.bf16.mxu0 0
        %5032 = vmatpush1.bf16.msra.mxu0 0
        %5033 = vmatprep.subr.bf16.mxu0 0
        %5034 = vmatpush1.bf16.msra.mxu0 0
        %5035 = vmatprep.subr.bf16.mxu0 0
        %5036 = vmatpush1.bf16.msra.mxu0 0
        %5037 = vmatprep.subr.bf16.mxu0 0
        %5038 = vmatpush1.bf16.msra.mxu0 0
        %5039 = vmatprep.subr.bf16.mxu0 0
        %5040 = vmatpush1.bf16.msra.mxu0 0
        %5041 = vmatprep.subr.bf16.mxu0 0
        %5042 = vmatpush1.bf16.msra.mxu0 0
        %5043 = vmatprep.subr.bf16.mxu0 0
        %5044 = vmatpush1.bf16.msra.mxu0 0
        %5045 = vmatprep.mubr.bf16.mxu0 0
        %5046 = vmatmul.mubr.bf16.gmra.mrb[0].mxu0 %v5002
        %v5047 = vpop.f32.mrb[0].mxu0
        %v5048 = vadd.f32 0.0, %v5047
        %v5049 = vpop.f32.mrb[0].mxu0
        %v5050 = vadd.f32 0.0, %v5049
        %v5051 = vpop.f32.mrb[0].mxu0
        %v5052 = vadd.f32 0.0, %v5051
        %v5053 = vpop.f32.mrb[0].mxu0
        %v5054 = vadd.f32 0.0, %v5053
        %5055 = vmatprep.mubr.bf16.mxu0 0
        %5056 = vmatmul.mubr.bf16.gmra.mrb[0].mxu0 %v5005
        %v5057 = vpop.f32.mrb[0].mxu0
        %v5058 = vadd.f32 0.0, %v5057
        %v5059 = vpop.f32.mrb[0].mxu0
        %v5060 = vadd.f32 0.0, %v5059
        %v5061 = vpop.f32.mrb[0].mxu0
        %v5062 = vadd.f32 0.0, %v5061
        %v5063 = vpop.f32.mrb[0].mxu0
        %v5064 = vadd.f32 0.0, %v5063
        %5065 = vmatprep.mubr.bf16.mxu0 0
        %5066 = vmatmul.mubr.bf16.gmra.mrb[0].mxu0 %v5008
        %v5067 = vpop.f32.mrb[0].mxu0
        %v5068 = vadd.f32 0.0, %v5067
        %v5069 = vpop.f32.mrb[0].mxu0
        %v5070 = vadd.f32 0.0, %v5069
        %v5071 = vpop.f32.mrb[0].mxu0
        %v5072 = vadd.f32 0.0, %v5071
        %v5073 = vpop.f32.mrb[0].mxu0
        %v5074 = vadd.f32 0.0, %v5073
        %5075 = vmatprep.mubr.bf16.mxu0 0
        %5076 = vmatmul.mubr.bf16.gmra.mrb[0].mxu0 %v5011
        %v5077 = vpop.f32.mrb[0].mxu0
        %v5078 = vadd.f32 0.0, %v5077
        %v5079 = vpop.f32.mrb[0].mxu0
        %v5080 = vadd.f32 0.0, %v5079
        %v5081 = vpop.f32.mrb[0].mxu0
        %v5082 = vadd.f32 0.0, %v5081
        %v5083 = vpop.f32.mrb[0].mxu0
        %v5084 = vadd.f32 0.0, %v5083
        %5085 = vdwg.mxu0
        %v5086 = vadd.f32 %v4884, %v5048
        %v5087 = vadd.f32 %v4885, %v5050
        %v5088 = vadd.f32 %v4886, %v5052
        %v5089 = vadd.f32 %v4887, %v5054
        %v5090 = vadd.f32 %v4888, %v5058
        %v5091 = vadd.f32 %v4889, %v5060
        %v5092 = vadd.f32 %v4890, %v5062
        %v5093 = vadd.f32 %v4891, %v5064
        %v5094 = vadd.f32 %v4892, %v5068
        %v5095 = vadd.f32 %v4893, %v5070
        %v5096 = vadd.f32 %v4894, %v5072
        %v5097 = vadd.f32 %v4895, %v5074
        %v5098 = vadd.f32 %v4896, %v5078
        %v5099 = vadd.f32 %v4897, %v5080
        %v5100 = vadd.f32 %v4898, %v5082
        %v5101 = vadd.f32 %v4899, %v5084
        %5102 = vrot.lane.b32.xlu0 %v3550, 111
        %v5103 = vpop.permute.xlu0 %5102
        %5104 = vrot.lane.b32.xlu0 %v3552, 111
        %v5105 = vpop.permute.xlu0 %5104
        %5106 = vrot.lane.b32.xlu0 %v3554, 111
        %v5107 = vpop.permute.xlu0 %5106
        %5108 = vrot.lane.b32.xlu0 %v3556, 111
        %v5109 = vpop.permute.xlu0 %5108
        %5110 = vrot.lane.b32.xlu0 %v3558, 111
        %v5111 = vpop.permute.xlu0 %5110
        %5112 = vrot.lane.b32.xlu0 %v3560, 111
        %v5113 = vpop.permute.xlu0 %5112
        %5114 = vrot.lane.b32.xlu0 %v3562, 111
        %v5115 = vpop.permute.xlu0 %5114
        %5116 = vrot.lane.b32.xlu0 %v3564, 111
        %v5117 = vpop.permute.xlu0 %5116
        %5118 = vrot.lane.b32.xlu0 %v3551, 111
        %v5119 = vpop.permute.xlu0 %5118
        %5120 = vrot.lane.b32.xlu0 %v3553, 111
        %v5121 = vpop.permute.xlu0 %5120
        %5122 = vrot.lane.b32.xlu0 %v3555, 111
        %v5123 = vpop.permute.xlu0 %5122
        %5124 = vrot.lane.b32.xlu0 %v3557, 111
        %v5125 = vpop.permute.xlu0 %5124
        %5126 = vrot.lane.b32.xlu0 %v3559, 111
        %v5127 = vpop.permute.xlu0 %5126
        %5128 = vrot.lane.b32.xlu0 %v3561, 111
        %v5129 = vpop.permute.xlu0 %5128
        %5130 = vrot.lane.b32.xlu0 %v3563, 111
        %v5131 = vpop.permute.xlu0 %5130
        %5132 = vrot.lane.b32.xlu0 %v3565, 111
        %v5133 = vpop.permute.xlu0 %5132
        %v5134 = vsel %vm1512, %v5103, %v5119
        %v5135 = vsel %vm1512, %v5105, %v5121
        %v5136 = vsel %vm1512, %v5107, %v5123
        %v5137 = vsel %vm1512, %v5109, %v5125
        %v5138 = vsel %vm1512, %v5111, %v5127
        %v5139 = vsel %vm1512, %v5113, %v5129
        %v5140 = vsel %vm1512, %v5115, %v5131
        %v5141 = vsel %vm1512, %v5117, %v5133
        %v5142 = vsel %vm1512, %v5119, %v5103
        %v5143 = vsel %vm1512, %v5121, %v5105
        %v5144 = vsel %vm1512, %v5123, %v5107
        %v5145 = vsel %vm1512, %v5125, %v5109
        %v5146 = vsel %vm1512, %v5127, %v5111
        %v5147 = vsel %vm1512, %v5129, %v5113
        %v5148 = vsel %vm1512, %v5131, %v5115
        %v5149 = vsel %vm1512, %v5133, %v5117
        %v5150 = vmul.f32 %v5134, %v1523
        %v5151 = vmul.f32 %v5142, %v1527
        %v5152 = vmul.f32 %v5135, %v1523
        %v5153 = vmul.f32 %v5143, %v1527
        %v5154 = vmul.f32 %v5136, %v1523
        %v5155 = vmul.f32 %v5144, %v1527
        %v5156 = vmul.f32 %v5137, %v1523
        %v5157 = vmul.f32 %v5145, %v1527
        %v5158 = vmul.f32 %v5138, %v1523
        %v5159 = vmul.f32 %v5146, %v1527
        %v5160 = vmul.f32 %v5139, %v1523
        %v5161 = vmul.f32 %v5147, %v1527
        %v5162 = vmul.f32 %v5140, %v1523
        %v5163 = vmul.f32 %v5148, %v1527
        %v5164 = vmul.f32 %v5141, %v1523
        %v5165 = vmul.f32 %v5149, %v1527
        %s5166 = scalar_lea.vmem %s6, 256
        %v5167 = vld [vmem:[%s5166] sm:$0xf]
        %v5168 = vld [vmem:[%s5166 + $0x4] sm:$0xf]
        %v5169 = vld [vmem:[%s5166 + $0x8] sm:$0xf]
        %v5170 = vld [vmem:[%s5166 + $0xc] sm:$0xf]
        %v5171 = vld [vmem:[%s5166 + $0x10] sm:$0xf]
        %v5172 = vld [vmem:[%s5166 + $0x14] sm:$0xf]
        %v5173 = vld [vmem:[%s5166 + $0x18] sm:$0xf]
        %v5174 = vld [vmem:[%s5166 + $0x1c] sm:$0xf]
        %v5175 = vpack.c.bf16 %v5152, %v5150
        %v5176 = vpack.c.bf16 %v5153, %v5151
        %v5177 = vpack.c.bf16 %v5156, %v5154
        %v5178 = vpack.c.bf16 %v5157, %v5155
        %v5179 = vpack.c.bf16 %v5160, %v5158
        %v5180 = vpack.c.bf16 %v5161, %v5159
        %v5181 = vpack.c.bf16 %v5164, %v5162
        %v5182 = vpack.c.bf16 %v5165, %v5163
        %v5191 = vunpack.c.l.b16 %v5167
        %v5192 = vunpack.c.l.b16 %v5168
        %v5193 = vunpack.c.l.b16 %v5169
        %v5194 = vunpack.c.l.b16 %v5170
        %v5195 = vunpack.c.l.b16 %v5171
        %v5196 = vunpack.c.l.b16 %v5172
        %v5197 = vunpack.c.l.b16 %v5173
        %v5198 = vunpack.c.l.b16 %v5174
        %v5199 = vpack.c.b16 %v5192, %v5191
        %v5200 = vpack.c.b16 %v5194, %v5193
        %v5201 = vpack.c.b16 %v5196, %v5195
        %v5202 = vpack.c.b16 %v5198, %v5197
        %v5204 = vsel %vm3763, %v5199, 0
        %v5207 = vsel %vm3763, %v5200, 0
        %v5210 = vsel %vm3763, %v5201, 0
        %v5213 = vsel %vm3763, %v5202, 0
        %5215 = vmatprep.subr.bf16.mxu0 %v5176
        %5216 = vmatpush1.bf16.msra.mxu0 %v5175
        %5217 = vmatprep.subr.bf16.mxu0 %v5178
        %5218 = vmatpush1.bf16.msra.mxu0 %v5177
        %5219 = vmatprep.subr.bf16.mxu0 %v5180
        %5220 = vmatpush1.bf16.msra.mxu0 %v5179
        %5221 = vmatprep.subr.bf16.mxu0 %v5182
        %5222 = vmatpush1.bf16.msra.mxu0 %v5181
        %5223 = vmatprep.subr.bf16.mxu0 0
        %5224 = vmatpush1.bf16.msra.mxu0 0
        %5225 = vmatprep.subr.bf16.mxu0 0
        %5226 = vmatpush1.bf16.msra.mxu0 0
        %5227 = vmatprep.subr.bf16.mxu0 0
        %5228 = vmatpush1.bf16.msra.mxu0 0
        %5229 = vmatprep.subr.bf16.mxu0 0
        %5230 = vmatpush1.bf16.msra.mxu0 0
        %5231 = vmatprep.subr.bf16.mxu0 0
        %5232 = vmatpush1.bf16.msra.mxu0 0
        %5233 = vmatprep.subr.bf16.mxu0 0
        %5234 = vmatpush1.bf16.msra.mxu0 0
        %5235 = vmatprep.subr.bf16.mxu0 0
        %5236 = vmatpush1.bf16.msra.mxu0 0
        %5237 = vmatprep.subr.bf16.mxu0 0
        %5238 = vmatpush1.bf16.msra.mxu0 0
        %5239 = vmatprep.subr.bf16.mxu0 0
        %5240 = vmatpush1.bf16.msra.mxu0 0
        %5241 = vmatprep.subr.bf16.mxu0 0
        %5242 = vmatpush1.bf16.msra.mxu0 0
        %5243 = vmatprep.subr.bf16.mxu0 0
        %5244 = vmatpush1.bf16.msra.mxu0 0
        %5245 = vmatprep.subr.bf16.mxu0 0
        %5246 = vmatpush1.bf16.msra.mxu0 0
        %5247 = vmatprep.mubr.bf16.mxu0 0
        %5248 = vmatmul.mubr.bf16.gmra.mrb[0].mxu0 %v5204
        %v5249 = vpop.f32.mrb[0].mxu0
        %v5250 = vadd.f32 0.0, %v5249
        %v5251 = vpop.f32.mrb[0].mxu0
        %v5252 = vadd.f32 0.0, %v5251
        %v5253 = vpop.f32.mrb[0].mxu0
        %v5254 = vadd.f32 0.0, %v5253
        %v5255 = vpop.f32.mrb[0].mxu0
        %v5256 = vadd.f32 0.0, %v5255
        %5257 = vmatprep.mubr.bf16.mxu0 0
        %5258 = vmatmul.mubr.bf16.gmra.mrb[0].mxu0 %v5207
        %v5259 = vpop.f32.mrb[0].mxu0
        %v5260 = vadd.f32 0.0, %v5259
        %v5261 = vpop.f32.mrb[0].mxu0
        %v5262 = vadd.f32 0.0, %v5261
        %v5263 = vpop.f32.mrb[0].mxu0
        %v5264 = vadd.f32 0.0, %v5263
        %v5265 = vpop.f32.mrb[0].mxu0
        %v5266 = vadd.f32 0.0, %v5265
        %5267 = vmatprep.mubr.bf16.mxu0 0
        %5268 = vmatmul.mubr.bf16.gmra.mrb[0].mxu0 %v5210
        %v5269 = vpop.f32.mrb[0].mxu0
        %v5270 = vadd.f32 0.0, %v5269
        %v5271 = vpop.f32.mrb[0].mxu0
        %v5272 = vadd.f32 0.0, %v5271
        %v5273 = vpop.f32.mrb[0].mxu0
        %v5274 = vadd.f32 0.0, %v5273
        %v5275 = vpop.f32.mrb[0].mxu0
        %v5276 = vadd.f32 0.0, %v5275
        %5277 = vmatprep.mubr.bf16.mxu0 0
        %5278 = vmatmul.mubr.bf16.gmra.mrb[0].mxu0 %v5213
        %v5279 = vpop.f32.mrb[0].mxu0
        %v5280 = vadd.f32 0.0, %v5279
        %v5281 = vpop.f32.mrb[0].mxu0
        %v5282 = vadd.f32 0.0, %v5281
        %v5283 = vpop.f32.mrb[0].mxu0
        %v5284 = vadd.f32 0.0, %v5283
        %v5285 = vpop.f32.mrb[0].mxu0
        %v5286 = vadd.f32 0.0, %v5285
        %5287 = vdwg.mxu0
        %v5288 = vadd.f32 %v5086, %v5250
        %v5289 = vadd.f32 %v5087, %v5252
        %v5290 = vadd.f32 %v5088, %v5254
        %v5291 = vadd.f32 %v5089, %v5256
        %v5292 = vadd.f32 %v5090, %v5260
        %v5293 = vadd.f32 %v5091, %v5262
        %v5294 = vadd.f32 %v5092, %v5264
        %v5295 = vadd.f32 %v5093, %v5266
        %v5296 = vadd.f32 %v5094, %v5270
        %v5297 = vadd.f32 %v5095, %v5272
        %v5298 = vadd.f32 %v5096, %v5274
        %v5299 = vadd.f32 %v5097, %v5276
        %v5300 = vadd.f32 %v5098, %v5280
        %v5301 = vadd.f32 %v5099, %v5282
        %v5302 = vadd.f32 %v5100, %v5284
        %v5303 = vadd.f32 %v5101, %v5286
        %v5304 = vld [vmem:[%s7] sm:$0xff]
        %v5305 = vld [vmem:[%s7 + $0x8] sm:$0xff]
        %v5306 = vld [vmem:[%s7 + $0x10] sm:$0xff]
        %v5307 = vld [vmem:[%s7 + $0x18] sm:$0xff]
        %v5308 = vld [vmem:[%s7 + $0x20] sm:$0xff]
        %v5309 = vld [vmem:[%s7 + $0x28] sm:$0xff]
        %v5310 = vld [vmem:[%s7 + $0x30] sm:$0xff]
        %v5311 = vld [vmem:[%s7 + $0x38] sm:$0xff]
        %5313 = vset.pattern.permute.xlu0 0
        %5314 = vperm.xlu0 %5313, %v5304
        %v5315 = vpop.permute.xlu0 %5314
        %5318 = vset.pattern.permute.xlu0 0
        %5319 = vperm.xlu0 %5318, %v5305
        %v5320 = vpop.permute.xlu0 %5319
        %5323 = vset.pattern.permute.xlu0 0
        %5324 = vperm.xlu0 %5323, %v5306
        %v5325 = vpop.permute.xlu0 %5324
        %5328 = vset.pattern.permute.xlu0 0
        %5329 = vperm.xlu0 %5328, %v5307
        %v5330 = vpop.permute.xlu0 %5329
        %5333 = vset.pattern.permute.xlu0 0
        %5334 = vperm.xlu0 %5333, %v5308
        %v5335 = vpop.permute.xlu0 %5334
        %5338 = vset.pattern.permute.xlu0 0
        %5339 = vperm.xlu0 %5338, %v5309
        %v5340 = vpop.permute.xlu0 %5339
        %5343 = vset.pattern.permute.xlu0 0
        %5344 = vperm.xlu0 %5343, %v5310
        %v5345 = vpop.permute.xlu0 %5344
        %5348 = vset.pattern.permute.xlu0 0
        %5349 = vperm.xlu0 %5348, %v5311
        %v5350 = vpop.permute.xlu0 %5349
        %v5352 = vadd.f32 %v5288, %v5315
        %v5353 = vadd.f32 %v5289, %v5315
        %v5354 = vadd.f32 %v5290, %v5320
        %v5355 = vadd.f32 %v5291, %v5320
        %v5356 = vadd.f32 %v5292, %v5325
        %v5357 = vadd.f32 %v5293, %v5325
        %v5358 = vadd.f32 %v5294, %v5330
        %v5359 = vadd.f32 %v5295, %v5330
        %v5360 = vadd.f32 %v5296, %v5335
        %v5361 = vadd.f32 %v5297, %v5335
        %v5362 = vadd.f32 %v5298, %v5340
        %v5363 = vadd.f32 %v5299, %v5340
        %v5364 = vadd.f32 %v5300, %v5345
        %v5365 = vadd.f32 %v5301, %v5345
        %v5366 = vadd.f32 %v5302, %v5350
        %v5367 = vadd.f32 %v5303, %v5350
        %v5368 = vmax.f32 %v5352, 0.0
        %v5369 = vmax.f32 %v5353, 0.0
        %v5370 = vmax.f32 %v5354, 0.0
        %v5371 = vmax.f32 %v5355, 0.0
        %v5372 = vmax.f32 %v5356, 0.0
        %v5373 = vmax.f32 %v5357, 0.0
        %v5374 = vmax.f32 %v5358, 0.0
        %v5375 = vmax.f32 %v5359, 0.0
        %v5376 = vmax.f32 %v5360, 0.0
        %v5377 = vmax.f32 %v5361, 0.0
        %v5378 = vmax.f32 %v5362, 0.0
        %v5379 = vmax.f32 %v5363, 0.0
        %v5380 = vmax.f32 %v5364, 0.0
        %v5381 = vmax.f32 %v5365, 0.0
        %v5382 = vmax.f32 %v5366, 0.0
        %v5383 = vmax.f32 %v5367, 0.0
        %v5384 = vld [vmem:[%s8] sm:$0x3]
        %v5385 = vpack.c.bf16 %v5370, %v5368
        %v5386 = vpack.c.bf16 %v5371, %v5369
        %v5387 = vpack.c.bf16 %v5374, %v5372
        %v5388 = vpack.c.bf16 %v5375, %v5373
        %v5389 = vpack.c.bf16 %v5378, %v5376
        %v5390 = vpack.c.bf16 %v5379, %v5377
        %v5391 = vpack.c.bf16 %v5382, %v5380
        %v5392 = vpack.c.bf16 %v5383, %v5381
        %v5393 = vld [vmem:[%s9] sm:$0xf]
        %5395 = vset.pattern.permute.xlu0 0
        %5396 = vperm.xlu0 %5395, %v5393
        %v5397 = vpop.permute.xlu0 %5396
        %v5400 = vsel %vm3763, %v5384, 0
        %5402 = vmatprep.subr.bf16.mxu0 %v5386
        %5403 = vmatpush1.bf16.msra.mxu0 %v5385
        %5404 = vmatprep.subr.bf16.mxu0 %v5388
        %5405 = vmatpush1.bf16.msra.mxu0 %v5387
        %5406 = vmatprep.subr.bf16.mxu0 %v5390
        %5407 = vmatpush1.bf16.msra.mxu0 %v5389
        %5408 = vmatprep.subr.bf16.mxu0 %v5392
        %5409 = vmatpush1.bf16.msra.mxu0 %v5391
        %5410 = vmatprep.subr.bf16.mxu0 0
        %5411 = vmatpush1.bf16.msra.mxu0 0
        %5412 = vmatprep.subr.bf16.mxu0 0
        %5413 = vmatpush1.bf16.msra.mxu0 0
        %5414 = vmatprep.subr.bf16.mxu0 0
        %5415 = vmatpush1.bf16.msra.mxu0 0
        %5416 = vmatprep.subr.bf16.mxu0 0
        %5417 = vmatpush1.bf16.msra.mxu0 0
        %5418 = vmatprep.subr.bf16.mxu0 0
        %5419 = vmatpush1.bf16.msra.mxu0 0
        %5420 = vmatprep.subr.bf16.mxu0 0
        %5421 = vmatpush1.bf16.msra.mxu0 0
        %5422 = vmatprep.subr.bf16.mxu0 0
        %5423 = vmatpush1.bf16.msra.mxu0 0
        %5424 = vmatprep.subr.bf16.mxu0 0
        %5425 = vmatpush1.bf16.msra.mxu0 0
        %5426 = vmatprep.subr.bf16.mxu0 0
        %5427 = vmatpush1.bf16.msra.mxu0 0
        %5428 = vmatprep.subr.bf16.mxu0 0
        %5429 = vmatpush1.bf16.msra.mxu0 0
        %5430 = vmatprep.subr.bf16.mxu0 0
        %5431 = vmatpush1.bf16.msra.mxu0 0
        %5432 = vmatprep.subr.bf16.mxu0 0
        %5433 = vmatpush1.bf16.msra.mxu0 0
        %5434 = vmatprep.mubr.bf16.mxu0 0
        %5435 = vmatmul.mubr.bf16.gmra.mrb[0].mxu0 %v5400
        %v5436 = vpop.f32.mrb[0].mxu0
        %v5437 = vadd.f32 %v5397, %v5436
        %v5438 = vpop.f32.mrb[0].mxu0
        %v5439 = vadd.f32 %v5397, %v5438
        %v5440 = vpop.f32.mrb[0].mxu0
        %v5441 = vpop.f32.mrb[0].mxu0
        %5442 = vdwg.mxu0
        %v5443 = vmax.f32 %v5437, 0.0
        %v5444 = vmax.f32 %v5439, 0.0
        %vm5445 = vcmp.lt.f32.partialorder %v452, 1.0
        %vm5446 = vcmp.lt.f32.partialorder %v453, 1.0
        %vm5447 = vcmp.lt.f32.partialorder %v454, 1.0
        %vm5448 = vcmp.lt.f32.partialorder %v455, 1.0
        %vm5449 = vcmp.gt.f32.partialorder %v452, -1.0
        %vm5450 = vcmp.gt.f32.partialorder %v453, -1.0
        %vm5451 = vcmp.gt.f32.partialorder %v454, -1.0
        %vm5452 = vcmp.gt.f32.partialorder %v455, -1.0
        %vm5453 = vmand %vm5445, %vm5449
        %vm5454 = vmand %vm5446, %vm5450
        %vm5455 = vmand %vm5447, %vm5451
        %vm5456 = vmand %vm5448, %vm5452
        %v5457 = vsel %vm5453, 1.0, 0.0
        %v5458 = vsel %vm5454, 1.0, 0.0
        %v5459 = vsel %vm5455, 1.0, 0.0
        %v5460 = vsel %vm5456, 1.0, 0.0
        %v5461 = vld [vmem:[%s10] sm:$0x3]
        %v5462 = vpack.c.bf16 %v5459, %v5457
        %v5463 = vpack.c.bf16 %v5460, %v5458
        %v5465 = vsel %vm545, %v5461, 0
        %v5468 = vsel %vm555, %v5462, 0
        %v5471 = vsel %vm555, %v5463, 0
        %5473 = vmatprep.subr.bf16.mxu0 %v5471
        %5474 = vmatpush1.bf16.msra.mxu0 %v5468
        %5475 = vmatprep.subr.bf16.mxu0 0
        %5476 = vmatpush1.bf16.msra.mxu0 0
        %5477 = vmatprep.subr.bf16.mxu0 0
        %5478 = vmatpush1.bf16.msra.mxu0 0
        %5479 = vmatprep.subr.bf16.mxu0 0
        %5480 = vmatpush1.bf16.msra.mxu0 0
        %5481 = vmatprep.subr.bf16.mxu0 0
        %5482 = vmatpush1.bf16.msra.mxu0 0
        %5483 = vmatprep.subr.bf16.mxu0 0
        %5484 = vmatpush1.bf16.msra.mxu0 0
        %5485 = vmatprep.subr.bf16.mxu0 0
        %5486 = vmatpush1.bf16.msra.mxu0 0
        %5487 = vmatprep.subr.bf16.mxu0 0
        %5488 = vmatpush1.bf16.msra.mxu0 0
        %5489 = vmatprep.subr.bf16.mxu0 0
        %5490 = vmatpush1.bf16.msra.mxu0 0
        %5491 = vmatprep.subr.bf16.mxu0 0
        %5492 = vmatpush1.bf16.msra.mxu0 0
        %5493 = vmatprep.subr.bf16.mxu0 0
        %5494 = vmatpush1.bf16.msra.mxu0 0
        %5495 = vmatprep.subr.bf16.mxu0 0
        %5496 = vmatpush1.bf16.msra.mxu0 0
        %5497 = vmatprep.subr.bf16.mxu0 0
        %5498 = vmatpush1.bf16.msra.mxu0 0
        %5499 = vmatprep.subr.bf16.mxu0 0
        %5500 = vmatpush1.bf16.msra.mxu0 0
        %5501 = vmatprep.subr.bf16.mxu0 0
        %5502 = vmatpush1.bf16.msra.mxu0 0
        %5503 = vmatprep.subr.bf16.mxu0 0
        %5504 = vmatpush1.bf16.msra.mxu0 0
        %5505 = vmatprep.mubr.bf16.mxu0 0
        %5506 = vmatmul.mubr.bf16.gmra.mrb[0].mxu0 %v5465
        %v5507 = vpop.f32.mrb[0].mxu0
        %v5508 = vadd.f32 0.0, %v5507
        %v5509 = vpop.f32.mrb[0].mxu0
        %v5510 = vadd.f32 0.0, %v5509
        %v5511 = vpop.f32.mrb[0].mxu0
        %v5512 = vpop.f32.mrb[0].mxu0
        %5513 = vdwg.mxu0
        %v5514 = vsel %vm1845, %v5443, 0.0
        %v5515 = vsel %vm1845, %v5444, 0.0
        %v5516 = vadd.f32 %v5514, %v5515
        %5517 = vadd.xlane.f32.xlu0 %v5516
        %v5518 = vpop.xlane.xlu0 %5517
        %v5519 = vsel %vm1845, %v5508, 0.0
        %v5520 = vsel %vm1845, %v5510, 0.0
        %v5521 = vadd.f32 %v5519, %v5520
        %5522 = vadd.xlane.f32.xlu0 %v5521
        %v5523 = vpop.xlane.xlu0 %5522
        %vm5524 = vcmp.lt.f32.partialorder %v5523, 691.2
        %v5525 = vsel %vm5524, 1.0, 0.0
        %v5526 = vsel %vm1845, %v5518, -inf
        %v5527 = vrot.slane %v5526, 4
        %v5528 = vmax.f32 %v5526, %v5527
        %v5529 = vrot.slane %v5528, 2
        %v5530 = vmax.f32 %v5528, %v5529
        %v5531 = vrot.slane %v5530, 1
        %v5532 = vmax.f32 %v5530, %v5531
        %v5533 = vsub.f32 %v5518, %v5532
        %v5534 = vmul.f32 %v5533, 1.442695
        %v5535 = vpow.pop %v5534
        %v5536 = vsel %vm1845, %v5535, 0.0
        %v5537 = vrot.slane %v5536, 4
        %v5538 = vadd.f32 %v5536, %v5537
        %v5539 = vrot.slane %v5538, 2
        %v5540 = vadd.f32 %v5538, %v5539
        %v5541 = vrot.slane %v5540, 1
        %v5542 = vadd.f32 %v5540, %v5541
        %v5543 = vrcp.pop %v5542
        %v5544 = vmul.f32 %v5535, %v5543
        %v5545 = vmul.f32 %v5544, %v5525
        %vm5546 = vcmask 3072
        %5547 = vst.msk [vmem:[%s446] sm:$0xf] %vm5546, %v5545
        %v5548 = vlaneseq
        %v5549 = vshrl.u32 %v5548, 7
        %v5550 = vsub.s32 0, %v5549
        %v5551 = vrot.slane %v5545, %v5550
        %v5552 = vlaneseq
        %v5553 = vshrl.u32 %v5552, 7
        %v5554 = vsub.s32 1, %v5553
        %v5555 = vrot.slane %v5545, %v5554
        %v5556 = vlaneseq
        %v5557 = vshrl.u32 %v5556, 7
        %v5558 = vsub.s32 2, %v5557
        %v5559 = vrot.slane %v5545, %v5558
        %v5560 = vlaneseq
        %v5561 = vshrl.u32 %v5560, 7
        %v5562 = vsub.s32 3, %v5561
        %v5563 = vrot.slane %v5545, %v5562
        %5565 = vset.pattern.permute.xlu0 0
        %5566 = vperm.xlu0 %5565, %v5551
        %v5567 = vpop.permute.xlu0 %5566
        %5570 = vset.pattern.permute.xlu0 0
        %5571 = vperm.xlu0 %5570, %v5555
        %v5572 = vpop.permute.xlu0 %5571
        %5575 = vset.pattern.permute.xlu0 0
        %5576 = vperm.xlu0 %5575, %v5559
        %v5577 = vpop.permute.xlu0 %5576
        %5580 = vset.pattern.permute.xlu0 0
        %5581 = vperm.xlu0 %5580, %v5563
        %v5582 = vpop.permute.xlu0 %5581
        %v5584 = vmul.f32 %v3566, %v5567
        %v5585 = vmul.f32 %v3567, %v5567
        %v5586 = vmul.f32 %v3568, %v5567
        %v5587 = vmul.f32 %v3569, %v5567
        %v5588 = vmul.f32 %v3570, %v5572
        %v5589 = vmul.f32 %v3571, %v5572
        %v5590 = vmul.f32 %v3572, %v5572
        %v5591 = vmul.f32 %v3573, %v5572
        %v5592 = vmul.f32 %v3574, %v5577
        %v5593 = vmul.f32 %v3575, %v5577
        %v5594 = vmul.f32 %v3576, %v5577
        %v5595 = vmul.f32 %v3577, %v5577
        %v5596 = vmul.f32 %v3578, %v5582
        %v5597 = vmul.f32 %v3579, %v5582
        %v5598 = vmul.f32 %v3580, %v5582
        %v5599 = vmul.f32 %v3581, %v5582
        %5600 = vst [vmem:[%s434] sm:$0xff] %v5584
        %5601 = vst [vmem:[%s434 + $0x8] sm:$0xff] %v5585
        %5602 = vst [vmem:[%s434 + $0x10] sm:$0xff] %v5586
        %5603 = vst [vmem:[%s434 + $0x18] sm:$0xff] %v5587
        %5604 = vst [vmem:[%s434 + $0x20] sm:$0xff] %v5588
        %5605 = vst [vmem:[%s434 + $0x28] sm:$0xff] %v5589
        %5606 = vst [vmem:[%s434 + $0x30] sm:$0xff] %v5590
        %5607 = vst [vmem:[%s434 + $0x38] sm:$0xff] %v5591
        %5608 = vst [vmem:[%s434 + $0x40] sm:$0xff] %v5592
        %5609 = vst [vmem:[%s434 + $0x48] sm:$0xff] %v5593
        %5610 = vst [vmem:[%s434 + $0x50] sm:$0xff] %v5594
        %5611 = vst [vmem:[%s434 + $0x58] sm:$0xff] %v5595
        %5612 = vst [vmem:[%s434 + $0x60] sm:$0xff] %v5596
        %5613 = vst [vmem:[%s434 + $0x68] sm:$0xff] %v5597
        %5614 = vst [vmem:[%s434 + $0x70] sm:$0xff] %v5598
        %5615 = vst [vmem:[%s434 + $0x78] sm:$0xff] %v5599
        %s5616 = sand.u32 %s268, 1
        %s5617 = sand.u32 %s268, 1
        %s5618 = smul.addr %s5617, 128
        %s5619 = scalar_lea.vmem [#allocation3], %s5618
        %p5620 = scmp.lt.s32.totalorder %s24, 1
        %s5621 = scalar_select %p5620, %s24, 1
        %s5622 = smul.addr %s5621, 4
        %s5623 = scalar_lea.vmem %s12, %s5622
        // Predicated region
        $region88: #{encoder_forward.1} parent=82 // pred_check
          %p5624 = pneg %p278
        $region89: #{encoder_forward.1} parent=82 // pred_check_branch
          %5626 = sbr.rel (%p5624) target = $region91
        $region90: #{encoder_forward.1} parent=82 // pred_region
          %s5627 = smul.u32 2, %s24
          %s5628 = smul.addr %s5627, 8
          %s5629 = scalar_lea.vmem %s11, %s5628
          // Predicated region
          $region92: #{encoder_forward.1} parent=90 // pred_check
            _
          $region93: #{encoder_forward.1} parent=90 // pred_check_branch
            %5631 = sbr.rel (0) target = $region95
          $region94: #{encoder_forward.1} parent=90 // pred_region
            // Predicated region
            $region96: #{encoder_forward.1} parent=94 // pred_check
              _
            $region97: #{encoder_forward.1} parent=94 // pred_check_branch
              %5633 = sbr.rel (0) target = $region99
            $region98: #{encoder_forward.1} parent=94 // pred_region
              loop: start=0, step=1, limit=1
              $region100: #{encoder_forward.1} parent=98 // loop_pre_header
                _
              $region101: #{encoder_forward.1} parent=98 // loop_header
                %s5635 = sphi 0, %s5639
                %p5636 = scmp.ge.s32.totalorder %s5635, 1
                %s5640 = sphi %s5619, %s5619
                %s5641 = sphi %s5629, %s5629
              $region102: #{encoder_forward.1} parent=98 // loop_header_branch
                %5638 = sbr.rel (%p5636) target = $region106
              $region103: #{encoder_forward.1} parent=98 // loop_body
                %v5642 = vld [vmem:[%s5640] sm:$0xff]
                %5643 = vst [vmem:[%s5641] sm:$0xff] %v5642
                %v5644 = vld [vmem:[%s5640 + $0x8] sm:$0xff]
                %5645 = vst [vmem:[%s5641 + $0x8] sm:$0xff] %v5644
                %v5646 = vld [vmem:[%s5640 + $0x10] sm:$0xff]
                %5647 = vst [vmem:[%s5641 + $0x20] sm:$0xff] %v5646
                %v5648 = vld [vmem:[%s5640 + $0x18] sm:$0xff]
                %5649 = vst [vmem:[%s5641 + $0x28] sm:$0xff] %v5648
                %v5650 = vld [vmem:[%s5640 + $0x20] sm:$0xff]
                %5651 = vst [vmem:[%s5641 + $0x40] sm:$0xff] %v5650
                %v5652 = vld [vmem:[%s5640 + $0x28] sm:$0xff]
                %5653 = vst [vmem:[%s5641 + $0x48] sm:$0xff] %v5652
                %v5654 = vld [vmem:[%s5640 + $0x30] sm:$0xff]
                %5655 = vst [vmem:[%s5641 + $0x60] sm:$0xff] %v5654
                %v5656 = vld [vmem:[%s5640 + $0x38] sm:$0xff]
                %5657 = vst [vmem:[%s5641 + $0x68] sm:$0xff] %v5656
                %v5658 = vld [vmem:[%s5640 + $0x40] sm:$0xff]
                %5659 = vst [vmem:[%s5641 + $0x80] sm:$0xff] %v5658
                %v5660 = vld [vmem:[%s5640 + $0x48] sm:$0xff]
                %5661 = vst [vmem:[%s5641 + $0x88] sm:$0xff] %v5660
                %v5662 = vld [vmem:[%s5640 + $0x50] sm:$0xff]
                %5663 = vst [vmem:[%s5641 + $0xa0] sm:$0xff] %v5662
                %v5664 = vld [vmem:[%s5640 + $0x58] sm:$0xff]
                %5665 = vst [vmem:[%s5641 + $0xa8] sm:$0xff] %v5664
                %v5666 = vld [vmem:[%s5640 + $0x60] sm:$0xff]
                %5667 = vst [vmem:[%s5641 + $0xc0] sm:$0xff] %v5666
                %v5668 = vld [vmem:[%s5640 + $0x68] sm:$0xff]
                %5669 = vst [vmem:[%s5641 + $0xc8] sm:$0xff] %v5668
                %v5670 = vld [vmem:[%s5640 + $0x70] sm:$0xff]
                %5671 = vst [vmem:[%s5641 + $0xe0] sm:$0xff] %v5670
                %v5672 = vld [vmem:[%s5640 + $0x78] sm:$0xff]
                %5673 = vst [vmem:[%s5641 + $0xe8] sm:$0xff] %v5672
              $region104: #{encoder_forward.1} parent=98 // loop_footer
                %s5639 = sadd.s32 1, %s5635
              $region105: #{encoder_forward.1} parent=98 // loop_footer_branch
                %5634 = sbr.rel target = $region101
              $region106: #{encoder_forward.1} parent=98 // loop_exit
                _
            $region99: #{encoder_forward.1} parent=94 // pred_fallthru
              _
            // Predicated region
            $region107: #{encoder_forward.1} parent=94 // pred_check
              _
            $region108: #{encoder_forward.1} parent=94 // pred_check_branch
              %5675 = sbr.rel target = $region110
            $region109: #{encoder_forward.1} parent=94 // pred_region
              _
            $region110: #{encoder_forward.1} parent=94 // pred_fallthru
              _
          $region95: #{encoder_forward.1} parent=90 // pred_fallthru
            _
          %5676 = vnop
        $region91: #{encoder_forward.1} parent=82 // pred_fallthru
          _
        // Predicated region
        $region111: #{encoder_forward.1} parent=82 // pred_check
          %p5677 = pneg %p304
        $region112: #{encoder_forward.1} parent=82 // pred_check_branch
          %5679 = sbr.rel (%p5677) target = $region114
        $region113: #{encoder_forward.1} parent=82 // pred_region
          _
        $region114: #{encoder_forward.1} parent=82 // pred_fallthru
          _
      $region83: #{encoder_forward.1} parent=5 // pred_fallthru
        _
      %p5680 = scmp.le.s32.totalorder 2, %s19
      // Predicated region
      $region115: #{encoder_forward.1} parent=5 // pred_check
        %p5681 = pneg %p5680
      $region116: #{encoder_forward.1} parent=5 // pred_check_branch
        %5683 = sbr.rel (%p5681) target = $region118
      $region117: #{encoder_forward.1} parent=5 // pred_region
        %s5684 = ssub.s32 %s19, 2
        // Predicated region
        $region119: #{encoder_forward.1} parent=117 // pred_check
          %p5685 = pneg %p284
        $region120: #{encoder_forward.1} parent=117 // pred_check_branch
          %5687 = sbr.rel (%p5685) target = $region122
        $region121: #{encoder_forward.1} parent=117 // pred_region
          %s5688 = sand.u32 %s269, 1
          %s5689 = sand.u32 %s269, 1
          %s5690 = smul.addr %s5689, 128
          %s5691 = scalar_lea.vmem [#allocation3], %s5690
        $region122: #{encoder_forward.1} parent=117 // pred_fallthru
          _
        // Predicated region
        $region123: #{encoder_forward.1} parent=117 // pred_check
          %p5692 = pneg %p310
        $region124: #{encoder_forward.1} parent=117 // pred_check_branch
          %5694 = sbr.rel (%p5692) target = $region126
        $region125: #{encoder_forward.1} parent=117 // pred_region
          %p5695 = scmp.lt.s32.totalorder %s25, 1
          %s5696 = scalar_select %p5695, %s25, 1
          %s5697 = smul.addr %s5696, 4
          %s5698 = scalar_lea.vmem %s12, %s5697
        $region126: #{encoder_forward.1} parent=117 // pred_fallthru
          _
      $region118: #{encoder_forward.1} parent=5 // pred_fallthru
        _
    $region6: #{encoder_forward.1} parent=1 // loop_footer
      %s23 = sadd.s32 1, %s19
    $region7: #{encoder_forward.1} parent=1 // loop_footer_branch
      %18 = sbr.rel target = $region3
    $region8: #{encoder_forward.1} parent=1 // loop_exit
      _

</llo_original>
